<compile_context>
chip_gen: v6e
topology: v6e:2x2x1
jax: 0.10.0
libtpu: 0.0.40
codegen_flags: <defaults>
</compile_context>

<pallas_src>
import jax
import jax.numpy as jnp
from jax.experimental import pallas as pl
from jax.experimental.pallas import tpu as pltpu

BN_EPS = 1e-5
LANE = 128   # TPU lane width; channels are zero-padded to a multiple of this.
WPAD = 8     # left (and right) zero-pad inside the halo scratches (sublane aligned)


def _basic_block_kernel(x_main_ref, x_top_ref, x_bot_ref,
                        w1_ref, s1_ref, b1_ref, w2_ref, s2_ref, b2_ref,
                        out_ref, xpad_ref, midpad_ref):
    """One (batch, H-tile) block per grid step (NHWC, channels lane-padded).

    x_main_ref: (1, TH, W, Cp) f32   output rows of this tile (also the residual)
    x_top_ref:  (1, 2,  W, Cp) f32   2-row halo above (garbage at h==0 -> zeroed)
    x_bot_ref:  (1, 2,  W, Cp) f32   2-row halo below (garbage at h==last -> zeroed)
    w*_ref:     (3, 3*Cp, Cp)  bf16  conv weights, kh-major / (kw,ci)-rows
    s*_ref/b*_ref: (1, Cp)     f32   folded BN scale / bias
    out_ref:    (1, TH, W, Cp) f32
    xpad_ref:   (TH+4, W+16, Cp) bf16 scratch (conv1 source, W-halo at cols 7/8+W)
    midpad_ref: (TH+2, W+16, Cp) bf16 scratch (conv2 source)
    """
    TH, W, Cp = out_ref.shape[1], out_ref.shape[2], out_ref.shape[3]
    h = pl.program_id(1)
    n_h = pl.num_programs(1)

    # Re-zero only the 8-column border slabs every step (cheap, aligned) so the
    # grid can run fully in parallel across TensorCores.
    xpad_ref[:, 0:WPAD, :] = jnp.zeros((TH + 4, WPAD, Cp), jnp.bfloat16)
    xpad_ref[:, WPAD + W:2 * WPAD + W, :] = jnp.zeros((TH + 4, WPAD, Cp), jnp.bfloat16)
    midpad_ref[:, 0:WPAD, :] = jnp.zeros((TH + 2, WPAD, Cp), jnp.bfloat16)
    midpad_ref[:, WPAD + W:2 * WPAD + W, :] = jnp.zeros((TH + 2, WPAD, Cp), jnp.bfloat16)

    x_main = x_main_ref[0]                                     # (TH, W, Cp) f32
    top = jnp.where(h > 0, x_top_ref[0], 0.0)                  # (2, W, Cp) f32
    bot = jnp.where(h < n_h - 1, x_bot_ref[0], 0.0)            # (2, W, Cp) f32

    # Assemble the conv1 source tile (TH+4 rows); all stores at W-offset 8 (aligned).
    xpad_ref[0:2, WPAD:WPAD + W, :] = top.astype(jnp.bfloat16)
    xpad_ref[2:TH + 2, WPAD:WPAD + W, :] = x_main.astype(jnp.bfloat16)
    xpad_ref[TH + 2:TH + 4, WPAD:WPAD + W, :] = bot.astype(jnp.bfloat16)

    def conv3x3(src_ref, w_ref, rows_out):
        # src_ref: (rows_out+2, 2*WPAD+W, Cp) bf16, data in cols [WPAD, WPAD+W).
        # Build ONE kw-shifted 3*Cp-wide operand (the only materialized
        # intermediate, 3x the tile), then 3 accumulating dots with K = 3*Cp
        # (kh shift = free leading-axis slice).
        left = src_ref[:, WPAD - 1:WPAD - 1 + W, :]            # input col j-1
        ctr = src_ref[:, WPAD:WPAD + W, :]                     # input col j
        right = src_ref[:, WPAD + 1:WPAD + 1 + W, :]           # input col j+1
        wide = jnp.concatenate([left, ctr, right], axis=-1)    # (rows+2, W, 3*Cp)
        acc = jnp.dot(wide[0:rows_out].reshape(rows_out * W, 3 * Cp), w_ref[0],
                      preferred_element_type=jnp.float32)
        for kh in (1, 2):
            acc = acc + jnp.dot(
                wide[kh:kh + rows_out].reshape(rows_out * W, 3 * Cp), w_ref[kh],
                preferred_element_type=jnp.float32)
        return acc                                             # (rows_out*W, Cp) f32

    # ---- conv1 -> BN1 (folded) -> ReLU on TH+2 rows (1-row halo for conv2) ----
    mid = jnp.maximum(conv3x3(xpad_ref, w1_ref, TH + 2) * s1_ref[0] + b1_ref[0], 0.0)
    midpad_ref[:, WPAD:WPAD + W, :] = mid.reshape(TH + 2, W, Cp).astype(jnp.bfloat16)

    # conv2's spatial zero-padding rows at the image top / bottom borders.
    @pl.when(h == 0)
    def _():
        midpad_ref[0:1, :, :] = jnp.zeros((1, 2 * WPAD + W, Cp), jnp.bfloat16)

    @pl.when(h == n_h - 1)
    def _():
        midpad_ref[TH + 1:TH + 2, :, :] = jnp.zeros((1, 2 * WPAD + W, Cp), jnp.bfloat16)

    # ---- conv2 -> BN2 (folded) -> + residual (f32) -> ReLU ----
    out2 = conv3x3(midpad_ref, w2_ref, TH) * s2_ref[0] + b2_ref[0]
    out = jnp.maximum(out2 + x_main.reshape(TH * W, Cp), 0.0)
    out_ref[0] = out.reshape(TH, W, Cp)


def _pick_tile_rows(H):
    """Rows per spatial tile: multiple of 8, divides H, <= 64, >= 2 tiles."""
    cands = [th for th in range(8, 65, 8) if H % th == 0 and th < H]
    return max(cands) if cands else H


@jax.jit
def basic_block_forward(x_nchw, w1, g1, be1, m1, v1, w2, g2, be2, m2, v2):
    """x_nchw: (N, C, H, W) float32. Conv weights in PyTorch OIHW layout."""
    N, C, H, W = x_nchw.shape
    cout = w1.shape[0]
    Cp = max(LANE, ((max(C, cout) + LANE - 1) // LANE) * LANE)
    TH = _pick_tile_rows(H)
    n_h = H // TH
    half = TH // 2   # halo blocks are 2 rows; their block index is in 2-row units

    # Single fused relayout at the PyTorch boundary: NCHW -> NHWC, channel axis
    # zero-padded to the lane width.  Spatial padding happens inside the kernel.
    x = jnp.transpose(x_nchw, (0, 2, 3, 1)).astype(jnp.float32)
    x = jnp.pad(x, ((0, 0), (0, 0), (0, 0), (0, Cp - C)))

    # OIHW -> (3, 3*Cp, Cp) bf16: kh-major stripes, rows (kw, ci), cols co.
    def pack_w(w):
        co, ci = w.shape[0], w.shape[1]
        wt = jnp.transpose(w, (2, 3, 1, 0))                    # (kh, kw, ci, co)
        wt = jnp.pad(wt, ((0, 0), (0, 0), (0, Cp - ci), (0, Cp - co)))
        return wt.reshape(3, 3 * Cp, Cp).astype(jnp.bfloat16)

    # Fold eval-mode BN into per-channel scale/bias; padded channels stay zero.
    def fold_bn(gamma, beta, mean, var):
        scale = gamma / jnp.sqrt(var + BN_EPS)
        bias = beta - mean * scale
        scale = jnp.pad(scale, (0, Cp - scale.shape[0]))
        bias = jnp.pad(bias, (0, Cp - bias.shape[0]))
        return (scale.reshape(1, Cp).astype(jnp.float32),
                bias.reshape(1, Cp).astype(jnp.float32))

    w1p, w2p = pack_w(w1), pack_w(w2)
    s1, b1 = fold_bn(g1, be1, m1, v1)
    s2, b2 = fold_bn(g2, be2, m2, v2)

    out_nhwc = pl.pallas_call(
        _basic_block_kernel,
        out_shape=jax.ShapeDtypeStruct((N, H, W, Cp), jnp.float32),
        grid=(N, n_h),
        in_specs=[
            # main tile: rows [h*TH, (h+1)*TH)
            pl.BlockSpec((1, TH, W, Cp), lambda n, h: (n, h, 0, 0)),
            # 2-row top halo: rows [h*TH-2, h*TH); clamped at h==0, zeroed in-kernel
            pl.BlockSpec((1, 2, W, Cp),
                         lambda n, h: (n, jnp.maximum(h * half - 1, 0), 0, 0)),
            # 2-row bottom halo: rows [(h+1)*TH, (h+1)*TH+2); clamped at last tile
            pl.BlockSpec((1, 2, W, Cp),
                         lambda n, h: (n, jnp.minimum((h + 1) * half, H // 2 - 1), 0, 0)),
            pl.BlockSpec((3, 3 * Cp, Cp), lambda n, h: (0, 0, 0)),
            pl.BlockSpec((1, Cp), lambda n, h: (0, 0)),
            pl.BlockSpec((1, Cp), lambda n, h: (0, 0)),
            pl.BlockSpec((3, 3 * Cp, Cp), lambda n, h: (0, 0, 0)),
            pl.BlockSpec((1, Cp), lambda n, h: (0, 0)),
            pl.BlockSpec((1, Cp), lambda n, h: (0, 0)),
        ],
        out_specs=pl.BlockSpec((1, TH, W, Cp), lambda n, h: (n, h, 0, 0)),
        scratch_shapes=[
            pltpu.VMEM((TH + 4, 2 * WPAD + W, Cp), jnp.bfloat16),   # conv1 source
            pltpu.VMEM((TH + 2, 2 * WPAD + W, Cp), jnp.bfloat16),   # conv2 source
        ],
        compiler_params=pltpu.CompilerParams(
            # Both axes independent -> parallel (megacore sharding on v7x);
            # per-step border zeroing keeps the scratches correct either way.
            dimension_semantics=("parallel", "parallel"),
            # v5e/v6e have 128 MiB physical VMEM; keep <= ~64 MiB for v7x.
            vmem_limit_bytes=64 * 1024 * 1024,
        ),
    )(x, x, x, w1p, s1, b1, w2p, s2, b2)

    # Crop the padded channels and return PyTorch-style NCHW.
    return jnp.transpose(out_nhwc[..., :cout], (0, 3, 1, 2))


def _reference(x, w1, g1, be1, m1, v1, w2, g2, be2, m2, v2):
    """Pure-JAX reference mirroring BasicBlock.forward (eval-mode BN) with the
    same bf16 matmul-operand quantization the kernel uses on the MXU."""
    def conv_bf16(inp, w):
        return jax.lax.conv_general_dilated(
            inp.astype(jnp.bfloat16), w.astype(jnp.bfloat16),
            window_strides=(1, 1), padding=((1, 1), (1, 1)),
            dimension_numbers=("NCHW", "OIHW", "NCHW"),
            preferred_element_type=jnp.float32)

    def bn(inp, g, b, m, v):
        g, b, m, v = (t.reshape(1, -1, 1, 1) for t in (g, b, m, v))
        return g * (inp - m) / jnp.sqrt(v + BN_EPS) + b

    out = jax.nn.relu(bn(conv_bf16(x, w1), g1, be1, m1, v1))
    out = bn(conv_bf16(out, w2), g2, be2, m2, v2)
    return jax.nn.relu(out + x)


if __name__ == "__main__":
    key = jax.random.PRNGKey(0)
    N, C, H, W = 2, 4, 16, 16   # inplanes == planes, stride=1, downsample=None
    planes = C                  # H=16 -> TH=8 -> 2 spatial tiles (halo paths exercised)

    ks = jax.random.split(key, 8)
    x = jax.random.normal(ks[0], (N, C, H, W), jnp.float32)
    w1 = jax.random.normal(ks[1], (planes, C, 3, 3), jnp.float32) * 0.2
    w2 = jax.random.normal(ks[2], (planes, planes, 3, 3), jnp.float32) * 0.2
    g1 = 1.0 + 0.1 * jax.random.normal(ks[3], (planes,), jnp.float32)
    be1 = 0.1 * jax.random.normal(ks[4], (planes,), jnp.float32)
    m1 = 0.1 * jax.random.normal(ks[5], (planes,), jnp.float32)
    v1 = jnp.abs(1.0 + 0.1 * jax.random.normal(ks[6], (planes,), jnp.float32))
    g2 = jnp.flip(g1)
    be2 = -be1
    m2 = jnp.flip(m1)
    v2 = jnp.abs(1.0 + 0.1 * jax.random.normal(ks[7], (planes,), jnp.float32))

    out = basic_block_forward(x, w1, g1, be1, m1, v1, w2, g2, be2, m2, v2)
    out = jax.block_until_ready(out)

    ref = _reference(x, w1, g1, be1, m1, v1, w2, g2, be2, m2, v2)
    assert out.shape == (N, C, H, W), out.shape
    # Tolerance covers BN folding, f32 accumulation-order and bf16 rounding
    # differences on the intermediate; matmul operands are bf16-matched.
    assert jnp.allclose(out, ref, rtol=1e-2, atol=1e-2), \
        float(jnp.max(jnp.abs(out - ref)))

    print("KERNEL_OK")
</pallas_src>

<mosaic_0001>
module attributes {stable_mosaic.version = 11 : i64} {
  func.func @_basic_block_kernel(%arg0: i32, %arg1: i32, %arg2: memref<1x8x16x128xf32, #tpu.memory_space<vmem>>, %arg3: memref<1x2x16x128xf32, #tpu.memory_space<vmem>>, %arg4: memref<1x2x16x128xf32, #tpu.memory_space<vmem>>, %arg5: memref<3x384x128xbf16, #tpu.memory_space<vmem>>, %arg6: memref<1x128xf32, #tpu.memory_space<vmem>>, %arg7: memref<1x128xf32, #tpu.memory_space<vmem>>, %arg8: memref<3x384x128xbf16, #tpu.memory_space<vmem>>, %arg9: memref<1x128xf32, #tpu.memory_space<vmem>>, %arg10: memref<1x128xf32, #tpu.memory_space<vmem>>, %arg11: memref<1x8x16x128xf32, #tpu.memory_space<vmem>>, %arg12: memref<12x32x128xbf16, #tpu.memory_space<vmem>>, %arg13: memref<10x32x128xbf16, #tpu.memory_space<vmem>>) attributes {dimension_semantics = [#tpu.dimension_semantics<parallel>, #tpu.dimension_semantics<parallel>], iteration_bounds = array<i64: 2, 2>, scalar_prefetch = 0 : i64, scratch_operands = 2 : i64, tpu.core_type = #tpu.core_type<tc>, window_params = [{transform_indices = @transform_0, window_bounds = array<i64: 1, 8, 16, 128>}, {transform_indices = @transform_1, window_bounds = array<i64: 1, 2, 16, 128>}, {transform_indices = @transform_2, window_bounds = array<i64: 1, 2, 16, 128>}, {pipeline_mode = #tpu.pipeline_mode<synchronous>, transform_indices = @transform_3, window_bounds = array<i64: 3, 384, 128>}, {pipeline_mode = #tpu.pipeline_mode<synchronous>, transform_indices = @transform_4, window_bounds = array<i64: 1, 128>}, {pipeline_mode = #tpu.pipeline_mode<synchronous>, transform_indices = @transform_5, window_bounds = array<i64: 1, 128>}, {pipeline_mode = #tpu.pipeline_mode<synchronous>, transform_indices = @transform_6, window_bounds = array<i64: 3, 384, 128>}, {pipeline_mode = #tpu.pipeline_mode<synchronous>, transform_indices = @transform_7, window_bounds = array<i64: 1, 128>}, {pipeline_mode = #tpu.pipeline_mode<synchronous>, transform_indices = @transform_8, window_bounds = array<i64: 1, 128>}, {transform_indices = @transform_9, window_bounds = array<i64: 1, 8, 16, 128>}]} {
    %cst = arith.constant 0.000000e+00 : bf16
    %0 = vector.broadcast %cst : bf16 to vector<12x8x128xbf16>
    %c0 = arith.constant 0 : index
    %c0_0 = arith.constant 0 : index
    %c0_1 = arith.constant 0 : index
    %1 = vector.load %arg12[%c0, %c0_0, %c0_1] : memref<12x32x128xbf16, #tpu.memory_space<vmem>>, vector<12x8x128xbf16>
    tpu.vector_store %arg12[%c0, %c0_0, %c0_1], %0 {strides = array<i32>} : memref<12x32x128xbf16, #tpu.memory_space<vmem>>, vector<12x8x128xbf16>,
    %cst_2 = arith.constant 0.000000e+00 : bf16
    %2 = vector.broadcast %cst_2 : bf16 to vector<12x8x128xbf16>
    %c0_3 = arith.constant 0 : index
    %c24 = arith.constant 24 : index
    %c0_4 = arith.constant 0 : index
    %3 = vector.load %arg12[%c0_3, %c24, %c0_4] : memref<12x32x128xbf16, #tpu.memory_space<vmem>>, vector<12x8x128xbf16>
    tpu.vector_store %arg12[%c0_3, %c24, %c0_4], %2 {strides = array<i32>} : memref<12x32x128xbf16, #tpu.memory_space<vmem>>, vector<12x8x128xbf16>,
    %cst_5 = arith.constant 0.000000e+00 : bf16
    %4 = vector.broadcast %cst_5 : bf16 to vector<10x8x128xbf16>
    %c0_6 = arith.constant 0 : index
    %c0_7 = arith.constant 0 : index
    %c0_8 = arith.constant 0 : index
    %5 = vector.load %arg13[%c0_6, %c0_7, %c0_8] : memref<10x32x128xbf16, #tpu.memory_space<vmem>>, vector<10x8x128xbf16>
    tpu.vector_store %arg13[%c0_6, %c0_7, %c0_8], %4 {strides = array<i32>} : memref<10x32x128xbf16, #tpu.memory_space<vmem>>, vector<10x8x128xbf16>,
    %cst_9 = arith.constant 0.000000e+00 : bf16
    %6 = vector.broadcast %cst_9 : bf16 to vector<10x8x128xbf16>
    %c0_10 = arith.constant 0 : index
    %c24_11 = arith.constant 24 : index
    %c0_12 = arith.constant 0 : index
    %7 = vector.load %arg13[%c0_10, %c24_11, %c0_12] : memref<10x32x128xbf16, #tpu.memory_space<vmem>>, vector<10x8x128xbf16>
    tpu.vector_store %arg13[%c0_10, %c24_11, %c0_12], %6 {strides = array<i32>} : memref<10x32x128xbf16, #tpu.memory_space<vmem>>, vector<10x8x128xbf16>,
    %c0_13 = arith.constant 0 : index
    %c0_14 = arith.constant 0 : index
    %c0_15 = arith.constant 0 : index
    %c0_16 = arith.constant 0 : index
    %8 = vector.load %arg2[%c0_13, %c0_14, %c0_15, %c0_16] : memref<1x8x16x128xf32, #tpu.memory_space<vmem>>, vector<1x8x16x128xf32>
    %9 = vector.shape_cast %8 : vector<1x8x16x128xf32> to vector<8x16x128xf32>
    %c0_i32 = arith.constant 0 : i32
    %10 = arith.cmpi sgt, %arg1, %c0_i32 : i32
    %c0_17 = arith.constant 0 : index
    %c0_18 = arith.constant 0 : index
    %c0_19 = arith.constant 0 : index
    %c0_20 = arith.constant 0 : index
    %11 = vector.load %arg3[%c0_17, %c0_18, %c0_19, %c0_20] : memref<1x2x16x128xf32, #tpu.memory_space<vmem>>, vector<1x2x16x128xf32>
    %12 = vector.shape_cast %11 : vector<1x2x16x128xf32> to vector<2x16x128xf32>
    %cst_21 = arith.constant 0.000000e+00 : f32
    %13 = vector.broadcast %cst_21 : f32 to vector<2x16x128xf32>
    %14 = arith.select %10, %12, %13 : vector<2x16x128xf32>
    %c1_i32 = arith.constant 1 : i32
    %15 = arith.cmpi slt, %arg1, %c1_i32 : i32
    %c0_22 = arith.constant 0 : index
    %c0_23 = arith.constant 0 : index
    %c0_24 = arith.constant 0 : index
    %c0_25 = arith.constant 0 : index
    %16 = vector.load %arg4[%c0_22, %c0_23, %c0_24, %c0_25] : memref<1x2x16x128xf32, #tpu.memory_space<vmem>>, vector<1x2x16x128xf32>
    %17 = vector.shape_cast %16 : vector<1x2x16x128xf32> to vector<2x16x128xf32>
    %cst_26 = arith.constant 0.000000e+00 : f32
    %18 = vector.broadcast %cst_26 : f32 to vector<2x16x128xf32>
    %19 = arith.select %15, %17, %18 : vector<2x16x128xf32>
    %20 = arith.truncf %14 : vector<2x16x128xf32> to vector<2x16x128xbf16>
    %c0_27 = arith.constant 0 : index
    %c8 = arith.constant 8 : index
    %c0_28 = arith.constant 0 : index
    %21 = vector.load %arg12[%c0_27, %c8, %c0_28] : memref<12x32x128xbf16, #tpu.memory_space<vmem>>, vector<2x16x128xbf16>
    tpu.vector_store %arg12[%c0_27, %c8, %c0_28], %20 {strides = array<i32>} : memref<12x32x128xbf16, #tpu.memory_space<vmem>>, vector<2x16x128xbf16>,
    %22 = arith.truncf %9 : vector<8x16x128xf32> to vector<8x16x128xbf16>
    %c2 = arith.constant 2 : index
    %c8_29 = arith.constant 8 : index
    %c0_30 = arith.constant 0 : index
    %23 = vector.load %arg12[%c2, %c8_29, %c0_30] : memref<12x32x128xbf16, #tpu.memory_space<vmem>>, vector<8x16x128xbf16>
    tpu.vector_store %arg12[%c2, %c8_29, %c0_30], %22 {strides = array<i32>} : memref<12x32x128xbf16, #tpu.memory_space<vmem>>, vector<8x16x128xbf16>,
    %24 = arith.truncf %19 : vector<2x16x128xf32> to vector<2x16x128xbf16>
    %c10 = arith.constant 10 : index
    %c8_31 = arith.constant 8 : index
    %c0_32 = arith.constant 0 : index
    %25 = vector.load %arg12[%c10, %c8_31, %c0_32] : memref<12x32x128xbf16, #tpu.memory_space<vmem>>, vector<2x16x128xbf16>
    tpu.vector_store %arg12[%c10, %c8_31, %c0_32], %24 {strides = array<i32>} : memref<12x32x128xbf16, #tpu.memory_space<vmem>>, vector<2x16x128xbf16>,
    %c0_33 = arith.constant 0 : index
    %c7 = arith.constant 7 : index
    %c0_34 = arith.constant 0 : index
    %26 = vector.load %arg12[%c0_33, %c7, %c0_34] : memref<12x32x128xbf16, #tpu.memory_space<vmem>>, vector<12x16x128xbf16>
    %c0_35 = arith.constant 0 : index
    %c8_36 = arith.constant 8 : index
    %c0_37 = arith.constant 0 : index
    %27 = vector.load %arg12[%c0_35, %c8_36, %c0_37] : memref<12x32x128xbf16, #tpu.memory_space<vmem>>, vector<12x16x128xbf16>
    %c0_38 = arith.constant 0 : index
    %c9 = arith.constant 9 : index
    %c0_39 = arith.constant 0 : index
    %28 = vector.load %arg12[%c0_38, %c9, %c0_39] : memref<12x32x128xbf16, #tpu.memory_space<vmem>>, vector<12x16x128xbf16>
    %29 = tpu.concatenate %26, %27, %28 in 2 : vector<12x16x128xbf16>, vector<12x16x128xbf16>, vector<12x16x128xbf16> -> vector<12x16x384xbf16>
    %30 = vector.extract_strided_slice %29 {offsets = [0, 0, 0], sizes = [10, 16, 384], strides = [1, 1, 1]} : vector<12x16x384xbf16> to vector<10x16x384xbf16>
    %31 = vector.shape_cast %30 : vector<10x16x384xbf16> to vector<160x384xbf16>
    %c0_40 = arith.constant 0 : index
    %c0_41 = arith.constant 0 : index
    %c0_42 = arith.constant 0 : index
    %32 = vector.load %arg5[%c0_40, %c0_41, %c0_42] : memref<3x384x128xbf16, #tpu.memory_space<vmem>>, vector<1x384x128xbf16>
    %33 = vector.shape_cast %32 : vector<1x384x128xbf16> to vector<384x128xbf16>
    %cst_43 = arith.constant dense<0.000000e+00> : vector<160x128xf32>
    %34 = tpu.matmul %31, %33, %cst_43 {dimension_numbers = #tpu.dot_dimension_numbers<[1], [0], [0], [1], [0, 0, 1, 1], [], []>} : vector<160x384xbf16>, vector<384x128xbf16>, vector<160x128xf32> -> vector<160x128xf32>
    %35 = vector.extract_strided_slice %29 {offsets = [1, 0, 0], sizes = [10, 16, 384], strides = [1, 1, 1]} : vector<12x16x384xbf16> to vector<10x16x384xbf16>
    %36 = vector.shape_cast %35 : vector<10x16x384xbf16> to vector<160x384xbf16>
    %c1 = arith.constant 1 : index
    %c0_44 = arith.constant 0 : index
    %c0_45 = arith.constant 0 : index
    %37 = vector.load %arg5[%c1, %c0_44, %c0_45] : memref<3x384x128xbf16, #tpu.memory_space<vmem>>, vector<1x384x128xbf16>
    %38 = vector.shape_cast %37 : vector<1x384x128xbf16> to vector<384x128xbf16>
    %cst_46 = arith.constant dense<0.000000e+00> : vector<160x128xf32>
    %39 = tpu.matmul %36, %38, %cst_46 {dimension_numbers = #tpu.dot_dimension_numbers<[1], [0], [0], [1], [0, 0, 1, 1], [], []>} : vector<160x384xbf16>, vector<384x128xbf16>, vector<160x128xf32> -> vector<160x128xf32>
    %40 = arith.addf %34, %39 : vector<160x128xf32>
    %41 = vector.extract_strided_slice %29 {offsets = [2, 0, 0], sizes = [10, 16, 384], strides = [1, 1, 1]} : vector<12x16x384xbf16> to vector<10x16x384xbf16>
    %42 = vector.shape_cast %41 : vector<10x16x384xbf16> to vector<160x384xbf16>
    %c2_47 = arith.constant 2 : index
    %c0_48 = arith.constant 0 : index
    %c0_49 = arith.constant 0 : index
    %43 = vector.load %arg5[%c2_47, %c0_48, %c0_49] : memref<3x384x128xbf16, #tpu.memory_space<vmem>>, vector<1x384x128xbf16>
    %44 = vector.shape_cast %43 : vector<1x384x128xbf16> to vector<384x128xbf16>
    %cst_50 = arith.constant dense<0.000000e+00> : vector<160x128xf32>
    %45 = tpu.matmul %42, %44, %cst_50 {dimension_numbers = #tpu.dot_dimension_numbers<[1], [0], [0], [1], [0, 0, 1, 1], [], []>} : vector<160x384xbf16>, vector<384x128xbf16>, vector<160x128xf32> -> vector<160x128xf32>
    %46 = arith.addf %40, %45 : vector<160x128xf32>
    %c0_51 = arith.constant 0 : index
    %c0_52 = arith.constant 0 : index
    %47 = vector.load %arg6[%c0_51, %c0_52] : memref<1x128xf32, #tpu.memory_space<vmem>>, vector<1x128xf32>
    %48 = vector.shape_cast %47 : vector<1x128xf32> to vector<128xf32>
    %49 = vector.shape_cast %48 : vector<128xf32> to vector<1x128xf32>
    %50 = vector.broadcast %49 : vector<1x128xf32> to vector<160x128xf32>
    %51 = arith.mulf %46, %50 : vector<160x128xf32>
    %c0_53 = arith.constant 0 : index
    %c0_54 = arith.constant 0 : index
    %52 = vector.load %arg7[%c0_53, %c0_54] : memref<1x128xf32, #tpu.memory_space<vmem>>, vector<1x128xf32>
    %53 = vector.shape_cast %52 : vector<1x128xf32> to vector<128xf32>
    %54 = vector.shape_cast %53 : vector<128xf32> to vector<1x128xf32>
    %55 = vector.broadcast %54 : vector<1x128xf32> to vector<160x128xf32>
    %56 = arith.addf %51, %55 : vector<160x128xf32>
    %cst_55 = arith.constant 0.000000e+00 : f32
    %57 = vector.broadcast %cst_55 : f32 to vector<160x128xf32>
    %58 = arith.maximumf %56, %57 : vector<160x128xf32>
    %59 = vector.shape_cast %58 : vector<160x128xf32> to vector<10x16x128xf32>
    %60 = arith.truncf %59 : vector<10x16x128xf32> to vector<10x16x128xbf16>
    %c0_56 = arith.constant 0 : index
    %c8_57 = arith.constant 8 : index
    %c0_58 = arith.constant 0 : index
    %61 = vector.load %arg13[%c0_56, %c8_57, %c0_58] : memref<10x32x128xbf16, #tpu.memory_space<vmem>>, vector<10x16x128xbf16>
    tpu.vector_store %arg13[%c0_56, %c8_57, %c0_58], %60 {strides = array<i32>} : memref<10x32x128xbf16, #tpu.memory_space<vmem>>, vector<10x16x128xbf16>,
    %c0_i32_59 = arith.constant 0 : i32
    %62 = arith.cmpi eq, %arg1, %c0_i32_59 : i32
    %63 = arith.extui %62 : i1 to i32
    %c0_i32_60 = arith.constant 0 : i32
    %64 = arith.cmpi ne, %63, %c0_i32_60 : i32
    scf.if %64 {
      %cst_93 = arith.constant 0.000000e+00 : bf16
      %107 = vector.broadcast %cst_93 : bf16 to vector<1x32x128xbf16>
      %c0_94 = arith.constant 0 : index
      %c0_95 = arith.constant 0 : index
      %c0_96 = arith.constant 0 : index
      %108 = vector.load %arg13[%c0_94, %c0_95, %c0_96] : memref<10x32x128xbf16, #tpu.memory_space<vmem>>, vector<1x32x128xbf16>
      tpu.vector_store %arg13[%c0_94, %c0_95, %c0_96], %107 {strides = array<i32>} : memref<10x32x128xbf16, #tpu.memory_space<vmem>>, vector<1x32x128xbf16>,
    } else {
    }
    %c1_i32_61 = arith.constant 1 : i32
    %65 = arith.cmpi eq, %arg1, %c1_i32_61 : i32
    %66 = arith.extui %65 : i1 to i32
    %c0_i32_62 = arith.constant 0 : i32
    %67 = arith.cmpi ne, %66, %c0_i32_62 : i32
    scf.if %67 {
      %cst_93 = arith.constant 0.000000e+00 : bf16
      %107 = vector.broadcast %cst_93 : bf16 to vector<1x32x128xbf16>
      %c9_94 = arith.constant 9 : index
      %c0_95 = arith.constant 0 : index
      %c0_96 = arith.constant 0 : index
      %108 = vector.load %arg13[%c9_94, %c0_95, %c0_96] : memref<10x32x128xbf16, #tpu.memory_space<vmem>>, vector<1x32x128xbf16>
      tpu.vector_store %arg13[%c9_94, %c0_95, %c0_96], %107 {strides = array<i32>} : memref<10x32x128xbf16, #tpu.memory_space<vmem>>, vector<1x32x128xbf16>,
    } else {
    }
    %c0_63 = arith.constant 0 : index
    %c7_64 = arith.constant 7 : index
    %c0_65 = arith.constant 0 : index
    %68 = vector.load %arg13[%c0_63, %c7_64, %c0_65] : memref<10x32x128xbf16, #tpu.memory_space<vmem>>, vector<10x16x128xbf16>
    %c0_66 = arith.constant 0 : index
    %c8_67 = arith.constant 8 : index
    %c0_68 = arith.constant 0 : index
    %69 = vector.load %arg13[%c0_66, %c8_67, %c0_68] : memref<10x32x128xbf16, #tpu.memory_space<vmem>>, vector<10x16x128xbf16>
    %c0_69 = arith.constant 0 : index
    %c9_70 = arith.constant 9 : index
    %c0_71 = arith.constant 0 : index
    %70 = vector.load %arg13[%c0_69, %c9_70, %c0_71] : memref<10x32x128xbf16, #tpu.memory_space<vmem>>, vector<10x16x128xbf16>
    %71 = tpu.concatenate %68, %69, %70 in 2 : vector<10x16x128xbf16>, vector<10x16x128xbf16>, vector<10x16x128xbf16> -> vector<10x16x384xbf16>
    %72 = vector.extract_strided_slice %71 {offsets = [0, 0, 0], sizes = [8, 16, 384], strides = [1, 1, 1]} : vector<10x16x384xbf16> to vector<8x16x384xbf16>
    %73 = vector.shape_cast %72 : vector<8x16x384xbf16> to vector<128x384xbf16>
    %c0_72 = arith.constant 0 : index
    %c0_73 = arith.constant 0 : index
    %c0_74 = arith.constant 0 : index
    %74 = vector.load %arg8[%c0_72, %c0_73, %c0_74] : memref<3x384x128xbf16, #tpu.memory_space<vmem>>, vector<1x384x128xbf16>
    %75 = vector.shape_cast %74 : vector<1x384x128xbf16> to vector<384x128xbf16>
    %cst_75 = arith.constant dense<0.000000e+00> : vector<128x128xf32>
    %76 = tpu.matmul %73, %75, %cst_75 {dimension_numbers = #tpu.dot_dimension_numbers<[1], [0], [0], [1], [0, 0, 1, 1], [], []>} : vector<128x384xbf16>, vector<384x128xbf16>, vector<128x128xf32> -> vector<128x128xf32>
    %77 = vector.extract_strided_slice %71 {offsets = [1, 0, 0], sizes = [8, 16, 384], strides = [1, 1, 1]} : vector<10x16x384xbf16> to vector<8x16x384xbf16>
    %78 = vector.shape_cast %77 : vector<8x16x384xbf16> to vector<128x384xbf16>
    %c1_76 = arith.constant 1 : index
    %c0_77 = arith.constant 0 : index
    %c0_78 = arith.constant 0 : index
    %79 = vector.load %arg8[%c1_76, %c0_77, %c0_78] : memref<3x384x128xbf16, #tpu.memory_space<vmem>>, vector<1x384x128xbf16>
    %80 = vector.shape_cast %79 : vector<1x384x128xbf16> to vector<384x128xbf16>
    %cst_79 = arith.constant dense<0.000000e+00> : vector<128x128xf32>
    %81 = tpu.matmul %78, %80, %cst_79 {dimension_numbers = #tpu.dot_dimension_numbers<[1], [0], [0], [1], [0, 0, 1, 1], [], []>} : vector<128x384xbf16>, vector<384x128xbf16>, vector<128x128xf32> -> vector<128x128xf32>
    %82 = arith.addf %76, %81 : vector<128x128xf32>
    %83 = vector.extract_strided_slice %71 {offsets = [2, 0, 0], sizes = [8, 16, 384], strides = [1, 1, 1]} : vector<10x16x384xbf16> to vector<8x16x384xbf16>
    %84 = vector.shape_cast %83 : vector<8x16x384xbf16> to vector<128x384xbf16>
    %c2_80 = arith.constant 2 : index
    %c0_81 = arith.constant 0 : index
    %c0_82 = arith.constant 0 : index
    %85 = vector.load %arg8[%c2_80, %c0_81, %c0_82] : memref<3x384x128xbf16, #tpu.memory_space<vmem>>, vector<1x384x128xbf16>
    %86 = vector.shape_cast %85 : vector<1x384x128xbf16> to vector<384x128xbf16>
    %cst_83 = arith.constant dense<0.000000e+00> : vector<128x128xf32>
    %87 = tpu.matmul %84, %86, %cst_83 {dimension_numbers = #tpu.dot_dimension_numbers<[1], [0], [0], [1], [0, 0, 1, 1], [], []>} : vector<128x384xbf16>, vector<384x128xbf16>, vector<128x128xf32> -> vector<128x128xf32>
    %88 = arith.addf %82, %87 : vector<128x128xf32>
    %c0_84 = arith.constant 0 : index
    %c0_85 = arith.constant 0 : index
    %89 = vector.load %arg9[%c0_84, %c0_85] : memref<1x128xf32, #tpu.memory_space<vmem>>, vector<1x128xf32>
    %90 = vector.shape_cast %89 : vector<1x128xf32> to vector<128xf32>
    %91 = vector.shape_cast %90 : vector<128xf32> to vector<1x128xf32>
    %92 = vector.broadcast %91 : vector<1x128xf32> to vector<128x128xf32>
    %93 = arith.mulf %88, %92 : vector<128x128xf32>
    %c0_86 = arith.constant 0 : index
    %c0_87 = arith.constant 0 : index
    %94 = vector.load %arg10[%c0_86, %c0_87] : memref<1x128xf32, #tpu.memory_space<vmem>>, vector<1x128xf32>
    %95 = vector.shape_cast %94 : vector<1x128xf32> to vector<128xf32>
    %96 = vector.shape_cast %95 : vector<128xf32> to vector<1x128xf32>
    %97 = vector.broadcast %96 : vector<1x128xf32> to vector<128x128xf32>
    %98 = arith.addf %93, %97 : vector<128x128xf32>
    %99 = vector.shape_cast %9 : vector<8x16x128xf32> to vector<128x128xf32>
    %100 = arith.addf %98, %99 : vector<128x128xf32>
    %cst_88 = arith.constant 0.000000e+00 : f32
    %101 = vector.broadcast %cst_88 : f32 to vector<128x128xf32>
    %102 = arith.maximumf %100, %101 : vector<128x128xf32>
    %103 = vector.shape_cast %102 : vector<128x128xf32> to vector<8x16x128xf32>
    %c0_89 = arith.constant 0 : index
    %c0_90 = arith.constant 0 : index
    %c0_91 = arith.constant 0 : index
    %c0_92 = arith.constant 0 : index
    %104 = vector.load %arg11[%c0_89, %c0_90, %c0_91, %c0_92] : memref<1x8x16x128xf32, #tpu.memory_space<vmem>>, vector<1x8x16x128xf32>
    %105 = vector.shape_cast %104 : vector<1x8x16x128xf32> to vector<8x16x128xf32>
    %106 = vector.shape_cast %103 : vector<8x16x128xf32> to vector<1x8x16x128xf32>
    tpu.vector_store %arg11[%c0_89, %c0_90, %c0_91, %c0_92], %106 {strides = array<i32>} : memref<1x8x16x128xf32, #tpu.memory_space<vmem>>, vector<1x8x16x128xf32>,
    return
  }
  func.func @transform_0(%arg0: i32, %arg1: i32) -> (i32, i32, i32, i32) {
    %c0_i32 = arith.constant 0 : i32
    %c0_i32_0 = arith.constant 0 : i32
    %c0_i32_1 = arith.constant 0 : i32
    return %arg0, %arg1, %c0_i32, %c0_i32_0 : i32, i32, i32, i32
  }
  func.func @transform_1(%arg0: i32, %arg1: i32) -> (i32, i32, i32, i32) {
    %c4_i32 = arith.constant 4 : i32
    %0 = arith.muli %arg1, %c4_i32 : i32
    %c1_i32 = arith.constant 1 : i32
    %1 = arith.subi %0, %c1_i32 : i32
    %c0_i32 = arith.constant 0 : i32
    %2 = arith.maxsi %1, %c0_i32 : i32
    %c0_i32_0 = arith.constant 0 : i32
    %c0_i32_1 = arith.constant 0 : i32
    %c0_i32_2 = arith.constant 0 : i32
    return %arg0, %2, %c0_i32_0, %c0_i32_1 : i32, i32, i32, i32
  }
  func.func @transform_2(%arg0: i32, %arg1: i32) -> (i32, i32, i32, i32) {
    %c1_i32 = arith.constant 1 : i32
    %0 = arith.addi %arg1, %c1_i32 : i32
    %c4_i32 = arith.constant 4 : i32
    %1 = arith.muli %0, %c4_i32 : i32
    %c7_i32 = arith.constant 7 : i32
    %2 = arith.minsi %1, %c7_i32 : i32
    %c0_i32 = arith.constant 0 : i32
    %c0_i32_0 = arith.constant 0 : i32
    %c0_i32_1 = arith.constant 0 : i32
    return %arg0, %2, %c0_i32, %c0_i32_0 : i32, i32, i32, i32
  }
  func.func @transform_3(%arg0: i32, %arg1: i32) -> (i32, i32, i32) {
    %c0_i32 = arith.constant 0 : i32
    %c0_i32_0 = arith.constant 0 : i32
    %c0_i32_1 = arith.constant 0 : i32
    %c0_i32_2 = arith.constant 0 : i32
    return %c0_i32, %c0_i32_0, %c0_i32_1 : i32, i32, i32
  }
  func.func @transform_4(%arg0: i32, %arg1: i32) -> (i32, i32) {
    %c0_i32 = arith.constant 0 : i32
    %c0_i32_0 = arith.constant 0 : i32
    %c0_i32_1 = arith.constant 0 : i32
    return %c0_i32, %c0_i32_0 : i32, i32
  }
  func.func @transform_5(%arg0: i32, %arg1: i32) -> (i32, i32) {
    %c0_i32 = arith.constant 0 : i32
    %c0_i32_0 = arith.constant 0 : i32
    %c0_i32_1 = arith.constant 0 : i32
    return %c0_i32, %c0_i32_0 : i32, i32
  }
  func.func @transform_6(%arg0: i32, %arg1: i32) -> (i32, i32, i32) {
    %c0_i32 = arith.constant 0 : i32
    %c0_i32_0 = arith.constant 0 : i32
    %c0_i32_1 = arith.constant 0 : i32
    %c0_i32_2 = arith.constant 0 : i32
    return %c0_i32, %c0_i32_0, %c0_i32_1 : i32, i32, i32
  }
  func.func @transform_7(%arg0: i32, %arg1: i32) -> (i32, i32) {
    %c0_i32 = arith.constant 0 : i32
    %c0_i32_0 = arith.constant 0 : i32
    %c0_i32_1 = arith.constant 0 : i32
    return %c0_i32, %c0_i32_0 : i32, i32
  }
  func.func @transform_8(%arg0: i32, %arg1: i32) -> (i32, i32) {
    %c0_i32 = arith.constant 0 : i32
    %c0_i32_0 = arith.constant 0 : i32
    %c0_i32_1 = arith.constant 0 : i32
    return %c0_i32, %c0_i32_0 : i32, i32
  }
  func.func @transform_9(%arg0: i32, %arg1: i32) -> (i32, i32, i32, i32) {
    %c0_i32 = arith.constant 0 : i32
    %c0_i32_0 = arith.constant 0 : i32
    %c0_i32_1 = arith.constant 0 : i32
    return %arg0, %arg1, %c0_i32, %c0_i32_0 : i32, i32, i32, i32
  }
}

</mosaic_0001>

<llo_original>
// kernel: basic_block_forward.1
$region0: #{basic_block_forward.1}
  #allocation0 [shape = 'u32[]', space=smem, size = 0x4, offset = 0x4, fixed_abs, tag = 'smem constant byte address 0x4 - core index']
  #allocation1 [shape = 'u32[144,128]{1,0:T(1,128)}', space=vmem, size = 0x12000, scoped, tag = 'internal scratch']
  #allocation2 [shape = 'bf16[12,32,128]{2,1,0:T(8,128)(2,1)}', space=vmem, size = 0x18000, scoped, tag = 'scratch operand']
  #allocation3 [shape = 'bf16[10,32,128]{2,1,0:T(8,128)(2,1)}', space=vmem, size = 0x14000, scoped, tag = 'scratch operand']
  %s0 = inlined_call_operand.vmem [shape: f32[2,16,16,128], index: 0, kind: input, shape index: {}, may-alias: {0,1,2}]
  %s1 = inlined_call_operand.vmem [shape: f32[2,16,16,128], index: 1, kind: input, shape index: {}, may-alias: {0,1,2}]
  %s2 = inlined_call_operand.vmem [shape: f32[2,16,16,128], index: 2, kind: input, shape index: {}, may-alias: {0,1,2}]
  %s3 = inlined_call_operand.vmem [shape: bf16[3,384,128], index: 3, kind: input, shape index: {}]
  %s4 = inlined_call_operand.vmem [shape: f32[1,128], index: 4, kind: input, shape index: {}]
  %s5 = inlined_call_operand.vmem [shape: f32[1,128], index: 5, kind: input, shape index: {}]
  %s6 = inlined_call_operand.vmem [shape: bf16[3,384,128], index: 6, kind: input, shape index: {}]
  %s7 = inlined_call_operand.vmem [shape: f32[1,128], index: 7, kind: input, shape index: {}]
  %s8 = inlined_call_operand.vmem [shape: f32[1,128], index: 8, kind: input, shape index: {}]
  %s9 = inlined_call_operand.vmem [shape: f32[2,16,16,128], index: 9, kind: output, shape index: {}]
  %s10 = sld [smem:[#allocation0]]
  $region77: #{basic_block_forward.1} parent=0
    _
  %s12 = ssub.s32 1, %s10
  %s13 = scalar_select 0, %s12, %s10
  loop: start=0, step=1, limit=6
  $region2: #{basic_block_forward.1} parent=0 // loop_pre_header
    _
  $region3: #{basic_block_forward.1} parent=0 // loop_header
    %s15 = sphi 0, %s19
    %p16 = scmp.ge.s32.totalorder %s15, 6
    %s22 = sphi 0, %s34
    %s23 = sphi 0, %s30
    %s24 = sphi 0, %s22
    %s25 = sphi 0, %s23
    %s26 = sphi 0, %s24
    %s27 = sphi 0, %s25
    %s39 = sphi 0, %s41
    %s42 = sphi 0, %s39
    %s43 = sphi 0, %s42
    %s59 = sphi 0, %s43
    %s75 = sphi 0, %s77
    %s78 = sphi 0, %s75
    %s79 = sphi 0, %s78
    %s95 = sphi 0, %s79
    %s111 = sphi 0, %s113
    %s114 = sphi 0, %s111
    %s115 = sphi 0, %s114
    %s131 = sphi 0, %s115
    %s135 = sphi 0, %s135
    %s137 = sphi 0, %s135
    %s138 = sphi 0, %s137
    %s152 = sphi 0, %s138
    %s156 = sphi 0, %s156
    %s158 = sphi 0, %s156
    %s159 = sphi 0, %s158
    %s173 = sphi 0, %s159
    %s177 = sphi 0, %s177
    %s179 = sphi 0, %s177
    %s180 = sphi 0, %s179
    %s194 = sphi 0, %s180
    %s198 = sphi 0, %s198
    %s200 = sphi 0, %s198
    %s201 = sphi 0, %s200
    %s215 = sphi 0, %s201
    %s219 = sphi 0, %s219
    %s221 = sphi 0, %s219
    %s222 = sphi 0, %s221
    %s236 = sphi 0, %s222
    %s240 = sphi 0, %s240
    %s242 = sphi 0, %s240
    %s243 = sphi 0, %s242
    %s257 = sphi 0, %s243
    %s265 = sphi 0, %s267
    %s268 = sphi 0, %s265
    %s269 = sphi 0, %s268
    %s285 = sphi 0, %s269
  $region4: #{basic_block_forward.1} parent=0 // loop_header_branch
    %18 = sbr.rel (%p16) target = $region8
  $region5: #{basic_block_forward.1} parent=0 // loop_body
    %s20 = ssub.s32 %s15, 1
    %s21 = ssub.s32 %s15, 2
    %s28 = sadd.s32 1, %s23
    %p29 = scmp.ge.s32.totalorder %s28, 2
    %s30 = scalar_select %p29, 0, %s28
    %s31 = sadd.s32 1, %s22
    %s32 = scalar_select %p29, %s31, %s22
    %p33 = scmp.ge.s32.totalorder %s32, 2
    %s34 = scalar_select %p33, 0, %s32
    %s35 = ssub.s32 %s22, %s34
    %s36 = ssub.s32 %s23, %s30
    %s37 = sor.u32 %s35, %s36
    %p38 = scmp.eq.s32.totalorder %s37, 0
    %s40 = sadd.s32 %s39, 1
    %s41 = scalar_select %p38, %s39, %s40
    %p44 = pneg %p38
    %p45 = scmp.eq.s32.totalorder %s15, 3
    %p46 = por %p44, %p45
    %p47 = scmp.ne.s32.totalorder %s39, %s42
    %p48 = scmp.eq.s32.totalorder %s15, 0
    %p49 = por %p47, %p48
    %p50 = scmp.ne.s32.totalorder %s39, %s42
    %p51 = scmp.eq.s32.totalorder %s20, 3
    %p52 = por %p50, %p51
    %p53 = scmp.ne.s32.totalorder %s42, %s43
    %p54 = scmp.eq.s32.totalorder %s20, 0
    %p55 = por %p53, %p54
    %p56 = scmp.ne.s32.totalorder %s42, %s43
    %p57 = scmp.eq.s32.totalorder %s21, 3
    %p58 = por %p56, %p57
    %p60 = scmp.ne.s32.totalorder %s43, %s59
    %p61 = scmp.eq.s32.totalorder %s21, 0
    %p62 = por %p60, %p61
    %s63 = smul.u32 %s23, 4
    %s64 = ssub.s32 %s63, 1
    %p65 = scmp.gt.s32.totalorder %s64, 0
    %s66 = scalar_select %p65, %s64, 0
    %s67 = smul.u32 %s30, 4
    %s68 = ssub.s32 %s67, 1
    %p69 = scmp.gt.s32.totalorder %s68, 0
    %s70 = scalar_select %p69, %s68, 0
    %s71 = ssub.s32 %s22, %s34
    %s72 = ssub.s32 %s66, %s70
    %s73 = sor.u32 %s71, %s72
    %p74 = scmp.eq.s32.totalorder %s73, 0
    %s76 = sadd.s32 %s75, 1
    %s77 = scalar_select %p74, %s75, %s76
    %p80 = pneg %p74
    %p81 = scmp.eq.s32.totalorder %s15, 3
    %p82 = por %p80, %p81
    %p83 = scmp.ne.s32.totalorder %s75, %s78
    %p84 = scmp.eq.s32.totalorder %s15, 0
    %p85 = por %p83, %p84
    %p86 = scmp.ne.s32.totalorder %s75, %s78
    %p87 = scmp.eq.s32.totalorder %s20, 3
    %p88 = por %p86, %p87
    %p89 = scmp.ne.s32.totalorder %s78, %s79
    %p90 = scmp.eq.s32.totalorder %s20, 0
    %p91 = por %p89, %p90
    %p92 = scmp.ne.s32.totalorder %s78, %s79
    %p93 = scmp.eq.s32.totalorder %s21, 3
    %p94 = por %p92, %p93
    %p96 = scmp.ne.s32.totalorder %s79, %s95
    %p97 = scmp.eq.s32.totalorder %s21, 0
    %p98 = por %p96, %p97
    %s99 = sadd.s32 %s23, 1
    %s100 = smul.u32 %s99, 4
    %p101 = scmp.lt.s32.totalorder %s100, 7
    %s102 = scalar_select %p101, %s100, 7
    %s103 = sadd.s32 %s30, 1
    %s104 = smul.u32 %s103, 4
    %p105 = scmp.lt.s32.totalorder %s104, 7
    %s106 = scalar_select %p105, %s104, 7
    %s107 = ssub.s32 %s22, %s34
    %s108 = ssub.s32 %s102, %s106
    %s109 = sor.u32 %s107, %s108
    %p110 = scmp.eq.s32.totalorder %s109, 0
    %s112 = sadd.s32 %s111, 1
    %s113 = scalar_select %p110, %s111, %s112
    %p116 = pneg %p110
    %p117 = scmp.eq.s32.totalorder %s15, 3
    %p118 = por %p116, %p117
    %p119 = scmp.ne.s32.totalorder %s111, %s114
    %p120 = scmp.eq.s32.totalorder %s15, 0
    %p121 = por %p119, %p120
    %p122 = scmp.ne.s32.totalorder %s111, %s114
    %p123 = scmp.eq.s32.totalorder %s20, 3
    %p124 = por %p122, %p123
    %p125 = scmp.ne.s32.totalorder %s114, %s115
    %p126 = scmp.eq.s32.totalorder %s20, 0
    %p127 = por %p125, %p126
    %p128 = scmp.ne.s32.totalorder %s114, %s115
    %p129 = scmp.eq.s32.totalorder %s21, 3
    %p130 = por %p128, %p129
    %p132 = scmp.ne.s32.totalorder %s115, %s131
    %p133 = scmp.eq.s32.totalorder %s21, 0
    %p134 = por %p132, %p133
    %s136 = sadd.s32 %s135, 1
    %p139 = scmp.eq.s32.totalorder %s15, 3
    %p140 = scmp.ne.s32.totalorder %s135, %s137
    %p141 = scmp.eq.s32.totalorder %s15, 0
    %p142 = por %p140, %p141
    %p143 = scmp.ne.s32.totalorder %s135, %s137
    %p144 = scmp.eq.s32.totalorder %s20, 3
    %p145 = por %p143, %p144
    %p146 = scmp.ne.s32.totalorder %s137, %s138
    %p147 = scmp.eq.s32.totalorder %s20, 0
    %p148 = por %p146, %p147
    %p149 = scmp.ne.s32.totalorder %s137, %s138
    %p150 = scmp.eq.s32.totalorder %s21, 3
    %p151 = por %p149, %p150
    %p153 = scmp.ne.s32.totalorder %s138, %s152
    %p154 = scmp.eq.s32.totalorder %s21, 0
    %p155 = por %p153, %p154
    %s157 = sadd.s32 %s156, 1
    %p160 = scmp.eq.s32.totalorder %s15, 3
    %p161 = scmp.ne.s32.totalorder %s156, %s158
    %p162 = scmp.eq.s32.totalorder %s15, 0
    %p163 = por %p161, %p162
    %p164 = scmp.ne.s32.totalorder %s156, %s158
    %p165 = scmp.eq.s32.totalorder %s20, 3
    %p166 = por %p164, %p165
    %p167 = scmp.ne.s32.totalorder %s158, %s159
    %p168 = scmp.eq.s32.totalorder %s20, 0
    %p169 = por %p167, %p168
    %p170 = scmp.ne.s32.totalorder %s158, %s159
    %p171 = scmp.eq.s32.totalorder %s21, 3
    %p172 = por %p170, %p171
    %p174 = scmp.ne.s32.totalorder %s159, %s173
    %p175 = scmp.eq.s32.totalorder %s21, 0
    %p176 = por %p174, %p175
    %s178 = sadd.s32 %s177, 1
    %p181 = scmp.eq.s32.totalorder %s15, 3
    %p182 = scmp.ne.s32.totalorder %s177, %s179
    %p183 = scmp.eq.s32.totalorder %s15, 0
    %p184 = por %p182, %p183
    %p185 = scmp.ne.s32.totalorder %s177, %s179
    %p186 = scmp.eq.s32.totalorder %s20, 3
    %p187 = por %p185, %p186
    %p188 = scmp.ne.s32.totalorder %s179, %s180
    %p189 = scmp.eq.s32.totalorder %s20, 0
    %p190 = por %p188, %p189
    %p191 = scmp.ne.s32.totalorder %s179, %s180
    %p192 = scmp.eq.s32.totalorder %s21, 3
    %p193 = por %p191, %p192
    %p195 = scmp.ne.s32.totalorder %s180, %s194
    %p196 = scmp.eq.s32.totalorder %s21, 0
    %p197 = por %p195, %p196
    %s199 = sadd.s32 %s198, 1
    %p202 = scmp.eq.s32.totalorder %s15, 3
    %p203 = scmp.ne.s32.totalorder %s198, %s200
    %p204 = scmp.eq.s32.totalorder %s15, 0
    %p205 = por %p203, %p204
    %p206 = scmp.ne.s32.totalorder %s198, %s200
    %p207 = scmp.eq.s32.totalorder %s20, 3
    %p208 = por %p206, %p207
    %p209 = scmp.ne.s32.totalorder %s200, %s201
    %p210 = scmp.eq.s32.totalorder %s20, 0
    %p211 = por %p209, %p210
    %p212 = scmp.ne.s32.totalorder %s200, %s201
    %p213 = scmp.eq.s32.totalorder %s21, 3
    %p214 = por %p212, %p213
    %p216 = scmp.ne.s32.totalorder %s201, %s215
    %p217 = scmp.eq.s32.totalorder %s21, 0
    %p218 = por %p216, %p217
    %s220 = sadd.s32 %s219, 1
    %p223 = scmp.eq.s32.totalorder %s15, 3
    %p224 = scmp.ne.s32.totalorder %s219, %s221
    %p225 = scmp.eq.s32.totalorder %s15, 0
    %p226 = por %p224, %p225
    %p227 = scmp.ne.s32.totalorder %s219, %s221
    %p228 = scmp.eq.s32.totalorder %s20, 3
    %p229 = por %p227, %p228
    %p230 = scmp.ne.s32.totalorder %s221, %s222
    %p231 = scmp.eq.s32.totalorder %s20, 0
    %p232 = por %p230, %p231
    %p233 = scmp.ne.s32.totalorder %s221, %s222
    %p234 = scmp.eq.s32.totalorder %s21, 3
    %p235 = por %p233, %p234
    %p237 = scmp.ne.s32.totalorder %s222, %s236
    %p238 = scmp.eq.s32.totalorder %s21, 0
    %p239 = por %p237, %p238
    %s241 = sadd.s32 %s240, 1
    %p244 = scmp.eq.s32.totalorder %s15, 3
    %p245 = scmp.ne.s32.totalorder %s240, %s242
    %p246 = scmp.eq.s32.totalorder %s15, 0
    %p247 = por %p245, %p246
    %p248 = scmp.ne.s32.totalorder %s240, %s242
    %p249 = scmp.eq.s32.totalorder %s20, 3
    %p250 = por %p248, %p249
    %p251 = scmp.ne.s32.totalorder %s242, %s243
    %p252 = scmp.eq.s32.totalorder %s20, 0
    %p253 = por %p251, %p252
    %p254 = scmp.ne.s32.totalorder %s242, %s243
    %p255 = scmp.eq.s32.totalorder %s21, 3
    %p256 = por %p254, %p255
    %p258 = scmp.ne.s32.totalorder %s243, %s257
    %p259 = scmp.eq.s32.totalorder %s21, 0
    %p260 = por %p258, %p259
    %s261 = ssub.s32 %s22, %s34
    %s262 = ssub.s32 %s23, %s30
    %s263 = sor.u32 %s261, %s262
    %p264 = scmp.eq.s32.totalorder %s263, 0
    %s266 = sadd.s32 %s265, 1
    %s267 = scalar_select %p264, %s265, %s266
    %p270 = pneg %p264
    %p271 = scmp.eq.s32.totalorder %s15, 3
    %p272 = por %p270, %p271
    %p273 = scmp.ne.s32.totalorder %s265, %s268
    %p274 = scmp.eq.s32.totalorder %s15, 0
    %p275 = por %p273, %p274
    %p276 = scmp.ne.s32.totalorder %s265, %s268
    %p277 = scmp.eq.s32.totalorder %s20, 3
    %p278 = por %p276, %p277
    %p279 = scmp.ne.s32.totalorder %s268, %s269
    %p280 = scmp.eq.s32.totalorder %s20, 0
    %p281 = por %p279, %p280
    %p282 = scmp.ne.s32.totalorder %s268, %s269
    %p283 = scmp.eq.s32.totalorder %s21, 3
    %p284 = por %p282, %p283
    %p286 = scmp.ne.s32.totalorder %s269, %s285
    %p287 = scmp.eq.s32.totalorder %s21, 0
    %p288 = por %p286, %p287
    %p289 = scmp.le.s32.totalorder 1, %s15
    %p290 = scmp.lt.s32.totalorder %s15, 5
    %p291 = pnand %p289, %p290
    %p292 = pneg %p291
    // Predicated region
    $region9: #{basic_block_forward.1} parent=5 // pred_check
      _
    $region10: #{basic_block_forward.1} parent=5 // pred_check_branch
      %294 = sbr.rel (%p291) target = $region12
    $region11: #{basic_block_forward.1} parent=5 // pred_region
      %s295 = ssub.s32 %s15, 1
      // Predicated region
      $region13: #{basic_block_forward.1} parent=11 // pred_check
        %p296 = pneg %p148
      $region14: #{basic_block_forward.1} parent=11 // pred_check_branch
        %298 = sbr.rel (%p296) target = $region16
      $region15: #{basic_block_forward.1} parent=11 // pred_region
        _
      $region16: #{basic_block_forward.1} parent=11 // pred_fallthru
        _
      // Predicated region
      $region17: #{basic_block_forward.1} parent=11 // pred_check
        %p299 = pneg %p169
      $region18: #{basic_block_forward.1} parent=11 // pred_check_branch
        %301 = sbr.rel (%p299) target = $region20
      $region19: #{basic_block_forward.1} parent=11 // pred_region
        _
      $region20: #{basic_block_forward.1} parent=11 // pred_fallthru
        _
      // Predicated region
      $region21: #{basic_block_forward.1} parent=11 // pred_check
        %p302 = pneg %p190
      $region22: #{basic_block_forward.1} parent=11 // pred_check_branch
        %304 = sbr.rel (%p302) target = $region24
      $region23: #{basic_block_forward.1} parent=11 // pred_region
        _
      $region24: #{basic_block_forward.1} parent=11 // pred_fallthru
        _
      // Predicated region
      $region25: #{basic_block_forward.1} parent=11 // pred_check
        %p305 = pneg %p211
      $region26: #{basic_block_forward.1} parent=11 // pred_check_branch
        %307 = sbr.rel (%p305) target = $region28
      $region27: #{basic_block_forward.1} parent=11 // pred_region
        _
      $region28: #{basic_block_forward.1} parent=11 // pred_fallthru
        _
      // Predicated region
      $region29: #{basic_block_forward.1} parent=11 // pred_check
        %p308 = pneg %p232
      $region30: #{basic_block_forward.1} parent=11 // pred_check_branch
        %310 = sbr.rel (%p308) target = $region32
      $region31: #{basic_block_forward.1} parent=11 // pred_region
        _
      $region32: #{basic_block_forward.1} parent=11 // pred_fallthru
        _
      // Predicated region
      $region33: #{basic_block_forward.1} parent=11 // pred_check
        %p311 = pneg %p253
      $region34: #{basic_block_forward.1} parent=11 // pred_check_branch
        %313 = sbr.rel (%p311) target = $region36
      $region35: #{basic_block_forward.1} parent=11 // pred_region
        _
      $region36: #{basic_block_forward.1} parent=11 // pred_fallthru
        _
    $region12: #{basic_block_forward.1} parent=5 // pred_fallthru
      _
    %p314 = scmp.lt.s32.totalorder %s15, 4
    // Predicated region
    $region37: #{basic_block_forward.1} parent=5 // pred_check
      %p315 = pneg %p314
    $region38: #{basic_block_forward.1} parent=5 // pred_check_branch
      %317 = sbr.rel (%p315) target = $region40
    $region39: #{basic_block_forward.1} parent=5 // pred_region
      // Predicated region
      $region41: #{basic_block_forward.1} parent=39 // pred_check
        %p318 = pneg %p49
      $region42: #{basic_block_forward.1} parent=39 // pred_check_branch
        %320 = sbr.rel (%p318) target = $region44
      $region43: #{basic_block_forward.1} parent=39 // pred_region
        %s321 = smul.u32 8, %s23
        %p322 = scmp.lt.s32.totalorder %s22, 1
        %s323 = scalar_select %p322, %s22, 1
        %p324 = scmp.lt.s32.totalorder %s321, 15
        %s325 = scalar_select %p324, %s321, 15
        %s326 = smul.addr %s325, 2
        %s327 = smul.addr %s323, 32
        %s328 = sadd.s32 %s326, %s327
        %s329 = smul.addr %s328, 8
        %s330 = scalar_lea.vmem %s0, %s329
        %s331 = smul.u32 8, %s23
      $region44: #{basic_block_forward.1} parent=39 // pred_fallthru
        _
      // Predicated region
      $region45: #{basic_block_forward.1} parent=39 // pred_check
        %p332 = pneg %p85
      $region46: #{basic_block_forward.1} parent=39 // pred_check_branch
        %334 = sbr.rel (%p332) target = $region48
      $region47: #{basic_block_forward.1} parent=39 // pred_region
        %s335 = smul.u32 %s23, 4
        %s336 = ssub.s32 %s335, 1
        %p337 = scmp.gt.s32.totalorder %s336, 0
        %s338 = scalar_select %p337, %s336, 0
        %s339 = smul.u32 2, %s338
        %p340 = scmp.lt.s32.totalorder %s22, 1
        %s341 = scalar_select %p340, %s22, 1
        %p342 = scmp.lt.s32.totalorder %s339, 15
        %s343 = scalar_select %p342, %s339, 15
        %s344 = smul.addr %s343, 2
        %s345 = smul.addr %s341, 32
        %s346 = sadd.s32 %s344, %s345
        %s347 = smul.addr %s346, 8
        %s348 = scalar_lea.vmem %s1, %s347
        %s349 = smul.u32 %s23, 4
        %s350 = ssub.s32 %s349, 1
        %p351 = scmp.gt.s32.totalorder %s350, 0
        %s352 = scalar_select %p351, %s350, 0
        %s353 = smul.u32 2, %s352
      $region48: #{basic_block_forward.1} parent=39 // pred_fallthru
        _
      // Predicated region
      $region49: #{basic_block_forward.1} parent=39 // pred_check
        %p354 = pneg %p121
      $region50: #{basic_block_forward.1} parent=39 // pred_check_branch
        %356 = sbr.rel (%p354) target = $region52
      $region51: #{basic_block_forward.1} parent=39 // pred_region
        %s357 = sadd.s32 %s23, 1
        %s358 = smul.u32 %s357, 4
        %p359 = scmp.lt.s32.totalorder %s358, 7
        %s360 = scalar_select %p359, %s358, 7
        %s361 = smul.u32 2, %s360
        %p362 = scmp.lt.s32.totalorder %s22, 1
        %s363 = scalar_select %p362, %s22, 1
        %p364 = scmp.lt.s32.totalorder %s361, 15
        %s365 = scalar_select %p364, %s361, 15
        %s366 = smul.addr %s365, 2
        %s367 = smul.addr %s363, 32
        %s368 = sadd.s32 %s366, %s367
        %s369 = smul.addr %s368, 8
        %s370 = scalar_lea.vmem %s2, %s369
        %s371 = sadd.s32 %s23, 1
        %s372 = smul.u32 %s371, 4
        %p373 = scmp.lt.s32.totalorder %s372, 7
        %s374 = scalar_select %p373, %s372, 7
        %s375 = smul.u32 2, %s374
      $region52: #{basic_block_forward.1} parent=39 // pred_fallthru
        _
    $region40: #{basic_block_forward.1} parent=5 // pred_fallthru
      _
    %p376 = scmp.le.s32.totalorder 1, %s15
    %p377 = scmp.lt.s32.totalorder %s15, 5
    %p378 = pnand %p376, %p377
    %p379 = pneg %p378
    // Predicated region
    $region53: #{basic_block_forward.1} parent=5 // pred_check
      _
    $region54: #{basic_block_forward.1} parent=5 // pred_check_branch
      %381 = sbr.rel (%p378) target = $region56
    $region55: #{basic_block_forward.1} parent=5 // pred_region
      %s382 = ssub.s32 %s15, 1
      %s383 = smul.u32 8, %s25
      %p384 = scmp.lt.s32.totalorder %s24, 1
      %s385 = scalar_select %p384, %s24, 1
      %p386 = scmp.lt.s32.totalorder %s383, 15
      %s387 = scalar_select %p386, %s383, 15
      %s388 = smul.addr %s387, 2
      %s389 = smul.addr %s385, 32
      %s390 = sadd.s32 %s388, %s389
      %s391 = smul.addr %s390, 8
      %s392 = scalar_lea.vmem %s0, %s391
      %p393 = pneg %p55
      %p394 = pneg %p52
      %s395 = smul.u32 %s25, 4
      %s396 = ssub.s32 %s395, 1
      %p397 = scmp.gt.s32.totalorder %s396, 0
      %s398 = scalar_select %p397, %s396, 0
      %s399 = smul.u32 2, %s398
      %p400 = scmp.lt.s32.totalorder %s24, 1
      %s401 = scalar_select %p400, %s24, 1
      %p402 = scmp.lt.s32.totalorder %s399, 15
      %s403 = scalar_select %p402, %s399, 15
      %s404 = smul.addr %s403, 2
      %s405 = smul.addr %s401, 32
      %s406 = sadd.s32 %s404, %s405
      %s407 = smul.addr %s406, 8
      %s408 = scalar_lea.vmem %s1, %s407
      %p409 = pneg %p91
      %p410 = pneg %p88
      %s411 = sadd.s32 %s25, 1
      %s412 = smul.u32 %s411, 4
      %p413 = scmp.lt.s32.totalorder %s412, 7
      %s414 = scalar_select %p413, %s412, 7
      %s415 = smul.u32 2, %s414
      %p416 = scmp.lt.s32.totalorder %s24, 1
      %s417 = scalar_select %p416, %s24, 1
      %p418 = scmp.lt.s32.totalorder %s415, 15
      %s419 = scalar_select %p418, %s415, 15
      %s420 = smul.addr %s419, 2
      %s421 = smul.addr %s417, 32
      %s422 = sadd.s32 %s420, %s421
      %s423 = smul.addr %s422, 8
      %s424 = scalar_lea.vmem %s2, %s423
      %p425 = pneg %p127
      %p426 = pneg %p124
      %p427 = pneg %p148
      %p428 = pneg %p145
      %p429 = pneg %p169
      %p430 = pneg %p166
      %p431 = pneg %p190
      %p432 = pneg %p187
      %p433 = pneg %p211
      %p434 = pneg %p208
      %p435 = pneg %p232
      %p436 = pneg %p229
      %p437 = pneg %p253
      %p438 = pneg %p250
      %p439 = pneg %p281
      %p440 = pneg %p278
      %s441 = smul.u32 8, %s25
      %p442 = scmp.lt.s32.totalorder %s24, 1
      %s443 = scalar_select %p442, %s24, 1
      %p444 = scmp.lt.s32.totalorder %s441, 15
      %s445 = scalar_select %p444, %s441, 15
      %s446 = smul.addr %s445, 2
      %s447 = smul.addr %s443, 32
      %s448 = sadd.s32 %s446, %s447
      %s449 = smul.addr %s448, 8
      %s450 = scalar_lea.vmem %s9, %s449
      %s451 = smul.u32 8, %s25
      %p452 = scmp.lt.s32.totalorder %s24, 1
      %s453 = scalar_select %p452, %s24, 1
      %p454 = scmp.lt.s32.totalorder %s451, 15
      %s455 = scalar_select %p454, %s451, 15
      %s456 = smul.addr %s455, 2
      %s457 = smul.addr %s453, 32
      %s458 = sadd.s32 %s456, %s457
      %s459 = smul.addr %s458, 8
      %s460 = scalar_lea.vmem %s0, %s459
      %s461 = smul.u32 8, %s25
      %s462 = smul.u32 %s25, 4
      %s463 = ssub.s32 %s462, 1
      %p464 = scmp.gt.s32.totalorder %s463, 0
      %s465 = scalar_select %p464, %s463, 0
      %s466 = smul.u32 2, %s465
      %p467 = scmp.lt.s32.totalorder %s24, 1
      %s468 = scalar_select %p467, %s24, 1
      %p469 = scmp.lt.s32.totalorder %s466, 15
      %s470 = scalar_select %p469, %s466, 15
      %s471 = smul.addr %s470, 2
      %s472 = smul.addr %s468, 32
      %s473 = sadd.s32 %s471, %s472
      %s474 = smul.addr %s473, 8
      %s475 = scalar_lea.vmem %s1, %s474
      %s476 = smul.u32 %s25, 4
      %s477 = ssub.s32 %s476, 1
      %p478 = scmp.gt.s32.totalorder %s477, 0
      %s479 = scalar_select %p478, %s477, 0
      %s480 = smul.u32 2, %s479
      %s481 = sadd.s32 %s25, 1
      %s482 = smul.u32 %s481, 4
      %p483 = scmp.lt.s32.totalorder %s482, 7
      %s484 = scalar_select %p483, %s482, 7
      %s485 = smul.u32 2, %s484
      %p486 = scmp.lt.s32.totalorder %s24, 1
      %s487 = scalar_select %p486, %s24, 1
      %p488 = scmp.lt.s32.totalorder %s485, 15
      %s489 = scalar_select %p488, %s485, 15
      %s490 = smul.addr %s489, 2
      %s491 = smul.addr %s487, 32
      %s492 = sadd.s32 %s490, %s491
      %s493 = smul.addr %s492, 8
      %s494 = scalar_lea.vmem %s2, %s493
      %s495 = sadd.s32 %s25, 1
      %s496 = smul.u32 %s495, 4
      %p497 = scmp.lt.s32.totalorder %s496, 7
      %s498 = scalar_select %p497, %s496, 7
      %s499 = smul.u32 2, %s498
      %s500 = smul.u32 8, %s25
      %p501 = scmp.lt.s32.totalorder %s24, 1
      %s502 = scalar_select %p501, %s24, 1
      %p503 = scmp.lt.s32.totalorder %s500, 15
      %s504 = scalar_select %p503, %s500, 15
      %s505 = smul.addr %s504, 2
      %s506 = smul.addr %s502, 32
      %s507 = sadd.s32 %s505, %s506
      %s508 = smul.addr %s507, 8
      %s509 = scalar_lea.vmem %s9, %s508
      %s510 = smul.u32 8, %s25
      %512 = vst [vmem:[#allocation2] sm:$0xf] 0
      %513 = vst [vmem:[#allocation2 + $0x10] sm:$0xf] 0
      %514 = vst [vmem:[#allocation2 + $0x20] sm:$0xf] 0
      %515 = vst [vmem:[#allocation2 + $0x30] sm:$0xf] 0
      %516 = vst [vmem:[#allocation2 + $0x40] sm:$0xf] 0
      %517 = vst [vmem:[#allocation2 + $0x50] sm:$0xf] 0
      %518 = vst [vmem:[#allocation2 + $0x60] sm:$0xf] 0
      %519 = vst [vmem:[#allocation2 + $0x70] sm:$0xf] 0
      %520 = vst [vmem:[#allocation2 + $0x80] sm:$0xf] 0
      %521 = vst [vmem:[#allocation2 + $0x90] sm:$0xf] 0
      %522 = vst [vmem:[#allocation2 + $0xa0] sm:$0xf] 0
      %523 = vst [vmem:[#allocation2 + $0xb0] sm:$0xf] 0
      %524 = vst [vmem:[#allocation2 + $0xc] sm:$0xf] 0
      %525 = vst [vmem:[#allocation2 + $0x1c] sm:$0xf] 0
      %526 = vst [vmem:[#allocation2 + $0x2c] sm:$0xf] 0
      %527 = vst [vmem:[#allocation2 + $0x3c] sm:$0xf] 0
      %528 = vst [vmem:[#allocation2 + $0x4c] sm:$0xf] 0
      %529 = vst [vmem:[#allocation2 + $0x5c] sm:$0xf] 0
      %530 = vst [vmem:[#allocation2 + $0x6c] sm:$0xf] 0
      %531 = vst [vmem:[#allocation2 + $0x7c] sm:$0xf] 0
      %532 = vst [vmem:[#allocation2 + $0x8c] sm:$0xf] 0
      %533 = vst [vmem:[#allocation2 + $0x9c] sm:$0xf] 0
      %534 = vst [vmem:[#allocation2 + $0xac] sm:$0xf] 0
      %535 = vst [vmem:[#allocation2 + $0xbc] sm:$0xf] 0
      %536 = vst [vmem:[#allocation3] sm:$0xf] 0
      %537 = vst [vmem:[#allocation3 + $0x10] sm:$0xf] 0
      %538 = vst [vmem:[#allocation3 + $0x20] sm:$0xf] 0
      %539 = vst [vmem:[#allocation3 + $0x30] sm:$0xf] 0
      %540 = vst [vmem:[#allocation3 + $0x40] sm:$0xf] 0
      %541 = vst [vmem:[#allocation3 + $0x50] sm:$0xf] 0
      %542 = vst [vmem:[#allocation3 + $0x60] sm:$0xf] 0
      %543 = vst [vmem:[#allocation3 + $0x70] sm:$0xf] 0
      %544 = vst [vmem:[#allocation3 + $0x80] sm:$0xf] 0
      %545 = vst [vmem:[#allocation3 + $0x90] sm:$0xf] 0
      %546 = vst [vmem:[#allocation3 + $0xc] sm:$0xf] 0
      %547 = vst [vmem:[#allocation3 + $0x1c] sm:$0xf] 0
      %548 = vst [vmem:[#allocation3 + $0x2c] sm:$0xf] 0
      %549 = vst [vmem:[#allocation3 + $0x3c] sm:$0xf] 0
      %550 = vst [vmem:[#allocation3 + $0x4c] sm:$0xf] 0
      %551 = vst [vmem:[#allocation3 + $0x5c] sm:$0xf] 0
      %552 = vst [vmem:[#allocation3 + $0x6c] sm:$0xf] 0
      %553 = vst [vmem:[#allocation3 + $0x7c] sm:$0xf] 0
      %554 = vst [vmem:[#allocation3 + $0x8c] sm:$0xf] 0
      %555 = vst [vmem:[#allocation3 + $0x9c] sm:$0xf] 0
      %v556 = vld [vmem:[%s460] sm:$0xff]
      %v557 = vld [vmem:[%s460 + $0x8] sm:$0xff]
      %v558 = vld [vmem:[%s460 + $0x10] sm:$0xff]
      %v559 = vld [vmem:[%s460 + $0x18] sm:$0xff]
      %v560 = vld [vmem:[%s460 + $0x20] sm:$0xff]
      %v561 = vld [vmem:[%s460 + $0x28] sm:$0xff]
      %v562 = vld [vmem:[%s460 + $0x30] sm:$0xff]
      %v563 = vld [vmem:[%s460 + $0x38] sm:$0xff]
      %v564 = vld [vmem:[%s460 + $0x40] sm:$0xff]
      %v565 = vld [vmem:[%s460 + $0x48] sm:$0xff]
      %v566 = vld [vmem:[%s460 + $0x50] sm:$0xff]
      %v567 = vld [vmem:[%s460 + $0x58] sm:$0xff]
      %v568 = vld [vmem:[%s460 + $0x60] sm:$0xff]
      %v569 = vld [vmem:[%s460 + $0x68] sm:$0xff]
      %v570 = vld [vmem:[%s460 + $0x70] sm:$0xff]
      %v571 = vld [vmem:[%s460 + $0x78] sm:$0xff]
      %p572 = scmp.gt.s32.totalorder %s25, 0
      %v573 = vld [vmem:[%s475] sm:$0xff]
      %v574 = vld [vmem:[%s475 + $0x8] sm:$0xff]
      %v575 = vld [vmem:[%s475 + $0x10] sm:$0xff]
      %v576 = vld [vmem:[%s475 + $0x18] sm:$0xff]
      %s577 = scalar_select %p572, 1, 0
      %v578 = vstv %s577
      %vm579 = vcmp.eq.s32.totalorder %v578, 1
      %v580 = vsel %vm579, %v573, 0.0
      %v581 = vsel %vm579, %v574, 0.0
      %v582 = vsel %vm579, %v575, 0.0
      %v583 = vsel %vm579, %v576, 0.0
      %p584 = scmp.lt.s32.totalorder %s25, 1
      %v585 = vld [vmem:[%s494] sm:$0xff]
      %v586 = vld [vmem:[%s494 + $0x8] sm:$0xff]
      %v587 = vld [vmem:[%s494 + $0x10] sm:$0xff]
      %v588 = vld [vmem:[%s494 + $0x18] sm:$0xff]
      %s589 = scalar_select %p584, 1, 0
      %v590 = vstv %s589
      %vm591 = vcmp.eq.s32.totalorder %v590, 1
      %v592 = vsel %vm591, %v585, 0.0
      %v593 = vsel %vm591, %v586, 0.0
      %v594 = vsel %vm591, %v587, 0.0
      %v595 = vsel %vm591, %v588, 0.0
      %v596 = vpack.c.bf16 %v581, %v580
      %v597 = vpack.c.bf16 %v583, %v582
      %v600 = vunpack.c.l.b16 %v596
      %v601 = vunpack.c.h.b16 %v596
      %v602 = vunpack.c.l.b16 %v597
      %v603 = vunpack.c.h.b16 %v597
      %v604 = vpack.c.b16 %v600, %v600
      %v605 = vpack.c.b16 %v601, %v601
      %v606 = vpack.c.b16 %v602, %v602
      %v607 = vpack.c.b16 %v603, %v603
      %612 = vst [vmem:[#allocation2 + $0x4] sm:$0xf] %v604
      %613 = vst [vmem:[#allocation2 + $0x8] sm:$0xf] %v605
      %614 = vst [vmem:[#allocation2 + $0x14] sm:$0xf] %v606
      %615 = vst [vmem:[#allocation2 + $0x18] sm:$0xf] %v607
      %v616 = vpack.c.bf16 %v557, %v556
      %v617 = vpack.c.bf16 %v559, %v558
      %v618 = vpack.c.bf16 %v561, %v560
      %v619 = vpack.c.bf16 %v563, %v562
      %v620 = vpack.c.bf16 %v565, %v564
      %v621 = vpack.c.bf16 %v567, %v566
      %v622 = vpack.c.bf16 %v569, %v568
      %v623 = vpack.c.bf16 %v571, %v570
      %v632 = vunpack.c.l.b16 %v616
      %v633 = vunpack.c.h.b16 %v616
      %v634 = vunpack.c.l.b16 %v617
      %v635 = vunpack.c.h.b16 %v617
      %v636 = vunpack.c.l.b16 %v618
      %v637 = vunpack.c.h.b16 %v618
      %v638 = vunpack.c.l.b16 %v619
      %v639 = vunpack.c.h.b16 %v619
      %v640 = vunpack.c.l.b16 %v620
      %v641 = vunpack.c.h.b16 %v620
      %v642 = vunpack.c.l.b16 %v621
      %v643 = vunpack.c.h.b16 %v621
      %v644 = vunpack.c.l.b16 %v622
      %v645 = vunpack.c.h.b16 %v622
      %v646 = vunpack.c.l.b16 %v623
      %v647 = vunpack.c.h.b16 %v623
      %v648 = vpack.c.b16 %v632, %v632
      %v649 = vpack.c.b16 %v633, %v633
      %v650 = vpack.c.b16 %v634, %v634
      %v651 = vpack.c.b16 %v635, %v635
      %v652 = vpack.c.b16 %v636, %v636
      %v653 = vpack.c.b16 %v637, %v637
      %v654 = vpack.c.b16 %v638, %v638
      %v655 = vpack.c.b16 %v639, %v639
      %v656 = vpack.c.b16 %v640, %v640
      %v657 = vpack.c.b16 %v641, %v641
      %v658 = vpack.c.b16 %v642, %v642
      %v659 = vpack.c.b16 %v643, %v643
      %v660 = vpack.c.b16 %v644, %v644
      %v661 = vpack.c.b16 %v645, %v645
      %v662 = vpack.c.b16 %v646, %v646
      %v663 = vpack.c.b16 %v647, %v647
      %s680 = scalar_lea.vmem [#allocation2], 32
      %681 = vst [vmem:[%s680 + $0x4] sm:$0xf] %v648
      %682 = vst [vmem:[%s680 + $0x8] sm:$0xf] %v649
      %683 = vst [vmem:[%s680 + $0x14] sm:$0xf] %v650
      %684 = vst [vmem:[%s680 + $0x18] sm:$0xf] %v651
      %685 = vst [vmem:[%s680 + $0x24] sm:$0xf] %v652
      %686 = vst [vmem:[%s680 + $0x28] sm:$0xf] %v653
      %687 = vst [vmem:[%s680 + $0x34] sm:$0xf] %v654
      %688 = vst [vmem:[%s680 + $0x38] sm:$0xf] %v655
      %689 = vst [vmem:[%s680 + $0x44] sm:$0xf] %v656
      %690 = vst [vmem:[%s680 + $0x48] sm:$0xf] %v657
      %691 = vst [vmem:[%s680 + $0x54] sm:$0xf] %v658
      %692 = vst [vmem:[%s680 + $0x58] sm:$0xf] %v659
      %693 = vst [vmem:[%s680 + $0x64] sm:$0xf] %v660
      %694 = vst [vmem:[%s680 + $0x68] sm:$0xf] %v661
      %695 = vst [vmem:[%s680 + $0x74] sm:$0xf] %v662
      %696 = vst [vmem:[%s680 + $0x78] sm:$0xf] %v663
      %v697 = vpack.c.bf16 %v593, %v592
      %v698 = vpack.c.bf16 %v595, %v594
      %v701 = vunpack.c.l.b16 %v697
      %v702 = vunpack.c.h.b16 %v697
      %v703 = vunpack.c.l.b16 %v698
      %v704 = vunpack.c.h.b16 %v698
      %v705 = vpack.c.b16 %v701, %v701
      %v706 = vpack.c.b16 %v702, %v702
      %v707 = vpack.c.b16 %v703, %v703
      %v708 = vpack.c.b16 %v704, %v704
      %s713 = scalar_lea.vmem [#allocation2], 160
      %714 = vst [vmem:[%s713 + $0x4] sm:$0xf] %v705
      %715 = vst [vmem:[%s713 + $0x8] sm:$0xf] %v706
      %716 = vst [vmem:[%s713 + $0x14] sm:$0xf] %v707
      %717 = vst [vmem:[%s713 + $0x18] sm:$0xf] %v708
      %v718 = vld [vmem:[#allocation2] sm:$0x8]
      %v719 = vld [vmem:[#allocation2 + $0x4] sm:$0xf]
      %v720 = vld [vmem:[#allocation2 + $0x8] sm:$0xf]
      %v721 = vld [vmem:[#allocation2 + $0x10] sm:$0x8]
      %v722 = vld [vmem:[#allocation2 + $0x14] sm:$0xf]
      %v723 = vld [vmem:[#allocation2 + $0x18] sm:$0xf]
      %v724 = vld [vmem:[#allocation2 + $0x20] sm:$0x8]
      %v725 = vld [vmem:[#allocation2 + $0x24] sm:$0xf]
      %v726 = vld [vmem:[#allocation2 + $0x28] sm:$0xf]
      %v727 = vld [vmem:[#allocation2 + $0x30] sm:$0x8]
      %v728 = vld [vmem:[#allocation2 + $0x34] sm:$0xf]
      %v729 = vld [vmem:[#allocation2 + $0x38] sm:$0xf]
      %v730 = vld [vmem:[#allocation2 + $0x40] sm:$0x8]
      %v731 = vld [vmem:[#allocation2 + $0x44] sm:$0xf]
      %v732 = vld [vmem:[#allocation2 + $0x48] sm:$0xf]
      %v733 = vld [vmem:[#allocation2 + $0x50] sm:$0x8]
      %v734 = vld [vmem:[#allocation2 + $0x54] sm:$0xf]
      %v735 = vld [vmem:[#allocation2 + $0x58] sm:$0xf]
      %v736 = vld [vmem:[#allocation2 + $0x60] sm:$0x8]
      %v737 = vld [vmem:[#allocation2 + $0x64] sm:$0xf]
      %v738 = vld [vmem:[#allocation2 + $0x68] sm:$0xf]
      %v739 = vld [vmem:[#allocation2 + $0x70] sm:$0x8]
      %v740 = vld [vmem:[#allocation2 + $0x74] sm:$0xf]
      %v741 = vld [vmem:[#allocation2 + $0x78] sm:$0xf]
      %v742 = vld [vmem:[#allocation2 + $0x80] sm:$0x8]
      %v743 = vld [vmem:[#allocation2 + $0x84] sm:$0xf]
      %v744 = vld [vmem:[#allocation2 + $0x88] sm:$0xf]
      %v745 = vld [vmem:[#allocation2 + $0x90] sm:$0x8]
      %v746 = vld [vmem:[#allocation2 + $0x94] sm:$0xf]
      %v747 = vld [vmem:[#allocation2 + $0x98] sm:$0xf]
      %v748 = vld [vmem:[#allocation2 + $0xa0] sm:$0x8]
      %v749 = vld [vmem:[#allocation2 + $0xa4] sm:$0xf]
      %v750 = vld [vmem:[#allocation2 + $0xa8] sm:$0xf]
      %v751 = vld [vmem:[#allocation2 + $0xb0] sm:$0x8]
      %v752 = vld [vmem:[#allocation2 + $0xb4] sm:$0xf]
      %v753 = vld [vmem:[#allocation2 + $0xb8] sm:$0xf]
      %v754 = vld [vmem:[#allocation2 + $0x4] sm:$0xf]
      %v755 = vld [vmem:[#allocation2 + $0x8] sm:$0xf]
      %v756 = vld [vmem:[#allocation2 + $0xc] sm:$0x1]
      %v757 = vld [vmem:[#allocation2 + $0x14] sm:$0xf]
      %v758 = vld [vmem:[#allocation2 + $0x18] sm:$0xf]
      %v759 = vld [vmem:[#allocation2 + $0x1c] sm:$0x1]
      %v760 = vld [vmem:[#allocation2 + $0x24] sm:$0xf]
      %v761 = vld [vmem:[#allocation2 + $0x28] sm:$0xf]
      %v762 = vld [vmem:[#allocation2 + $0x2c] sm:$0x1]
      %v763 = vld [vmem:[#allocation2 + $0x34] sm:$0xf]
      %v764 = vld [vmem:[#allocation2 + $0x38] sm:$0xf]
      %v765 = vld [vmem:[#allocation2 + $0x3c] sm:$0x1]
      %v766 = vld [vmem:[#allocation2 + $0x44] sm:$0xf]
      %v767 = vld [vmem:[#allocation2 + $0x48] sm:$0xf]
      %v768 = vld [vmem:[#allocation2 + $0x4c] sm:$0x1]
      %v769 = vld [vmem:[#allocation2 + $0x54] sm:$0xf]
      %v770 = vld [vmem:[#allocation2 + $0x58] sm:$0xf]
      %v771 = vld [vmem:[#allocation2 + $0x5c] sm:$0x1]
      %v772 = vld [vmem:[#allocation2 + $0x64] sm:$0xf]
      %v773 = vld [vmem:[#allocation2 + $0x68] sm:$0xf]
      %v774 = vld [vmem:[#allocation2 + $0x6c] sm:$0x1]
      %v775 = vld [vmem:[#allocation2 + $0x74] sm:$0xf]
      %v776 = vld [vmem:[#allocation2 + $0x78] sm:$0xf]
      %v777 = vld [vmem:[#allocation2 + $0x7c] sm:$0x1]
      %v778 = vld [vmem:[#allocation2 + $0x84] sm:$0xf]
      %v779 = vld [vmem:[#allocation2 + $0x88] sm:$0xf]
      %v780 = vld [vmem:[#allocation2 + $0x8c] sm:$0x1]
      %v781 = vld [vmem:[#allocation2 + $0x94] sm:$0xf]
      %v782 = vld [vmem:[#allocation2 + $0x98] sm:$0xf]
      %v783 = vld [vmem:[#allocation2 + $0x9c] sm:$0x1]
      %v784 = vld [vmem:[#allocation2 + $0xa4] sm:$0xf]
      %v785 = vld [vmem:[#allocation2 + $0xa8] sm:$0xf]
      %v786 = vld [vmem:[#allocation2 + $0xac] sm:$0x1]
      %v787 = vld [vmem:[#allocation2 + $0xb4] sm:$0xf]
      %v788 = vld [vmem:[#allocation2 + $0xb8] sm:$0xf]
      %v789 = vld [vmem:[#allocation2 + $0xbc] sm:$0x1]
      %v826 = vunpack.c.l.b16 %v718
      %v827 = vunpack.c.l.b16 %v719
      %v828 = vunpack.c.l.b16 %v720
      %v829 = vunpack.c.l.b16 %v721
      %v830 = vunpack.c.l.b16 %v722
      %v831 = vunpack.c.l.b16 %v723
      %v832 = vunpack.c.l.b16 %v724
      %v833 = vunpack.c.l.b16 %v725
      %v834 = vunpack.c.l.b16 %v726
      %v835 = vunpack.c.l.b16 %v727
      %v836 = vunpack.c.l.b16 %v728
      %v837 = vunpack.c.l.b16 %v729
      %v838 = vunpack.c.l.b16 %v730
      %v839 = vunpack.c.l.b16 %v731
      %v840 = vunpack.c.l.b16 %v732
      %v841 = vunpack.c.l.b16 %v733
      %v842 = vunpack.c.l.b16 %v734
      %v843 = vunpack.c.l.b16 %v735
      %v844 = vunpack.c.l.b16 %v736
      %v845 = vunpack.c.l.b16 %v737
      %v846 = vunpack.c.l.b16 %v738
      %v847 = vunpack.c.l.b16 %v739
      %v848 = vunpack.c.l.b16 %v740
      %v849 = vunpack.c.l.b16 %v741
      %v850 = vunpack.c.l.b16 %v742
      %v851 = vunpack.c.l.b16 %v743
      %v852 = vunpack.c.l.b16 %v744
      %v853 = vunpack.c.l.b16 %v745
      %v854 = vunpack.c.l.b16 %v746
      %v855 = vunpack.c.l.b16 %v747
      %v856 = vunpack.c.l.b16 %v748
      %v857 = vunpack.c.l.b16 %v749
      %v858 = vunpack.c.l.b16 %v750
      %v859 = vunpack.c.l.b16 %v751
      %v860 = vunpack.c.l.b16 %v752
      %v861 = vunpack.c.l.b16 %v753
      %v862 = vpack.c.b16 %v827, %v826
      %v863 = vpack.c.b16 %v828, %v828
      %v864 = vpack.c.b16 %v830, %v829
      %v865 = vpack.c.b16 %v831, %v831
      %v866 = vpack.c.b16 %v833, %v832
      %v867 = vpack.c.b16 %v834, %v834
      %v868 = vpack.c.b16 %v836, %v835
      %v869 = vpack.c.b16 %v837, %v837
      %v870 = vpack.c.b16 %v839, %v838
      %v871 = vpack.c.b16 %v840, %v840
      %v872 = vpack.c.b16 %v842, %v841
      %v873 = vpack.c.b16 %v843, %v843
      %v874 = vpack.c.b16 %v845, %v844
      %v875 = vpack.c.b16 %v846, %v846
      %v876 = vpack.c.b16 %v848, %v847
      %v877 = vpack.c.b16 %v849, %v849
      %v878 = vpack.c.b16 %v851, %v850
      %v879 = vpack.c.b16 %v852, %v852
      %v880 = vpack.c.b16 %v854, %v853
      %v881 = vpack.c.b16 %v855, %v855
      %v882 = vpack.c.b16 %v857, %v856
      %v883 = vpack.c.b16 %v858, %v858
      %v884 = vpack.c.b16 %v860, %v859
      %v885 = vpack.c.b16 %v861, %v861
      %v886 = vpack.c.b16 %v828, %v827
      %v887 = vpack.c.b16 %v831, %v830
      %v888 = vpack.c.b16 %v834, %v833
      %v889 = vpack.c.b16 %v837, %v836
      %v890 = vpack.c.b16 %v840, %v839
      %v891 = vpack.c.b16 %v843, %v842
      %v892 = vpack.c.b16 %v846, %v845
      %v893 = vpack.c.b16 %v849, %v848
      %v894 = vpack.c.b16 %v852, %v851
      %v895 = vpack.c.b16 %v855, %v854
      %v896 = vpack.c.b16 %v858, %v857
      %v897 = vpack.c.b16 %v861, %v860
      %v899 = vshrl.u32 %v886, 16
      %v901 = vrot.slane %v899, 4
      %v902 = vshll.u32 %v886, 16
      %v904 = vrot.slane %v902, 5
      %v905 = vor.u32 %v901, %v904
      %v907 = vshrl.u32 %v887, 16
      %v909 = vrot.slane %v907, 4
      %v910 = vshll.u32 %v887, 16
      %v912 = vrot.slane %v910, 5
      %v913 = vor.u32 %v909, %v912
      %v915 = vshrl.u32 %v888, 16
      %v917 = vrot.slane %v915, 4
      %v918 = vshll.u32 %v888, 16
      %v920 = vrot.slane %v918, 5
      %v921 = vor.u32 %v917, %v920
      %v923 = vshrl.u32 %v889, 16
      %v925 = vrot.slane %v923, 4
      %v926 = vshll.u32 %v889, 16
      %v928 = vrot.slane %v926, 5
      %v929 = vor.u32 %v925, %v928
      %v931 = vshrl.u32 %v890, 16
      %v933 = vrot.slane %v931, 4
      %v934 = vshll.u32 %v890, 16
      %v936 = vrot.slane %v934, 5
      %v937 = vor.u32 %v933, %v936
      %v939 = vshrl.u32 %v891, 16
      %v941 = vrot.slane %v939, 4
      %v942 = vshll.u32 %v891, 16
      %v944 = vrot.slane %v942, 5
      %v945 = vor.u32 %v941, %v944
      %v947 = vshrl.u32 %v892, 16
      %v949 = vrot.slane %v947, 4
      %v950 = vshll.u32 %v892, 16
      %v952 = vrot.slane %v950, 5
      %v953 = vor.u32 %v949, %v952
      %v955 = vshrl.u32 %v893, 16
      %v957 = vrot.slane %v955, 4
      %v958 = vshll.u32 %v893, 16
      %v960 = vrot.slane %v958, 5
      %v961 = vor.u32 %v957, %v960
      %v963 = vshrl.u32 %v894, 16
      %v965 = vrot.slane %v963, 4
      %v966 = vshll.u32 %v894, 16
      %v968 = vrot.slane %v966, 5
      %v969 = vor.u32 %v965, %v968
      %v971 = vshrl.u32 %v895, 16
      %v973 = vrot.slane %v971, 4
      %v974 = vshll.u32 %v895, 16
      %v976 = vrot.slane %v974, 5
      %v977 = vor.u32 %v973, %v976
      %v979 = vshrl.u32 %v896, 16
      %v981 = vrot.slane %v979, 4
      %v982 = vshll.u32 %v896, 16
      %v984 = vrot.slane %v982, 5
      %v985 = vor.u32 %v981, %v984
      %v987 = vshrl.u32 %v897, 16
      %v989 = vrot.slane %v987, 4
      %v990 = vshll.u32 %v897, 16
      %v992 = vrot.slane %v990, 5
      %v993 = vor.u32 %v989, %v992
      %v1030 = vunpack.c.l.b16 %v754
      %v1031 = vunpack.c.l.b16 %v755
      %v1032 = vunpack.c.l.b16 %v756
      %v1033 = vunpack.c.l.b16 %v757
      %v1034 = vunpack.c.l.b16 %v758
      %v1035 = vunpack.c.l.b16 %v759
      %v1036 = vunpack.c.l.b16 %v760
      %v1037 = vunpack.c.l.b16 %v761
      %v1038 = vunpack.c.l.b16 %v762
      %v1039 = vunpack.c.l.b16 %v763
      %v1040 = vunpack.c.l.b16 %v764
      %v1041 = vunpack.c.l.b16 %v765
      %v1042 = vunpack.c.l.b16 %v766
      %v1043 = vunpack.c.l.b16 %v767
      %v1044 = vunpack.c.l.b16 %v768
      %v1045 = vunpack.c.l.b16 %v769
      %v1046 = vunpack.c.l.b16 %v770
      %v1047 = vunpack.c.l.b16 %v771
      %v1048 = vunpack.c.l.b16 %v772
      %v1049 = vunpack.c.l.b16 %v773
      %v1050 = vunpack.c.l.b16 %v774
      %v1051 = vunpack.c.l.b16 %v775
      %v1052 = vunpack.c.l.b16 %v776
      %v1053 = vunpack.c.l.b16 %v777
      %v1054 = vunpack.c.l.b16 %v778
      %v1055 = vunpack.c.l.b16 %v779
      %v1056 = vunpack.c.l.b16 %v780
      %v1057 = vunpack.c.l.b16 %v781
      %v1058 = vunpack.c.l.b16 %v782
      %v1059 = vunpack.c.l.b16 %v783
      %v1060 = vunpack.c.l.b16 %v784
      %v1061 = vunpack.c.l.b16 %v785
      %v1062 = vunpack.c.l.b16 %v786
      %v1063 = vunpack.c.l.b16 %v787
      %v1064 = vunpack.c.l.b16 %v788
      %v1065 = vunpack.c.l.b16 %v789
      %v1066 = vpack.c.b16 %v1031, %v1030
      %v1067 = vpack.c.b16 %v1032, %v1032
      %v1068 = vpack.c.b16 %v1034, %v1033
      %v1069 = vpack.c.b16 %v1035, %v1035
      %v1070 = vpack.c.b16 %v1037, %v1036
      %v1071 = vpack.c.b16 %v1038, %v1038
      %v1072 = vpack.c.b16 %v1040, %v1039
      %v1073 = vpack.c.b16 %v1041, %v1041
      %v1074 = vpack.c.b16 %v1043, %v1042
      %v1075 = vpack.c.b16 %v1044, %v1044
      %v1076 = vpack.c.b16 %v1046, %v1045
      %v1077 = vpack.c.b16 %v1047, %v1047
      %v1078 = vpack.c.b16 %v1049, %v1048
      %v1079 = vpack.c.b16 %v1050, %v1050
      %v1080 = vpack.c.b16 %v1052, %v1051
      %v1081 = vpack.c.b16 %v1053, %v1053
      %v1082 = vpack.c.b16 %v1055, %v1054
      %v1083 = vpack.c.b16 %v1056, %v1056
      %v1084 = vpack.c.b16 %v1058, %v1057
      %v1085 = vpack.c.b16 %v1059, %v1059
      %v1086 = vpack.c.b16 %v1061, %v1060
      %v1087 = vpack.c.b16 %v1062, %v1062
      %v1088 = vpack.c.b16 %v1064, %v1063
      %v1089 = vpack.c.b16 %v1065, %v1065
      %vm1090 = vcmask 1042432
      %v1091 = vrot.slane %v1066, 5
      %v1092 = vrot.slane %v1067, 5
      %v1093 = vsel %vm1090, %v1091, %v1092
      %v1094 = vrot.slane %v1068, 5
      %v1095 = vrot.slane %v1069, 5
      %v1096 = vsel %vm1090, %v1094, %v1095
      %v1097 = vrot.slane %v1070, 5
      %v1098 = vrot.slane %v1071, 5
      %v1099 = vsel %vm1090, %v1097, %v1098
      %v1100 = vrot.slane %v1072, 5
      %v1101 = vrot.slane %v1073, 5
      %v1102 = vsel %vm1090, %v1100, %v1101
      %v1103 = vrot.slane %v1074, 5
      %v1104 = vrot.slane %v1075, 5
      %v1105 = vsel %vm1090, %v1103, %v1104
      %v1106 = vrot.slane %v1076, 5
      %v1107 = vrot.slane %v1077, 5
      %v1108 = vsel %vm1090, %v1106, %v1107
      %v1109 = vrot.slane %v1078, 5
      %v1110 = vrot.slane %v1079, 5
      %v1111 = vsel %vm1090, %v1109, %v1110
      %v1112 = vrot.slane %v1080, 5
      %v1113 = vrot.slane %v1081, 5
      %v1114 = vsel %vm1090, %v1112, %v1113
      %v1115 = vrot.slane %v1082, 5
      %v1116 = vrot.slane %v1083, 5
      %v1117 = vsel %vm1090, %v1115, %v1116
      %v1118 = vrot.slane %v1084, 5
      %v1119 = vrot.slane %v1085, 5
      %v1120 = vsel %vm1090, %v1118, %v1119
      %v1121 = vrot.slane %v1086, 5
      %v1122 = vrot.slane %v1087, 5
      %v1123 = vsel %vm1090, %v1121, %v1122
      %v1124 = vrot.slane %v1088, 5
      %v1125 = vrot.slane %v1089, 5
      %v1126 = vsel %vm1090, %v1124, %v1125
      %vm1127 = vsmask.f32 4352
      %v1129 = vshrl.u32 %v862, 16
      %v1131 = vrot.slane %v1129, 3
      %v1132 = vshll.u32 %v862, 16
      %v1134 = vrot.slane %v1132, 4
      %v1135 = vor.u32 %v1131, %v1134
      %v1137 = vshrl.u32 %v863, 16
      %v1139 = vrot.slane %v1137, 3
      %v1140 = vshll.u32 %v863, 16
      %v1142 = vrot.slane %v1140, 4
      %v1143 = vor.u32 %v1139, %v1142
      %v1144 = vsel %vm1127, %v1135, %v1143
      %v1146 = vshrl.u32 %v905, 16
      %v1148 = vrot.slane %v1146, 3
      %v1149 = vshll.u32 %v905, 16
      %v1151 = vrot.slane %v1149, 4
      %v1152 = vor.u32 %v1148, %v1151
      %v1153 = vsel %vm1127, %v1152, %v1152
      %v1155 = vshrl.u32 %v1091, 16
      %v1157 = vrot.slane %v1155, 3
      %v1158 = vshll.u32 %v1091, 16
      %v1160 = vrot.slane %v1158, 4
      %v1161 = vor.u32 %v1157, %v1160
      %v1163 = vshrl.u32 %v1093, 16
      %v1165 = vrot.slane %v1163, 3
      %v1166 = vshll.u32 %v1093, 16
      %v1168 = vrot.slane %v1166, 4
      %v1169 = vor.u32 %v1165, %v1168
      %v1170 = vsel %vm1127, %v1161, %v1169
      %v1172 = vshrl.u32 %v864, 16
      %v1174 = vrot.slane %v1172, 3
      %v1175 = vshll.u32 %v864, 16
      %v1177 = vrot.slane %v1175, 4
      %v1178 = vor.u32 %v1174, %v1177
      %v1180 = vshrl.u32 %v865, 16
      %v1182 = vrot.slane %v1180, 3
      %v1183 = vshll.u32 %v865, 16
      %v1185 = vrot.slane %v1183, 4
      %v1186 = vor.u32 %v1182, %v1185
      %v1187 = vsel %vm1127, %v1178, %v1186
      %v1189 = vshrl.u32 %v913, 16
      %v1191 = vrot.slane %v1189, 3
      %v1192 = vshll.u32 %v913, 16
      %v1194 = vrot.slane %v1192, 4
      %v1195 = vor.u32 %v1191, %v1194
      %v1196 = vsel %vm1127, %v1195, %v1195
      %v1198 = vshrl.u32 %v1094, 16
      %v1200 = vrot.slane %v1198, 3
      %v1201 = vshll.u32 %v1094, 16
      %v1203 = vrot.slane %v1201, 4
      %v1204 = vor.u32 %v1200, %v1203
      %v1206 = vshrl.u32 %v1096, 16
      %v1208 = vrot.slane %v1206, 3
      %v1209 = vshll.u32 %v1096, 16
      %v1211 = vrot.slane %v1209, 4
      %v1212 = vor.u32 %v1208, %v1211
      %v1213 = vsel %vm1127, %v1204, %v1212
      %v1215 = vshrl.u32 %v866, 16
      %v1217 = vrot.slane %v1215, 3
      %v1218 = vshll.u32 %v866, 16
      %v1220 = vrot.slane %v1218, 4
      %v1221 = vor.u32 %v1217, %v1220
      %v1223 = vshrl.u32 %v867, 16
      %v1225 = vrot.slane %v1223, 3
      %v1226 = vshll.u32 %v867, 16
      %v1228 = vrot.slane %v1226, 4
      %v1229 = vor.u32 %v1225, %v1228
      %v1230 = vsel %vm1127, %v1221, %v1229
      %v1232 = vshrl.u32 %v921, 16
      %v1234 = vrot.slane %v1232, 3
      %v1235 = vshll.u32 %v921, 16
      %v1237 = vrot.slane %v1235, 4
      %v1238 = vor.u32 %v1234, %v1237
      %v1239 = vsel %vm1127, %v1238, %v1238
      %v1241 = vshrl.u32 %v1097, 16
      %v1243 = vrot.slane %v1241, 3
      %v1244 = vshll.u32 %v1097, 16
      %v1246 = vrot.slane %v1244, 4
      %v1247 = vor.u32 %v1243, %v1246
      %v1249 = vshrl.u32 %v1099, 16
      %v1251 = vrot.slane %v1249, 3
      %v1252 = vshll.u32 %v1099, 16
      %v1254 = vrot.slane %v1252, 4
      %v1255 = vor.u32 %v1251, %v1254
      %v1256 = vsel %vm1127, %v1247, %v1255
      %v1258 = vshrl.u32 %v868, 16
      %v1260 = vrot.slane %v1258, 3
      %v1261 = vshll.u32 %v868, 16
      %v1263 = vrot.slane %v1261, 4
      %v1264 = vor.u32 %v1260, %v1263
      %v1266 = vshrl.u32 %v869, 16
      %v1268 = vrot.slane %v1266, 3
      %v1269 = vshll.u32 %v869, 16
      %v1271 = vrot.slane %v1269, 4
      %v1272 = vor.u32 %v1268, %v1271
      %v1273 = vsel %vm1127, %v1264, %v1272
      %v1275 = vshrl.u32 %v929, 16
      %v1277 = vrot.slane %v1275, 3
      %v1278 = vshll.u32 %v929, 16
      %v1280 = vrot.slane %v1278, 4
      %v1281 = vor.u32 %v1277, %v1280
      %v1282 = vsel %vm1127, %v1281, %v1281
      %v1284 = vshrl.u32 %v1100, 16
      %v1286 = vrot.slane %v1284, 3
      %v1287 = vshll.u32 %v1100, 16
      %v1289 = vrot.slane %v1287, 4
      %v1290 = vor.u32 %v1286, %v1289
      %v1292 = vshrl.u32 %v1102, 16
      %v1294 = vrot.slane %v1292, 3
      %v1295 = vshll.u32 %v1102, 16
      %v1297 = vrot.slane %v1295, 4
      %v1298 = vor.u32 %v1294, %v1297
      %v1299 = vsel %vm1127, %v1290, %v1298
      %v1301 = vshrl.u32 %v870, 16
      %v1303 = vrot.slane %v1301, 3
      %v1304 = vshll.u32 %v870, 16
      %v1306 = vrot.slane %v1304, 4
      %v1307 = vor.u32 %v1303, %v1306
      %v1309 = vshrl.u32 %v871, 16
      %v1311 = vrot.slane %v1309, 3
      %v1312 = vshll.u32 %v871, 16
      %v1314 = vrot.slane %v1312, 4
      %v1315 = vor.u32 %v1311, %v1314
      %v1316 = vsel %vm1127, %v1307, %v1315
      %v1318 = vshrl.u32 %v937, 16
      %v1320 = vrot.slane %v1318, 3
      %v1321 = vshll.u32 %v937, 16
      %v1323 = vrot.slane %v1321, 4
      %v1324 = vor.u32 %v1320, %v1323
      %v1325 = vsel %vm1127, %v1324, %v1324
      %v1327 = vshrl.u32 %v1103, 16
      %v1329 = vrot.slane %v1327, 3
      %v1330 = vshll.u32 %v1103, 16
      %v1332 = vrot.slane %v1330, 4
      %v1333 = vor.u32 %v1329, %v1332
      %v1335 = vshrl.u32 %v1105, 16
      %v1337 = vrot.slane %v1335, 3
      %v1338 = vshll.u32 %v1105, 16
      %v1340 = vrot.slane %v1338, 4
      %v1341 = vor.u32 %v1337, %v1340
      %v1342 = vsel %vm1127, %v1333, %v1341
      %v1344 = vshrl.u32 %v872, 16
      %v1346 = vrot.slane %v1344, 3
      %v1347 = vshll.u32 %v872, 16
      %v1349 = vrot.slane %v1347, 4
      %v1350 = vor.u32 %v1346, %v1349
      %v1352 = vshrl.u32 %v873, 16
      %v1354 = vrot.slane %v1352, 3
      %v1355 = vshll.u32 %v873, 16
      %v1357 = vrot.slane %v1355, 4
      %v1358 = vor.u32 %v1354, %v1357
      %v1359 = vsel %vm1127, %v1350, %v1358
      %v1361 = vshrl.u32 %v945, 16
      %v1363 = vrot.slane %v1361, 3
      %v1364 = vshll.u32 %v945, 16
      %v1366 = vrot.slane %v1364, 4
      %v1367 = vor.u32 %v1363, %v1366
      %v1368 = vsel %vm1127, %v1367, %v1367
      %v1370 = vshrl.u32 %v1106, 16
      %v1372 = vrot.slane %v1370, 3
      %v1373 = vshll.u32 %v1106, 16
      %v1375 = vrot.slane %v1373, 4
      %v1376 = vor.u32 %v1372, %v1375
      %v1378 = vshrl.u32 %v1108, 16
      %v1380 = vrot.slane %v1378, 3
      %v1381 = vshll.u32 %v1108, 16
      %v1383 = vrot.slane %v1381, 4
      %v1384 = vor.u32 %v1380, %v1383
      %v1385 = vsel %vm1127, %v1376, %v1384
      %v1387 = vshrl.u32 %v874, 16
      %v1389 = vrot.slane %v1387, 3
      %v1390 = vshll.u32 %v874, 16
      %v1392 = vrot.slane %v1390, 4
      %v1393 = vor.u32 %v1389, %v1392
      %v1395 = vshrl.u32 %v875, 16
      %v1397 = vrot.slane %v1395, 3
      %v1398 = vshll.u32 %v875, 16
      %v1400 = vrot.slane %v1398, 4
      %v1401 = vor.u32 %v1397, %v1400
      %v1402 = vsel %vm1127, %v1393, %v1401
      %v1404 = vshrl.u32 %v953, 16
      %v1406 = vrot.slane %v1404, 3
      %v1407 = vshll.u32 %v953, 16
      %v1409 = vrot.slane %v1407, 4
      %v1410 = vor.u32 %v1406, %v1409
      %v1411 = vsel %vm1127, %v1410, %v1410
      %v1413 = vshrl.u32 %v1109, 16
      %v1415 = vrot.slane %v1413, 3
      %v1416 = vshll.u32 %v1109, 16
      %v1418 = vrot.slane %v1416, 4
      %v1419 = vor.u32 %v1415, %v1418
      %v1421 = vshrl.u32 %v1111, 16
      %v1423 = vrot.slane %v1421, 3
      %v1424 = vshll.u32 %v1111, 16
      %v1426 = vrot.slane %v1424, 4
      %v1427 = vor.u32 %v1423, %v1426
      %v1428 = vsel %vm1127, %v1419, %v1427
      %v1430 = vshrl.u32 %v876, 16
      %v1432 = vrot.slane %v1430, 3
      %v1433 = vshll.u32 %v876, 16
      %v1435 = vrot.slane %v1433, 4
      %v1436 = vor.u32 %v1432, %v1435
      %v1438 = vshrl.u32 %v877, 16
      %v1440 = vrot.slane %v1438, 3
      %v1441 = vshll.u32 %v877, 16
      %v1443 = vrot.slane %v1441, 4
      %v1444 = vor.u32 %v1440, %v1443
      %v1445 = vsel %vm1127, %v1436, %v1444
      %v1447 = vshrl.u32 %v961, 16
      %v1449 = vrot.slane %v1447, 3
      %v1450 = vshll.u32 %v961, 16
      %v1452 = vrot.slane %v1450, 4
      %v1453 = vor.u32 %v1449, %v1452
      %v1454 = vsel %vm1127, %v1453, %v1453
      %v1456 = vshrl.u32 %v1112, 16
      %v1458 = vrot.slane %v1456, 3
      %v1459 = vshll.u32 %v1112, 16
      %v1461 = vrot.slane %v1459, 4
      %v1462 = vor.u32 %v1458, %v1461
      %v1464 = vshrl.u32 %v1114, 16
      %v1466 = vrot.slane %v1464, 3
      %v1467 = vshll.u32 %v1114, 16
      %v1469 = vrot.slane %v1467, 4
      %v1470 = vor.u32 %v1466, %v1469
      %v1471 = vsel %vm1127, %v1462, %v1470
      %v1473 = vshrl.u32 %v878, 16
      %v1475 = vrot.slane %v1473, 3
      %v1476 = vshll.u32 %v878, 16
      %v1478 = vrot.slane %v1476, 4
      %v1479 = vor.u32 %v1475, %v1478
      %v1481 = vshrl.u32 %v879, 16
      %v1483 = vrot.slane %v1481, 3
      %v1484 = vshll.u32 %v879, 16
      %v1486 = vrot.slane %v1484, 4
      %v1487 = vor.u32 %v1483, %v1486
      %v1488 = vsel %vm1127, %v1479, %v1487
      %v1490 = vshrl.u32 %v969, 16
      %v1492 = vrot.slane %v1490, 3
      %v1493 = vshll.u32 %v969, 16
      %v1495 = vrot.slane %v1493, 4
      %v1496 = vor.u32 %v1492, %v1495
      %v1497 = vsel %vm1127, %v1496, %v1496
      %v1499 = vshrl.u32 %v1115, 16
      %v1501 = vrot.slane %v1499, 3
      %v1502 = vshll.u32 %v1115, 16
      %v1504 = vrot.slane %v1502, 4
      %v1505 = vor.u32 %v1501, %v1504
      %v1507 = vshrl.u32 %v1117, 16
      %v1509 = vrot.slane %v1507, 3
      %v1510 = vshll.u32 %v1117, 16
      %v1512 = vrot.slane %v1510, 4
      %v1513 = vor.u32 %v1509, %v1512
      %v1514 = vsel %vm1127, %v1505, %v1513
      %v1516 = vshrl.u32 %v880, 16
      %v1518 = vrot.slane %v1516, 3
      %v1519 = vshll.u32 %v880, 16
      %v1521 = vrot.slane %v1519, 4
      %v1522 = vor.u32 %v1518, %v1521
      %v1524 = vshrl.u32 %v881, 16
      %v1526 = vrot.slane %v1524, 3
      %v1527 = vshll.u32 %v881, 16
      %v1529 = vrot.slane %v1527, 4
      %v1530 = vor.u32 %v1526, %v1529
      %v1531 = vsel %vm1127, %v1522, %v1530
      %v1533 = vshrl.u32 %v977, 16
      %v1535 = vrot.slane %v1533, 3
      %v1536 = vshll.u32 %v977, 16
      %v1538 = vrot.slane %v1536, 4
      %v1539 = vor.u32 %v1535, %v1538
      %v1540 = vsel %vm1127, %v1539, %v1539
      %v1542 = vshrl.u32 %v1118, 16
      %v1544 = vrot.slane %v1542, 3
      %v1545 = vshll.u32 %v1118, 16
      %v1547 = vrot.slane %v1545, 4
      %v1548 = vor.u32 %v1544, %v1547
      %v1550 = vshrl.u32 %v1120, 16
      %v1552 = vrot.slane %v1550, 3
      %v1553 = vshll.u32 %v1120, 16
      %v1555 = vrot.slane %v1553, 4
      %v1556 = vor.u32 %v1552, %v1555
      %v1557 = vsel %vm1127, %v1548, %v1556
      %v1588 = vld [vmem:[%s3] sm:$0xf]
      %v1589 = vld [vmem:[%s3 + $0x4] sm:$0xf]
      %v1590 = vld [vmem:[%s3 + $0x8] sm:$0xf]
      %v1591 = vld [vmem:[%s3 + $0xc] sm:$0xf]
      %v1592 = vld [vmem:[%s3 + $0x10] sm:$0xf]
      %v1593 = vld [vmem:[%s3 + $0x14] sm:$0xf]
      %v1594 = vld [vmem:[%s3 + $0x18] sm:$0xf]
      %v1595 = vld [vmem:[%s3 + $0x1c] sm:$0xf]
      %v1596 = vld [vmem:[%s3 + $0x20] sm:$0xf]
      %v1597 = vld [vmem:[%s3 + $0x24] sm:$0xf]
      %v1598 = vld [vmem:[%s3 + $0x28] sm:$0xf]
      %v1599 = vld [vmem:[%s3 + $0x2c] sm:$0xf]
      %v1600 = vld [vmem:[%s3 + $0x30] sm:$0xf]
      %v1601 = vld [vmem:[%s3 + $0x34] sm:$0xf]
      %v1602 = vld [vmem:[%s3 + $0x38] sm:$0xf]
      %v1603 = vld [vmem:[%s3 + $0x3c] sm:$0xf]
      %v1604 = vld [vmem:[%s3 + $0x40] sm:$0xf]
      %v1605 = vld [vmem:[%s3 + $0x44] sm:$0xf]
      %v1606 = vld [vmem:[%s3 + $0x48] sm:$0xf]
      %v1607 = vld [vmem:[%s3 + $0x4c] sm:$0xf]
      %v1608 = vld [vmem:[%s3 + $0x50] sm:$0xf]
      %v1609 = vld [vmem:[%s3 + $0x54] sm:$0xf]
      %v1610 = vld [vmem:[%s3 + $0x58] sm:$0xf]
      %v1611 = vld [vmem:[%s3 + $0x5c] sm:$0xf]
      %v1612 = vld [vmem:[%s3 + $0x60] sm:$0xf]
      %v1613 = vld [vmem:[%s3 + $0x64] sm:$0xf]
      %v1614 = vld [vmem:[%s3 + $0x68] sm:$0xf]
      %v1615 = vld [vmem:[%s3 + $0x6c] sm:$0xf]
      %v1616 = vld [vmem:[%s3 + $0x70] sm:$0xf]
      %v1617 = vld [vmem:[%s3 + $0x74] sm:$0xf]
      %v1618 = vld [vmem:[%s3 + $0x78] sm:$0xf]
      %v1619 = vld [vmem:[%s3 + $0x7c] sm:$0xf]
      %v1620 = vld [vmem:[%s3 + $0x80] sm:$0xf]
      %v1621 = vld [vmem:[%s3 + $0x84] sm:$0xf]
      %v1622 = vld [vmem:[%s3 + $0x88] sm:$0xf]
      %v1623 = vld [vmem:[%s3 + $0x8c] sm:$0xf]
      %v1624 = vld [vmem:[%s3 + $0x90] sm:$0xf]
      %v1625 = vld [vmem:[%s3 + $0x94] sm:$0xf]
      %v1626 = vld [vmem:[%s3 + $0x98] sm:$0xf]
      %v1627 = vld [vmem:[%s3 + $0x9c] sm:$0xf]
      %v1628 = vld [vmem:[%s3 + $0xa0] sm:$0xf]
      %v1629 = vld [vmem:[%s3 + $0xa4] sm:$0xf]
      %v1630 = vld [vmem:[%s3 + $0xa8] sm:$0xf]
      %v1631 = vld [vmem:[%s3 + $0xac] sm:$0xf]
      %v1632 = vld [vmem:[%s3 + $0xb0] sm:$0xf]
      %v1633 = vld [vmem:[%s3 + $0xb4] sm:$0xf]
      %v1634 = vld [vmem:[%s3 + $0xb8] sm:$0xf]
      %v1635 = vld [vmem:[%s3 + $0xbc] sm:$0xf]
      %v1637 = vshrl.u32 %v882, 16
      %v1639 = vrot.slane %v1637, 3
      %v1640 = vshll.u32 %v882, 16
      %v1642 = vrot.slane %v1640, 4
      %v1643 = vor.u32 %v1639, %v1642
      %v1645 = vshrl.u32 %v883, 16
      %v1647 = vrot.slane %v1645, 3
      %v1648 = vshll.u32 %v883, 16
      %v1650 = vrot.slane %v1648, 4
      %v1651 = vor.u32 %v1647, %v1650
      %v1652 = vsel %vm1127, %v1643, %v1651
      %v1654 = vshrl.u32 %v985, 16
      %v1656 = vrot.slane %v1654, 3
      %v1657 = vshll.u32 %v985, 16
      %v1659 = vrot.slane %v1657, 4
      %v1660 = vor.u32 %v1656, %v1659
      %v1661 = vsel %vm1127, %v1660, %v1660
      %v1663 = vshrl.u32 %v1121, 16
      %v1665 = vrot.slane %v1663, 3
      %v1666 = vshll.u32 %v1121, 16
      %v1668 = vrot.slane %v1666, 4
      %v1669 = vor.u32 %v1665, %v1668
      %v1671 = vshrl.u32 %v1123, 16
      %v1673 = vrot.slane %v1671, 3
      %v1674 = vshll.u32 %v1123, 16
      %v1676 = vrot.slane %v1674, 4
      %v1677 = vor.u32 %v1673, %v1676
      %v1678 = vsel %vm1127, %v1669, %v1677
      %s1682 = scalar_lea.vmem %s3, 192
      %v1683 = vld [vmem:[%s1682] sm:$0xf]
      %v1684 = vld [vmem:[%s1682 + $0x4] sm:$0xf]
      %v1685 = vld [vmem:[%s1682 + $0x8] sm:$0xf]
      %v1686 = vld [vmem:[%s1682 + $0xc] sm:$0xf]
      %v1687 = vld [vmem:[%s1682 + $0x10] sm:$0xf]
      %v1688 = vld [vmem:[%s1682 + $0x14] sm:$0xf]
      %v1689 = vld [vmem:[%s1682 + $0x18] sm:$0xf]
      %v1690 = vld [vmem:[%s1682 + $0x1c] sm:$0xf]
      %v1691 = vld [vmem:[%s1682 + $0x20] sm:$0xf]
      %v1692 = vld [vmem:[%s1682 + $0x24] sm:$0xf]
      %v1693 = vld [vmem:[%s1682 + $0x28] sm:$0xf]
      %v1694 = vld [vmem:[%s1682 + $0x2c] sm:$0xf]
      %v1695 = vld [vmem:[%s1682 + $0x30] sm:$0xf]
      %v1696 = vld [vmem:[%s1682 + $0x34] sm:$0xf]
      %v1697 = vld [vmem:[%s1682 + $0x38] sm:$0xf]
      %v1698 = vld [vmem:[%s1682 + $0x3c] sm:$0xf]
      %v1699 = vld [vmem:[%s1682 + $0x40] sm:$0xf]
      %v1700 = vld [vmem:[%s1682 + $0x44] sm:$0xf]
      %v1701 = vld [vmem:[%s1682 + $0x48] sm:$0xf]
      %v1702 = vld [vmem:[%s1682 + $0x4c] sm:$0xf]
      %v1703 = vld [vmem:[%s1682 + $0x50] sm:$0xf]
      %v1704 = vld [vmem:[%s1682 + $0x54] sm:$0xf]
      %v1705 = vld [vmem:[%s1682 + $0x58] sm:$0xf]
      %v1706 = vld [vmem:[%s1682 + $0x5c] sm:$0xf]
      %v1707 = vld [vmem:[%s1682 + $0x60] sm:$0xf]
      %v1708 = vld [vmem:[%s1682 + $0x64] sm:$0xf]
      %v1709 = vld [vmem:[%s1682 + $0x68] sm:$0xf]
      %v1710 = vld [vmem:[%s1682 + $0x6c] sm:$0xf]
      %v1711 = vld [vmem:[%s1682 + $0x70] sm:$0xf]
      %v1712 = vld [vmem:[%s1682 + $0x74] sm:$0xf]
      %v1713 = vld [vmem:[%s1682 + $0x78] sm:$0xf]
      %v1714 = vld [vmem:[%s1682 + $0x7c] sm:$0xf]
      %v1715 = vld [vmem:[%s1682 + $0x80] sm:$0xf]
      %v1716 = vld [vmem:[%s1682 + $0x84] sm:$0xf]
      %v1717 = vld [vmem:[%s1682 + $0x88] sm:$0xf]
      %v1718 = vld [vmem:[%s1682 + $0x8c] sm:$0xf]
      %v1719 = vld [vmem:[%s1682 + $0x90] sm:$0xf]
      %v1720 = vld [vmem:[%s1682 + $0x94] sm:$0xf]
      %v1721 = vld [vmem:[%s1682 + $0x98] sm:$0xf]
      %v1722 = vld [vmem:[%s1682 + $0x9c] sm:$0xf]
      %v1723 = vld [vmem:[%s1682 + $0xa0] sm:$0xf]
      %v1724 = vld [vmem:[%s1682 + $0xa4] sm:$0xf]
      %v1725 = vld [vmem:[%s1682 + $0xa8] sm:$0xf]
      %v1726 = vld [vmem:[%s1682 + $0xac] sm:$0xf]
      %v1727 = vld [vmem:[%s1682 + $0xb0] sm:$0xf]
      %v1728 = vld [vmem:[%s1682 + $0xb4] sm:$0xf]
      %v1729 = vld [vmem:[%s1682 + $0xb8] sm:$0xf]
      %v1730 = vld [vmem:[%s1682 + $0xbc] sm:$0xf]
      %v1779 = vunpack.c.l.b16 %v1683
      %v1780 = vunpack.c.l.b16 %v1684
      %v1781 = vunpack.c.l.b16 %v1685
      %v1782 = vunpack.c.l.b16 %v1686
      %v1783 = vunpack.c.l.b16 %v1687
      %v1784 = vunpack.c.l.b16 %v1688
      %v1785 = vunpack.c.l.b16 %v1689
      %v1786 = vunpack.c.l.b16 %v1690
      %v1787 = vunpack.c.l.b16 %v1691
      %v1788 = vunpack.c.l.b16 %v1692
      %v1789 = vunpack.c.l.b16 %v1693
      %v1790 = vunpack.c.l.b16 %v1694
      %v1791 = vunpack.c.l.b16 %v1695
      %v1792 = vunpack.c.l.b16 %v1696
      %v1793 = vunpack.c.l.b16 %v1697
      %v1794 = vunpack.c.l.b16 %v1698
      %v1795 = vunpack.c.l.b16 %v1699
      %v1796 = vunpack.c.l.b16 %v1700
      %v1797 = vunpack.c.l.b16 %v1701
      %v1798 = vunpack.c.l.b16 %v1702
      %v1799 = vunpack.c.l.b16 %v1703
      %v1800 = vunpack.c.l.b16 %v1704
      %v1801 = vunpack.c.l.b16 %v1705
      %v1802 = vunpack.c.l.b16 %v1706
      %v1803 = vunpack.c.l.b16 %v1707
      %v1804 = vunpack.c.l.b16 %v1708
      %v1805 = vunpack.c.l.b16 %v1709
      %v1806 = vunpack.c.l.b16 %v1710
      %v1807 = vunpack.c.l.b16 %v1711
      %v1808 = vunpack.c.l.b16 %v1712
      %v1809 = vunpack.c.l.b16 %v1713
      %v1810 = vunpack.c.l.b16 %v1714
      %v1811 = vunpack.c.l.b16 %v1715
      %v1812 = vunpack.c.l.b16 %v1716
      %v1813 = vunpack.c.l.b16 %v1717
      %v1814 = vunpack.c.l.b16 %v1718
      %v1815 = vunpack.c.l.b16 %v1719
      %v1816 = vunpack.c.l.b16 %v1720
      %v1817 = vunpack.c.l.b16 %v1721
      %v1818 = vunpack.c.l.b16 %v1722
      %v1819 = vunpack.c.l.b16 %v1723
      %v1820 = vunpack.c.l.b16 %v1724
      %v1821 = vunpack.c.l.b16 %v1725
      %v1822 = vunpack.c.l.b16 %v1726
      %v1823 = vunpack.c.l.b16 %v1727
      %v1824 = vunpack.c.l.b16 %v1728
      %v1825 = vunpack.c.l.b16 %v1729
      %v1826 = vunpack.c.l.b16 %v1730
      %v1827 = vpack.c.b16 %v1780, %v1779
      %v1828 = vpack.c.b16 %v1782, %v1781
      %v1829 = vpack.c.b16 %v1784, %v1783
      %v1830 = vpack.c.b16 %v1786, %v1785
      %v1831 = vpack.c.b16 %v1788, %v1787
      %v1832 = vpack.c.b16 %v1790, %v1789
      %v1833 = vpack.c.b16 %v1792, %v1791
      %v1834 = vpack.c.b16 %v1794, %v1793
      %v1835 = vpack.c.b16 %v1796, %v1795
      %v1836 = vpack.c.b16 %v1798, %v1797
      %v1837 = vpack.c.b16 %v1800, %v1799
      %v1838 = vpack.c.b16 %v1802, %v1801
      %v1839 = vpack.c.b16 %v1804, %v1803
      %v1840 = vpack.c.b16 %v1806, %v1805
      %v1841 = vpack.c.b16 %v1808, %v1807
      %v1842 = vpack.c.b16 %v1810, %v1809
      %v1843 = vpack.c.b16 %v1812, %v1811
      %v1844 = vpack.c.b16 %v1814, %v1813
      %v1845 = vpack.c.b16 %v1816, %v1815
      %v1846 = vpack.c.b16 %v1818, %v1817
      %v1847 = vpack.c.b16 %v1820, %v1819
      %v1848 = vpack.c.b16 %v1822, %v1821
      %v1849 = vpack.c.b16 %v1824, %v1823
      %v1850 = vpack.c.b16 %v1826, %v1825
      %1875 = vmatprep.subr.bf16.mxu0 0
      %1876 = vmatpush1.bf16.msra.mxu0 %v1834
      %1877 = vmatprep.subr.bf16.mxu0 0
      %1878 = vmatpush1.bf16.msra.mxu0 %v1833
      %1879 = vmatprep.subr.bf16.mxu0 0
      %1880 = vmatpush1.bf16.msra.mxu0 %v1832
      %1881 = vmatprep.subr.bf16.mxu0 0
      %1882 = vmatpush1.bf16.msra.mxu0 %v1831
      %1883 = vmatprep.subr.bf16.mxu0 0
      %1884 = vmatpush1.bf16.msra.mxu0 %v1830
      %1885 = vmatprep.subr.bf16.mxu0 0
      %1886 = vmatpush1.bf16.msra.mxu0 %v1829
      %1887 = vmatprep.subr.bf16.mxu0 0
      %1888 = vmatpush1.bf16.msra.mxu0 %v1828
      %1889 = vmatprep.subr.bf16.mxu0 0
      %1890 = vmatpush1.bf16.msra.mxu0 %v1827
      %1891 = vmatprep.subr.bf16.mxu0 0
      %1892 = vmatpush2.bf16.msra.mxu0 %v1842
      %1893 = vmatprep.subr.bf16.mxu0 0
      %1894 = vmatpush2.bf16.msra.mxu0 %v1841
      %1895 = vmatprep.subr.bf16.mxu0 0
      %1896 = vmatpush2.bf16.msra.mxu0 %v1840
      %1897 = vmatprep.subr.bf16.mxu0 0
      %1898 = vmatpush2.bf16.msra.mxu0 %v1839
      %1899 = vmatprep.subr.bf16.mxu0 0
      %1900 = vmatpush2.bf16.msra.mxu0 %v1838
      %1901 = vmatprep.subr.bf16.mxu0 0
      %1902 = vmatpush2.bf16.msra.mxu0 %v1837
      %1903 = vmatprep.subr.bf16.mxu0 0
      %1904 = vmatpush2.bf16.msra.mxu0 %v1836
      %1905 = vmatprep.subr.bf16.mxu0 0
      %1906 = vmatpush2.bf16.msra.mxu0 %v1835
      %1907 = vmatprep.mubr.bf16.mxu0 %v1196
      %1908 = vmatmul.mubr.bf16.gmra.mxu0 %v1187
      %v1909 = vpop.f32.mrf.mxu0
      %v1910 = vadd.f32 0.0, %v1909
      %v1911 = vpop.f32.mrf.mxu0
      %v1912 = vpop.f32.mrf.mxu0
      %v1913 = vadd.f32 0.0, %v1912
      %v1914 = vpop.f32.mrf.mxu0
      %1915 = vmatprep.mubr.bf16.mxu0 %v1239
      %1916 = vmatmul.mubr.bf16.gmra.mxu0 %v1230
      %v1917 = vpop.f32.mrf.mxu0
      %v1918 = vadd.f32 0.0, %v1917
      %v1919 = vpop.f32.mrf.mxu0
      %v1920 = vpop.f32.mrf.mxu0
      %v1921 = vadd.f32 0.0, %v1920
      %v1922 = vpop.f32.mrf.mxu0
      %1923 = vmatprep.mubr.bf16.mxu0 %v1282
      %1924 = vmatmul.mubr.bf16.gmra.mxu0 %v1273
      %v1925 = vpop.f32.mrf.mxu0
      %v1926 = vadd.f32 0.0, %v1925
      %v1927 = vpop.f32.mrf.mxu0
      %v1928 = vpop.f32.mrf.mxu0
      %v1929 = vadd.f32 0.0, %v1928
      %v1930 = vpop.f32.mrf.mxu0
      %1931 = vmatprep.mubr.bf16.mxu0 %v1325
      %1932 = vmatmul.mubr.bf16.gmra.mxu0 %v1316
      %v1933 = vpop.f32.mrf.mxu0
      %v1934 = vadd.f32 0.0, %v1933
      %v1935 = vpop.f32.mrf.mxu0
      %v1936 = vpop.f32.mrf.mxu0
      %v1937 = vadd.f32 0.0, %v1936
      %v1938 = vpop.f32.mrf.mxu0
      %1939 = vmatprep.mubr.bf16.mxu0 %v1368
      %1940 = vmatmul.mubr.bf16.gmra.mxu0 %v1359
      %v1941 = vpop.f32.mrf.mxu0
      %v1942 = vadd.f32 0.0, %v1941
      %v1943 = vpop.f32.mrf.mxu0
      %v1944 = vpop.f32.mrf.mxu0
      %v1945 = vadd.f32 0.0, %v1944
      %v1946 = vpop.f32.mrf.mxu0
      %1947 = vmatprep.mubr.bf16.mxu0 %v1411
      %1948 = vmatmul.mubr.bf16.gmra.mxu0 %v1402
      %v1949 = vpop.f32.mrf.mxu0
      %v1950 = vadd.f32 0.0, %v1949
      %v1951 = vpop.f32.mrf.mxu0
      %v1952 = vpop.f32.mrf.mxu0
      %v1953 = vadd.f32 0.0, %v1952
      %v1954 = vpop.f32.mrf.mxu0
      %1955 = vmatprep.mubr.bf16.mxu0 %v1454
      %1956 = vmatmul.mubr.bf16.gmra.mxu0 %v1445
      %v1957 = vpop.f32.mrf.mxu0
      %v1958 = vadd.f32 0.0, %v1957
      %v1959 = vpop.f32.mrf.mxu0
      %v1960 = vpop.f32.mrf.mxu0
      %v1961 = vadd.f32 0.0, %v1960
      %v1962 = vpop.f32.mrf.mxu0
      %1963 = vmatprep.mubr.bf16.mxu0 %v1497
      %1964 = vmatmul.mubr.bf16.gmra.mxu0 %v1488
      %v1965 = vpop.f32.mrf.mxu0
      %v1966 = vadd.f32 0.0, %v1965
      %v1967 = vpop.f32.mrf.mxu0
      %v1968 = vpop.f32.mrf.mxu0
      %v1969 = vadd.f32 0.0, %v1968
      %v1970 = vpop.f32.mrf.mxu0
      %1971 = vmatprep.mubr.bf16.mxu0 %v1540
      %1972 = vmatmul.mubr.bf16.gmra.mxu0 %v1531
      %v1973 = vpop.f32.mrf.mxu0
      %v1974 = vadd.f32 0.0, %v1973
      %v1975 = vpop.f32.mrf.mxu0
      %v1976 = vpop.f32.mrf.mxu0
      %v1977 = vadd.f32 0.0, %v1976
      %v1978 = vpop.f32.mrf.mxu0
      %1979 = vmatprep.mubr.bf16.mxu0 %v1661
      %1980 = vmatmul.mubr.bf16.gmra.mxu0 %v1652
      %v1981 = vpop.f32.mrf.mxu0
      %v1982 = vadd.f32 0.0, %v1981
      %v1983 = vpop.f32.mrf.mxu0
      %v1984 = vpop.f32.mrf.mxu0
      %v1985 = vadd.f32 0.0, %v1984
      %v1986 = vpop.f32.mrf.mxu0
      %1987 = vdwg.mxu0
      %1988 = vmatprep.subr.bf16.mxu0 0
      %1989 = vmatpush1.bf16.msra.mxu0 %v1850
      %1990 = vmatprep.subr.bf16.mxu0 0
      %1991 = vmatpush1.bf16.msra.mxu0 %v1849
      %1992 = vmatprep.subr.bf16.mxu0 0
      %1993 = vmatpush1.bf16.msra.mxu0 %v1848
      %1994 = vmatprep.subr.bf16.mxu0 0
      %1995 = vmatpush1.bf16.msra.mxu0 %v1847
      %1996 = vmatprep.subr.bf16.mxu0 0
      %1997 = vmatpush1.bf16.msra.mxu0 %v1846
      %1998 = vmatprep.subr.bf16.mxu0 0
      %1999 = vmatpush1.bf16.msra.mxu0 %v1845
      %2000 = vmatprep.subr.bf16.mxu0 0
      %2001 = vmatpush1.bf16.msra.mxu0 %v1844
      %2002 = vmatprep.subr.bf16.mxu0 0
      %2003 = vmatpush1.bf16.msra.mxu0 %v1843
      %2004 = vmatprep.subr.bf16.mxu0 0
      %2005 = vmatpush2.bf16.msra.mxu0 0
      %2006 = vmatprep.subr.bf16.mxu0 0
      %2007 = vmatpush2.bf16.msra.mxu0 0
      %2008 = vmatprep.subr.bf16.mxu0 0
      %2009 = vmatpush2.bf16.msra.mxu0 0
      %2010 = vmatprep.subr.bf16.mxu0 0
      %2011 = vmatpush2.bf16.msra.mxu0 0
      %2012 = vmatprep.subr.bf16.mxu0 0
      %2013 = vmatpush2.bf16.msra.mxu0 0
      %2014 = vmatprep.subr.bf16.mxu0 0
      %2015 = vmatpush2.bf16.msra.mxu0 0
      %2016 = vmatprep.subr.bf16.mxu0 0
      %2017 = vmatpush2.bf16.msra.mxu0 0
      %2018 = vmatprep.subr.bf16.mxu0 0
      %2019 = vmatpush2.bf16.msra.mxu0 0
      %2020 = vmatprep.mubr.bf16.mxu0 0
      %2021 = vmatmul.mubr.bf16.gmra.mxu0 %v1213
      %v2022 = vpop.f32.mrf.mxu0
      %v2023 = vadd.f32 %v1910, %v2022
      %v2024 = vpop.f32.mrf.mxu0
      %v2025 = vpop.f32.mrf.mxu0
      %v2026 = vadd.f32 %v1913, %v2025
      %v2027 = vpop.f32.mrf.mxu0
      %2028 = vmatprep.mubr.bf16.mxu0 0
      %2029 = vmatmul.mubr.bf16.gmra.mxu0 %v1256
      %v2030 = vpop.f32.mrf.mxu0
      %v2031 = vadd.f32 %v1918, %v2030
      %v2032 = vpop.f32.mrf.mxu0
      %v2033 = vpop.f32.mrf.mxu0
      %v2034 = vadd.f32 %v1921, %v2033
      %v2035 = vpop.f32.mrf.mxu0
      %2036 = vmatprep.mubr.bf16.mxu0 0
      %2037 = vmatmul.mubr.bf16.gmra.mxu0 %v1299
      %v2038 = vpop.f32.mrf.mxu0
      %v2039 = vadd.f32 %v1926, %v2038
      %v2040 = vpop.f32.mrf.mxu0
      %v2041 = vpop.f32.mrf.mxu0
      %v2042 = vadd.f32 %v1929, %v2041
      %v2043 = vpop.f32.mrf.mxu0
      %2044 = vmatprep.mubr.bf16.mxu0 0
      %2045 = vmatmul.mubr.bf16.gmra.mxu0 %v1342
      %v2046 = vpop.f32.mrf.mxu0
      %v2047 = vadd.f32 %v1934, %v2046
      %v2048 = vpop.f32.mrf.mxu0
      %v2049 = vpop.f32.mrf.mxu0
      %v2050 = vadd.f32 %v1937, %v2049
      %v2051 = vpop.f32.mrf.mxu0
      %2052 = vmatprep.mubr.bf16.mxu0 0
      %2053 = vmatmul.mubr.bf16.gmra.mxu0 %v1385
      %v2054 = vpop.f32.mrf.mxu0
      %v2055 = vadd.f32 %v1942, %v2054
      %v2056 = vpop.f32.mrf.mxu0
      %v2057 = vpop.f32.mrf.mxu0
      %v2058 = vadd.f32 %v1945, %v2057
      %v2059 = vpop.f32.mrf.mxu0
      %2060 = vmatprep.mubr.bf16.mxu0 0
      %2061 = vmatmul.mubr.bf16.gmra.mxu0 %v1428
      %v2062 = vpop.f32.mrf.mxu0
      %v2063 = vadd.f32 %v1950, %v2062
      %v2064 = vpop.f32.mrf.mxu0
      %v2065 = vpop.f32.mrf.mxu0
      %v2066 = vadd.f32 %v1953, %v2065
      %v2067 = vpop.f32.mrf.mxu0
      %2068 = vmatprep.mubr.bf16.mxu0 0
      %2069 = vmatmul.mubr.bf16.gmra.mxu0 %v1471
      %v2070 = vpop.f32.mrf.mxu0
      %v2071 = vadd.f32 %v1958, %v2070
      %v2072 = vpop.f32.mrf.mxu0
      %v2073 = vpop.f32.mrf.mxu0
      %v2074 = vadd.f32 %v1961, %v2073
      %v2075 = vpop.f32.mrf.mxu0
      %2076 = vmatprep.mubr.bf16.mxu0 0
      %2077 = vmatmul.mubr.bf16.gmra.mxu0 %v1514
      %v2078 = vpop.f32.mrf.mxu0
      %v2079 = vadd.f32 %v1966, %v2078
      %v2080 = vpop.f32.mrf.mxu0
      %v2081 = vpop.f32.mrf.mxu0
      %v2082 = vadd.f32 %v1969, %v2081
      %v2083 = vpop.f32.mrf.mxu0
      %2084 = vmatprep.mubr.bf16.mxu0 0
      %2085 = vmatmul.mubr.bf16.gmra.mxu0 %v1557
      %v2086 = vpop.f32.mrf.mxu0
      %v2087 = vadd.f32 %v1974, %v2086
      %v2088 = vpop.f32.mrf.mxu0
      %v2089 = vpop.f32.mrf.mxu0
      %v2090 = vadd.f32 %v1977, %v2089
      %v2091 = vpop.f32.mrf.mxu0
      %2092 = vmatprep.mubr.bf16.mxu0 0
      %2093 = vmatmul.mubr.bf16.gmra.mxu0 %v1678
      %v2094 = vpop.f32.mrf.mxu0
      %v2095 = vadd.f32 %v1982, %v2094
      %v2096 = vpop.f32.mrf.mxu0
      %v2097 = vpop.f32.mrf.mxu0
      %v2098 = vadd.f32 %v1985, %v2097
      %v2099 = vpop.f32.mrf.mxu0
      %2100 = vdwg.mxu0
      %v2149 = vunpack.c.l.b16 %v1588
      %v2150 = vunpack.c.l.b16 %v1589
      %v2151 = vunpack.c.l.b16 %v1590
      %v2152 = vunpack.c.l.b16 %v1591
      %v2153 = vunpack.c.l.b16 %v1592
      %v2154 = vunpack.c.l.b16 %v1593
      %v2155 = vunpack.c.l.b16 %v1594
      %v2156 = vunpack.c.l.b16 %v1595
      %v2157 = vunpack.c.l.b16 %v1596
      %v2158 = vunpack.c.l.b16 %v1597
      %v2159 = vunpack.c.l.b16 %v1598
      %v2160 = vunpack.c.l.b16 %v1599
      %v2161 = vunpack.c.l.b16 %v1600
      %v2162 = vunpack.c.l.b16 %v1601
      %v2163 = vunpack.c.l.b16 %v1602
      %v2164 = vunpack.c.l.b16 %v1603
      %v2165 = vunpack.c.l.b16 %v1604
      %v2166 = vunpack.c.l.b16 %v1605
      %v2167 = vunpack.c.l.b16 %v1606
      %v2168 = vunpack.c.l.b16 %v1607
      %v2169 = vunpack.c.l.b16 %v1608
      %v2170 = vunpack.c.l.b16 %v1609
      %v2171 = vunpack.c.l.b16 %v1610
      %v2172 = vunpack.c.l.b16 %v1611
      %v2173 = vunpack.c.l.b16 %v1612
      %v2174 = vunpack.c.l.b16 %v1613
      %v2175 = vunpack.c.l.b16 %v1614
      %v2176 = vunpack.c.l.b16 %v1615
      %v2177 = vunpack.c.l.b16 %v1616
      %v2178 = vunpack.c.l.b16 %v1617
      %v2179 = vunpack.c.l.b16 %v1618
      %v2180 = vunpack.c.l.b16 %v1619
      %v2181 = vunpack.c.l.b16 %v1620
      %v2182 = vunpack.c.l.b16 %v1621
      %v2183 = vunpack.c.l.b16 %v1622
      %v2184 = vunpack.c.l.b16 %v1623
      %v2185 = vunpack.c.l.b16 %v1624
      %v2186 = vunpack.c.l.b16 %v1625
      %v2187 = vunpack.c.l.b16 %v1626
      %v2188 = vunpack.c.l.b16 %v1627
      %v2189 = vunpack.c.l.b16 %v1628
      %v2190 = vunpack.c.l.b16 %v1629
      %v2191 = vunpack.c.l.b16 %v1630
      %v2192 = vunpack.c.l.b16 %v1631
      %v2193 = vunpack.c.l.b16 %v1632
      %v2194 = vunpack.c.l.b16 %v1633
      %v2195 = vunpack.c.l.b16 %v1634
      %v2196 = vunpack.c.l.b16 %v1635
      %v2197 = vpack.c.b16 %v2150, %v2149
      %v2198 = vpack.c.b16 %v2152, %v2151
      %v2199 = vpack.c.b16 %v2154, %v2153
      %v2200 = vpack.c.b16 %v2156, %v2155
      %v2201 = vpack.c.b16 %v2158, %v2157
      %v2202 = vpack.c.b16 %v2160, %v2159
      %v2203 = vpack.c.b16 %v2162, %v2161
      %v2204 = vpack.c.b16 %v2164, %v2163
      %v2205 = vpack.c.b16 %v2166, %v2165
      %v2206 = vpack.c.b16 %v2168, %v2167
      %v2207 = vpack.c.b16 %v2170, %v2169
      %v2208 = vpack.c.b16 %v2172, %v2171
      %v2209 = vpack.c.b16 %v2174, %v2173
      %v2210 = vpack.c.b16 %v2176, %v2175
      %v2211 = vpack.c.b16 %v2178, %v2177
      %v2212 = vpack.c.b16 %v2180, %v2179
      %v2213 = vpack.c.b16 %v2182, %v2181
      %v2214 = vpack.c.b16 %v2184, %v2183
      %v2215 = vpack.c.b16 %v2186, %v2185
      %v2216 = vpack.c.b16 %v2188, %v2187
      %v2217 = vpack.c.b16 %v2190, %v2189
      %v2218 = vpack.c.b16 %v2192, %v2191
      %v2219 = vpack.c.b16 %v2194, %v2193
      %v2220 = vpack.c.b16 %v2196, %v2195
      %2245 = vmatprep.subr.bf16.mxu0 0
      %2246 = vmatpush1.bf16.msra.mxu0 %v2204
      %2247 = vmatprep.subr.bf16.mxu0 0
      %2248 = vmatpush1.bf16.msra.mxu0 %v2203
      %2249 = vmatprep.subr.bf16.mxu0 0
      %2250 = vmatpush1.bf16.msra.mxu0 %v2202
      %2251 = vmatprep.subr.bf16.mxu0 0
      %2252 = vmatpush1.bf16.msra.mxu0 %v2201
      %2253 = vmatprep.subr.bf16.mxu0 0
      %2254 = vmatpush1.bf16.msra.mxu0 %v2200
      %2255 = vmatprep.subr.bf16.mxu0 0
      %2256 = vmatpush1.bf16.msra.mxu0 %v2199
      %2257 = vmatprep.subr.bf16.mxu0 0
      %2258 = vmatpush1.bf16.msra.mxu0 %v2198
      %2259 = vmatprep.subr.bf16.mxu0 0
      %2260 = vmatpush1.bf16.msra.mxu0 %v2197
      %2261 = vmatprep.subr.bf16.mxu0 0
      %2262 = vmatpush2.bf16.msra.mxu0 %v2212
      %2263 = vmatprep.subr.bf16.mxu0 0
      %2264 = vmatpush2.bf16.msra.mxu0 %v2211
      %2265 = vmatprep.subr.bf16.mxu0 0
      %2266 = vmatpush2.bf16.msra.mxu0 %v2210
      %2267 = vmatprep.subr.bf16.mxu0 0
      %2268 = vmatpush2.bf16.msra.mxu0 %v2209
      %2269 = vmatprep.subr.bf16.mxu0 0
      %2270 = vmatpush2.bf16.msra.mxu0 %v2208
      %2271 = vmatprep.subr.bf16.mxu0 0
      %2272 = vmatpush2.bf16.msra.mxu0 %v2207
      %2273 = vmatprep.subr.bf16.mxu0 0
      %2274 = vmatpush2.bf16.msra.mxu0 %v2206
      %2275 = vmatprep.subr.bf16.mxu0 0
      %2276 = vmatpush2.bf16.msra.mxu0 %v2205
      %2277 = vmatprep.mubr.bf16.mxu0 %v1153
      %2278 = vmatmul.mubr.bf16.gmra.mxu0 %v1144
      %v2279 = vpop.f32.mrf.mxu0
      %v2280 = vadd.f32 %v2023, %v2279
      %v2281 = vpop.f32.mrf.mxu0
      %v2282 = vpop.f32.mrf.mxu0
      %v2283 = vadd.f32 %v2026, %v2282
      %v2284 = vpop.f32.mrf.mxu0
      %2285 = vmatprep.mubr.bf16.mxu0 %v1196
      %2286 = vmatmul.mubr.bf16.gmra.mxu0 %v1187
      %v2287 = vpop.f32.mrf.mxu0
      %v2288 = vadd.f32 %v2031, %v2287
      %v2289 = vpop.f32.mrf.mxu0
      %v2290 = vpop.f32.mrf.mxu0
      %v2291 = vadd.f32 %v2034, %v2290
      %v2292 = vpop.f32.mrf.mxu0
      %2293 = vmatprep.mubr.bf16.mxu0 %v1239
      %2294 = vmatmul.mubr.bf16.gmra.mxu0 %v1230
      %v2295 = vpop.f32.mrf.mxu0
      %v2296 = vadd.f32 %v2039, %v2295
      %v2297 = vpop.f32.mrf.mxu0
      %v2298 = vpop.f32.mrf.mxu0
      %v2299 = vadd.f32 %v2042, %v2298
      %v2300 = vpop.f32.mrf.mxu0
      %2301 = vmatprep.mubr.bf16.mxu0 %v1282
      %2302 = vmatmul.mubr.bf16.gmra.mxu0 %v1273
      %v2303 = vpop.f32.mrf.mxu0
      %v2304 = vadd.f32 %v2047, %v2303
      %v2305 = vpop.f32.mrf.mxu0
      %v2306 = vpop.f32.mrf.mxu0
      %v2307 = vadd.f32 %v2050, %v2306
      %v2308 = vpop.f32.mrf.mxu0
      %2309 = vmatprep.mubr.bf16.mxu0 %v1325
      %2310 = vmatmul.mubr.bf16.gmra.mxu0 %v1316
      %v2311 = vpop.f32.mrf.mxu0
      %v2312 = vadd.f32 %v2055, %v2311
      %v2313 = vpop.f32.mrf.mxu0
      %v2314 = vpop.f32.mrf.mxu0
      %v2315 = vadd.f32 %v2058, %v2314
      %v2316 = vpop.f32.mrf.mxu0
      %2317 = vmatprep.mubr.bf16.mxu0 %v1368
      %2318 = vmatmul.mubr.bf16.gmra.mxu0 %v1359
      %v2319 = vpop.f32.mrf.mxu0
      %v2320 = vadd.f32 %v2063, %v2319
      %v2321 = vpop.f32.mrf.mxu0
      %v2322 = vpop.f32.mrf.mxu0
      %v2323 = vadd.f32 %v2066, %v2322
      %v2324 = vpop.f32.mrf.mxu0
      %2325 = vmatprep.mubr.bf16.mxu0 %v1411
      %2326 = vmatmul.mubr.bf16.gmra.mxu0 %v1402
      %v2327 = vpop.f32.mrf.mxu0
      %v2328 = vadd.f32 %v2071, %v2327
      %v2329 = vpop.f32.mrf.mxu0
      %v2330 = vpop.f32.mrf.mxu0
      %v2331 = vadd.f32 %v2074, %v2330
      %v2332 = vpop.f32.mrf.mxu0
      %2333 = vmatprep.mubr.bf16.mxu0 %v1454
      %2334 = vmatmul.mubr.bf16.gmra.mxu0 %v1445
      %v2335 = vpop.f32.mrf.mxu0
      %v2336 = vadd.f32 %v2079, %v2335
      %v2337 = vpop.f32.mrf.mxu0
      %v2338 = vpop.f32.mrf.mxu0
      %v2339 = vadd.f32 %v2082, %v2338
      %v2340 = vpop.f32.mrf.mxu0
      %2341 = vmatprep.mubr.bf16.mxu0 %v1497
      %2342 = vmatmul.mubr.bf16.gmra.mxu0 %v1488
      %v2343 = vpop.f32.mrf.mxu0
      %v2344 = vadd.f32 %v2087, %v2343
      %v2345 = vpop.f32.mrf.mxu0
      %v2346 = vpop.f32.mrf.mxu0
      %v2347 = vadd.f32 %v2090, %v2346
      %v2348 = vpop.f32.mrf.mxu0
      %2349 = vmatprep.mubr.bf16.mxu0 %v1540
      %2350 = vmatmul.mubr.bf16.gmra.mxu0 %v1531
      %v2351 = vpop.f32.mrf.mxu0
      %v2352 = vadd.f32 %v2095, %v2351
      %v2353 = vpop.f32.mrf.mxu0
      %v2354 = vpop.f32.mrf.mxu0
      %v2355 = vadd.f32 %v2098, %v2354
      %v2356 = vpop.f32.mrf.mxu0
      %2357 = vdwg.mxu0
      %2358 = vmatprep.subr.bf16.mxu0 0
      %2359 = vmatpush1.bf16.msra.mxu0 %v2220
      %2360 = vmatprep.subr.bf16.mxu0 0
      %2361 = vmatpush1.bf16.msra.mxu0 %v2219
      %2362 = vmatprep.subr.bf16.mxu0 0
      %2363 = vmatpush1.bf16.msra.mxu0 %v2218
      %2364 = vmatprep.subr.bf16.mxu0 0
      %2365 = vmatpush1.bf16.msra.mxu0 %v2217
      %2366 = vmatprep.subr.bf16.mxu0 0
      %2367 = vmatpush1.bf16.msra.mxu0 %v2216
      %2368 = vmatprep.subr.bf16.mxu0 0
      %2369 = vmatpush1.bf16.msra.mxu0 %v2215
      %2370 = vmatprep.subr.bf16.mxu0 0
      %2371 = vmatpush1.bf16.msra.mxu0 %v2214
      %2372 = vmatprep.subr.bf16.mxu0 0
      %2373 = vmatpush1.bf16.msra.mxu0 %v2213
      %2374 = vmatprep.subr.bf16.mxu0 0
      %2375 = vmatpush2.bf16.msra.mxu0 0
      %2376 = vmatprep.subr.bf16.mxu0 0
      %2377 = vmatpush2.bf16.msra.mxu0 0
      %2378 = vmatprep.subr.bf16.mxu0 0
      %2379 = vmatpush2.bf16.msra.mxu0 0
      %2380 = vmatprep.subr.bf16.mxu0 0
      %2381 = vmatpush2.bf16.msra.mxu0 0
      %2382 = vmatprep.subr.bf16.mxu0 0
      %2383 = vmatpush2.bf16.msra.mxu0 0
      %2384 = vmatprep.subr.bf16.mxu0 0
      %2385 = vmatpush2.bf16.msra.mxu0 0
      %2386 = vmatprep.subr.bf16.mxu0 0
      %2387 = vmatpush2.bf16.msra.mxu0 0
      %2388 = vmatprep.subr.bf16.mxu0 0
      %2389 = vmatpush2.bf16.msra.mxu0 0
      %2390 = vmatprep.mubr.bf16.mxu0 0
      %2391 = vmatmul.mubr.bf16.gmra.mxu0 %v1170
      %v2392 = vpop.f32.mrf.mxu0
      %v2393 = vadd.f32 %v2280, %v2392
      %v2394 = vpop.f32.mrf.mxu0
      %v2395 = vpop.f32.mrf.mxu0
      %v2396 = vadd.f32 %v2283, %v2395
      %v2397 = vpop.f32.mrf.mxu0
      %2398 = vmatprep.mubr.bf16.mxu0 0
      %2399 = vmatmul.mubr.bf16.gmra.mxu0 %v1213
      %v2400 = vpop.f32.mrf.mxu0
      %v2401 = vadd.f32 %v2288, %v2400
      %v2402 = vpop.f32.mrf.mxu0
      %v2403 = vpop.f32.mrf.mxu0
      %v2404 = vadd.f32 %v2291, %v2403
      %v2405 = vpop.f32.mrf.mxu0
      %2406 = vmatprep.mubr.bf16.mxu0 0
      %2407 = vmatmul.mubr.bf16.gmra.mxu0 %v1256
      %v2408 = vpop.f32.mrf.mxu0
      %v2409 = vadd.f32 %v2296, %v2408
      %v2410 = vpop.f32.mrf.mxu0
      %v2411 = vpop.f32.mrf.mxu0
      %v2412 = vadd.f32 %v2299, %v2411
      %v2413 = vpop.f32.mrf.mxu0
      %2414 = vmatprep.mubr.bf16.mxu0 0
      %2415 = vmatmul.mubr.bf16.gmra.mxu0 %v1299
      %v2416 = vpop.f32.mrf.mxu0
      %v2417 = vadd.f32 %v2304, %v2416
      %v2418 = vpop.f32.mrf.mxu0
      %v2419 = vpop.f32.mrf.mxu0
      %v2420 = vadd.f32 %v2307, %v2419
      %v2421 = vpop.f32.mrf.mxu0
      %2422 = vmatprep.mubr.bf16.mxu0 0
      %2423 = vmatmul.mubr.bf16.gmra.mxu0 %v1342
      %v2424 = vpop.f32.mrf.mxu0
      %v2425 = vadd.f32 %v2312, %v2424
      %v2426 = vpop.f32.mrf.mxu0
      %v2427 = vpop.f32.mrf.mxu0
      %v2428 = vadd.f32 %v2315, %v2427
      %v2429 = vpop.f32.mrf.mxu0
      %2430 = vmatprep.mubr.bf16.mxu0 0
      %2431 = vmatmul.mubr.bf16.gmra.mxu0 %v1385
      %v2432 = vpop.f32.mrf.mxu0
      %v2433 = vadd.f32 %v2320, %v2432
      %v2434 = vpop.f32.mrf.mxu0
      %v2435 = vpop.f32.mrf.mxu0
      %v2436 = vadd.f32 %v2323, %v2435
      %v2437 = vpop.f32.mrf.mxu0
      %2438 = vmatprep.mubr.bf16.mxu0 0
      %2439 = vmatmul.mubr.bf16.gmra.mxu0 %v1428
      %v2440 = vpop.f32.mrf.mxu0
      %v2441 = vadd.f32 %v2328, %v2440
      %v2442 = vpop.f32.mrf.mxu0
      %v2443 = vpop.f32.mrf.mxu0
      %v2444 = vadd.f32 %v2331, %v2443
      %v2445 = vpop.f32.mrf.mxu0
      %2446 = vmatprep.mubr.bf16.mxu0 0
      %2447 = vmatmul.mubr.bf16.gmra.mxu0 %v1471
      %v2448 = vpop.f32.mrf.mxu0
      %v2449 = vadd.f32 %v2336, %v2448
      %v2450 = vpop.f32.mrf.mxu0
      %v2451 = vpop.f32.mrf.mxu0
      %v2452 = vadd.f32 %v2339, %v2451
      %v2453 = vpop.f32.mrf.mxu0
      %2454 = vmatprep.mubr.bf16.mxu0 0
      %2455 = vmatmul.mubr.bf16.gmra.mxu0 %v1514
      %v2456 = vpop.f32.mrf.mxu0
      %v2457 = vadd.f32 %v2344, %v2456
      %v2458 = vpop.f32.mrf.mxu0
      %v2459 = vpop.f32.mrf.mxu0
      %v2460 = vadd.f32 %v2347, %v2459
      %v2461 = vpop.f32.mrf.mxu0
      %2462 = vmatprep.mubr.bf16.mxu0 0
      %2463 = vmatmul.mubr.bf16.gmra.mxu0 %v1557
      %v2464 = vpop.f32.mrf.mxu0
      %v2465 = vadd.f32 %v2352, %v2464
      %v2466 = vpop.f32.mrf.mxu0
      %v2467 = vpop.f32.mrf.mxu0
      %v2468 = vadd.f32 %v2355, %v2467
      %v2469 = vpop.f32.mrf.mxu0
      %2470 = vdwg.mxu0
      %v2472 = vshrl.u32 %v884, 16
      %v2474 = vrot.slane %v2472, 3
      %v2475 = vshll.u32 %v884, 16
      %v2477 = vrot.slane %v2475, 4
      %v2478 = vor.u32 %v2474, %v2477
      %v2480 = vshrl.u32 %v885, 16
      %v2482 = vrot.slane %v2480, 3
      %v2483 = vshll.u32 %v885, 16
      %v2485 = vrot.slane %v2483, 4
      %v2486 = vor.u32 %v2482, %v2485
      %v2487 = vsel %vm1127, %v2478, %v2486
      %v2489 = vshrl.u32 %v993, 16
      %v2491 = vrot.slane %v2489, 3
      %v2492 = vshll.u32 %v993, 16
      %v2494 = vrot.slane %v2492, 4
      %v2495 = vor.u32 %v2491, %v2494
      %v2496 = vsel %vm1127, %v2495, %v2495
      %v2498 = vshrl.u32 %v1124, 16
      %v2500 = vrot.slane %v2498, 3
      %v2501 = vshll.u32 %v1124, 16
      %v2503 = vrot.slane %v2501, 4
      %v2504 = vor.u32 %v2500, %v2503
      %v2506 = vshrl.u32 %v1126, 16
      %v2508 = vrot.slane %v2506, 3
      %v2509 = vshll.u32 %v1126, 16
      %v2511 = vrot.slane %v2509, 4
      %v2512 = vor.u32 %v2508, %v2511
      %v2513 = vsel %vm1127, %v2504, %v2512
      %s2517 = scalar_lea.vmem %s3, 384
      %v2518 = vld [vmem:[%s2517] sm:$0xf]
      %v2519 = vld [vmem:[%s2517 + $0x4] sm:$0xf]
      %v2520 = vld [vmem:[%s2517 + $0x8] sm:$0xf]
      %v2521 = vld [vmem:[%s2517 + $0xc] sm:$0xf]
      %v2522 = vld [vmem:[%s2517 + $0x10] sm:$0xf]
      %v2523 = vld [vmem:[%s2517 + $0x14] sm:$0xf]
      %v2524 = vld [vmem:[%s2517 + $0x18] sm:$0xf]
      %v2525 = vld [vmem:[%s2517 + $0x1c] sm:$0xf]
      %v2526 = vld [vmem:[%s2517 + $0x20] sm:$0xf]
      %v2527 = vld [vmem:[%s2517 + $0x24] sm:$0xf]
      %v2528 = vld [vmem:[%s2517 + $0x28] sm:$0xf]
      %v2529 = vld [vmem:[%s2517 + $0x2c] sm:$0xf]
      %v2530 = vld [vmem:[%s2517 + $0x30] sm:$0xf]
      %v2531 = vld [vmem:[%s2517 + $0x34] sm:$0xf]
      %v2532 = vld [vmem:[%s2517 + $0x38] sm:$0xf]
      %v2533 = vld [vmem:[%s2517 + $0x3c] sm:$0xf]
      %v2534 = vld [vmem:[%s2517 + $0x40] sm:$0xf]
      %v2535 = vld [vmem:[%s2517 + $0x44] sm:$0xf]
      %v2536 = vld [vmem:[%s2517 + $0x48] sm:$0xf]
      %v2537 = vld [vmem:[%s2517 + $0x4c] sm:$0xf]
      %v2538 = vld [vmem:[%s2517 + $0x50] sm:$0xf]
      %v2539 = vld [vmem:[%s2517 + $0x54] sm:$0xf]
      %v2540 = vld [vmem:[%s2517 + $0x58] sm:$0xf]
      %v2541 = vld [vmem:[%s2517 + $0x5c] sm:$0xf]
      %v2542 = vld [vmem:[%s2517 + $0x60] sm:$0xf]
      %v2543 = vld [vmem:[%s2517 + $0x64] sm:$0xf]
      %v2544 = vld [vmem:[%s2517 + $0x68] sm:$0xf]
      %v2545 = vld [vmem:[%s2517 + $0x6c] sm:$0xf]
      %v2546 = vld [vmem:[%s2517 + $0x70] sm:$0xf]
      %v2547 = vld [vmem:[%s2517 + $0x74] sm:$0xf]
      %v2548 = vld [vmem:[%s2517 + $0x78] sm:$0xf]
      %v2549 = vld [vmem:[%s2517 + $0x7c] sm:$0xf]
      %v2550 = vld [vmem:[%s2517 + $0x80] sm:$0xf]
      %v2551 = vld [vmem:[%s2517 + $0x84] sm:$0xf]
      %v2552 = vld [vmem:[%s2517 + $0x88] sm:$0xf]
      %v2553 = vld [vmem:[%s2517 + $0x8c] sm:$0xf]
      %v2554 = vld [vmem:[%s2517 + $0x90] sm:$0xf]
      %v2555 = vld [vmem:[%s2517 + $0x94] sm:$0xf]
      %v2556 = vld [vmem:[%s2517 + $0x98] sm:$0xf]
      %v2557 = vld [vmem:[%s2517 + $0x9c] sm:$0xf]
      %v2558 = vld [vmem:[%s2517 + $0xa0] sm:$0xf]
      %v2559 = vld [vmem:[%s2517 + $0xa4] sm:$0xf]
      %v2560 = vld [vmem:[%s2517 + $0xa8] sm:$0xf]
      %v2561 = vld [vmem:[%s2517 + $0xac] sm:$0xf]
      %v2562 = vld [vmem:[%s2517 + $0xb0] sm:$0xf]
      %v2563 = vld [vmem:[%s2517 + $0xb4] sm:$0xf]
      %v2564 = vld [vmem:[%s2517 + $0xb8] sm:$0xf]
      %v2565 = vld [vmem:[%s2517 + $0xbc] sm:$0xf]
      %v2614 = vunpack.c.l.b16 %v2518
      %v2615 = vunpack.c.l.b16 %v2519
      %v2616 = vunpack.c.l.b16 %v2520
      %v2617 = vunpack.c.l.b16 %v2521
      %v2618 = vunpack.c.l.b16 %v2522
      %v2619 = vunpack.c.l.b16 %v2523
      %v2620 = vunpack.c.l.b16 %v2524
      %v2621 = vunpack.c.l.b16 %v2525
      %v2622 = vunpack.c.l.b16 %v2526
      %v2623 = vunpack.c.l.b16 %v2527
      %v2624 = vunpack.c.l.b16 %v2528
      %v2625 = vunpack.c.l.b16 %v2529
      %v2626 = vunpack.c.l.b16 %v2530
      %v2627 = vunpack.c.l.b16 %v2531
      %v2628 = vunpack.c.l.b16 %v2532
      %v2629 = vunpack.c.l.b16 %v2533
      %v2630 = vunpack.c.l.b16 %v2534
      %v2631 = vunpack.c.l.b16 %v2535
      %v2632 = vunpack.c.l.b16 %v2536
      %v2633 = vunpack.c.l.b16 %v2537
      %v2634 = vunpack.c.l.b16 %v2538
      %v2635 = vunpack.c.l.b16 %v2539
      %v2636 = vunpack.c.l.b16 %v2540
      %v2637 = vunpack.c.l.b16 %v2541
      %v2638 = vunpack.c.l.b16 %v2542
      %v2639 = vunpack.c.l.b16 %v2543
      %v2640 = vunpack.c.l.b16 %v2544
      %v2641 = vunpack.c.l.b16 %v2545
      %v2642 = vunpack.c.l.b16 %v2546
      %v2643 = vunpack.c.l.b16 %v2547
      %v2644 = vunpack.c.l.b16 %v2548
      %v2645 = vunpack.c.l.b16 %v2549
      %v2646 = vunpack.c.l.b16 %v2550
      %v2647 = vunpack.c.l.b16 %v2551
      %v2648 = vunpack.c.l.b16 %v2552
      %v2649 = vunpack.c.l.b16 %v2553
      %v2650 = vunpack.c.l.b16 %v2554
      %v2651 = vunpack.c.l.b16 %v2555
      %v2652 = vunpack.c.l.b16 %v2556
      %v2653 = vunpack.c.l.b16 %v2557
      %v2654 = vunpack.c.l.b16 %v2558
      %v2655 = vunpack.c.l.b16 %v2559
      %v2656 = vunpack.c.l.b16 %v2560
      %v2657 = vunpack.c.l.b16 %v2561
      %v2658 = vunpack.c.l.b16 %v2562
      %v2659 = vunpack.c.l.b16 %v2563
      %v2660 = vunpack.c.l.b16 %v2564
      %v2661 = vunpack.c.l.b16 %v2565
      %v2662 = vpack.c.b16 %v2615, %v2614
      %v2663 = vpack.c.b16 %v2617, %v2616
      %v2664 = vpack.c.b16 %v2619, %v2618
      %v2665 = vpack.c.b16 %v2621, %v2620
      %v2666 = vpack.c.b16 %v2623, %v2622
      %v2667 = vpack.c.b16 %v2625, %v2624
      %v2668 = vpack.c.b16 %v2627, %v2626
      %v2669 = vpack.c.b16 %v2629, %v2628
      %v2670 = vpack.c.b16 %v2631, %v2630
      %v2671 = vpack.c.b16 %v2633, %v2632
      %v2672 = vpack.c.b16 %v2635, %v2634
      %v2673 = vpack.c.b16 %v2637, %v2636
      %v2674 = vpack.c.b16 %v2639, %v2638
      %v2675 = vpack.c.b16 %v2641, %v2640
      %v2676 = vpack.c.b16 %v2643, %v2642
      %v2677 = vpack.c.b16 %v2645, %v2644
      %v2678 = vpack.c.b16 %v2647, %v2646
      %v2679 = vpack.c.b16 %v2649, %v2648
      %v2680 = vpack.c.b16 %v2651, %v2650
      %v2681 = vpack.c.b16 %v2653, %v2652
      %v2682 = vpack.c.b16 %v2655, %v2654
      %v2683 = vpack.c.b16 %v2657, %v2656
      %v2684 = vpack.c.b16 %v2659, %v2658
      %v2685 = vpack.c.b16 %v2661, %v2660
      %2710 = vmatprep.subr.bf16.mxu0 0
      %2711 = vmatpush1.bf16.msra.mxu0 %v2669
      %2712 = vmatprep.subr.bf16.mxu0 0
      %2713 = vmatpush1.bf16.msra.mxu0 %v2668
      %2714 = vmatprep.subr.bf16.mxu0 0
      %2715 = vmatpush1.bf16.msra.mxu0 %v2667
      %2716 = vmatprep.subr.bf16.mxu0 0
      %2717 = vmatpush1.bf16.msra.mxu0 %v2666
      %2718 = vmatprep.subr.bf16.mxu0 0
      %2719 = vmatpush1.bf16.msra.mxu0 %v2665
      %2720 = vmatprep.subr.bf16.mxu0 0
      %2721 = vmatpush1.bf16.msra.mxu0 %v2664
      %2722 = vmatprep.subr.bf16.mxu0 0
      %2723 = vmatpush1.bf16.msra.mxu0 %v2663
      %2724 = vmatprep.subr.bf16.mxu0 0
      %2725 = vmatpush1.bf16.msra.mxu0 %v2662
      %2726 = vmatprep.subr.bf16.mxu0 0
      %2727 = vmatpush2.bf16.msra.mxu0 %v2677
      %2728 = vmatprep.subr.bf16.mxu0 0
      %2729 = vmatpush2.bf16.msra.mxu0 %v2676
      %2730 = vmatprep.subr.bf16.mxu0 0
      %2731 = vmatpush2.bf16.msra.mxu0 %v2675
      %2732 = vmatprep.subr.bf16.mxu0 0
      %2733 = vmatpush2.bf16.msra.mxu0 %v2674
      %2734 = vmatprep.subr.bf16.mxu0 0
      %2735 = vmatpush2.bf16.msra.mxu0 %v2673
      %2736 = vmatprep.subr.bf16.mxu0 0
      %2737 = vmatpush2.bf16.msra.mxu0 %v2672
      %2738 = vmatprep.subr.bf16.mxu0 0
      %2739 = vmatpush2.bf16.msra.mxu0 %v2671
      %2740 = vmatprep.subr.bf16.mxu0 0
      %2741 = vmatpush2.bf16.msra.mxu0 %v2670
      %2742 = vmatprep.mubr.bf16.mxu0 %v1239
      %2743 = vmatmul.mubr.bf16.gmra.mxu0 %v1230
      %v2744 = vpop.f32.mrf.mxu0
      %v2745 = vadd.f32 0.0, %v2744
      %v2746 = vpop.f32.mrf.mxu0
      %v2747 = vpop.f32.mrf.mxu0
      %v2748 = vadd.f32 0.0, %v2747
      %v2749 = vpop.f32.mrf.mxu0
      %2750 = vmatprep.mubr.bf16.mxu0 %v1282
      %2751 = vmatmul.mubr.bf16.gmra.mxu0 %v1273
      %v2752 = vpop.f32.mrf.mxu0
      %v2753 = vadd.f32 0.0, %v2752
      %v2754 = vpop.f32.mrf.mxu0
      %v2755 = vpop.f32.mrf.mxu0
      %v2756 = vadd.f32 0.0, %v2755
      %v2757 = vpop.f32.mrf.mxu0
      %2758 = vmatprep.mubr.bf16.mxu0 %v1325
      %2759 = vmatmul.mubr.bf16.gmra.mxu0 %v1316
      %v2760 = vpop.f32.mrf.mxu0
      %v2761 = vadd.f32 0.0, %v2760
      %v2762 = vpop.f32.mrf.mxu0
      %v2763 = vpop.f32.mrf.mxu0
      %v2764 = vadd.f32 0.0, %v2763
      %v2765 = vpop.f32.mrf.mxu0
      %2766 = vmatprep.mubr.bf16.mxu0 %v1368
      %2767 = vmatmul.mubr.bf16.gmra.mxu0 %v1359
      %v2768 = vpop.f32.mrf.mxu0
      %v2769 = vadd.f32 0.0, %v2768
      %v2770 = vpop.f32.mrf.mxu0
      %v2771 = vpop.f32.mrf.mxu0
      %v2772 = vadd.f32 0.0, %v2771
      %v2773 = vpop.f32.mrf.mxu0
      %2774 = vmatprep.mubr.bf16.mxu0 %v1411
      %2775 = vmatmul.mubr.bf16.gmra.mxu0 %v1402
      %v2776 = vpop.f32.mrf.mxu0
      %v2777 = vadd.f32 0.0, %v2776
      %v2778 = vpop.f32.mrf.mxu0
      %v2779 = vpop.f32.mrf.mxu0
      %v2780 = vadd.f32 0.0, %v2779
      %v2781 = vpop.f32.mrf.mxu0
      %2782 = vmatprep.mubr.bf16.mxu0 %v1454
      %2783 = vmatmul.mubr.bf16.gmra.mxu0 %v1445
      %v2784 = vpop.f32.mrf.mxu0
      %v2785 = vadd.f32 0.0, %v2784
      %v2786 = vpop.f32.mrf.mxu0
      %v2787 = vpop.f32.mrf.mxu0
      %v2788 = vadd.f32 0.0, %v2787
      %v2789 = vpop.f32.mrf.mxu0
      %2790 = vmatprep.mubr.bf16.mxu0 %v1497
      %2791 = vmatmul.mubr.bf16.gmra.mxu0 %v1488
      %v2792 = vpop.f32.mrf.mxu0
      %v2793 = vadd.f32 0.0, %v2792
      %v2794 = vpop.f32.mrf.mxu0
      %v2795 = vpop.f32.mrf.mxu0
      %v2796 = vadd.f32 0.0, %v2795
      %v2797 = vpop.f32.mrf.mxu0
      %2798 = vmatprep.mubr.bf16.mxu0 %v1540
      %2799 = vmatmul.mubr.bf16.gmra.mxu0 %v1531
      %v2800 = vpop.f32.mrf.mxu0
      %v2801 = vadd.f32 0.0, %v2800
      %v2802 = vpop.f32.mrf.mxu0
      %v2803 = vpop.f32.mrf.mxu0
      %v2804 = vadd.f32 0.0, %v2803
      %v2805 = vpop.f32.mrf.mxu0
      %2806 = vmatprep.mubr.bf16.mxu0 %v1661
      %2807 = vmatmul.mubr.bf16.gmra.mxu0 %v1652
      %v2808 = vpop.f32.mrf.mxu0
      %v2809 = vadd.f32 0.0, %v2808
      %v2810 = vpop.f32.mrf.mxu0
      %v2811 = vpop.f32.mrf.mxu0
      %v2812 = vadd.f32 0.0, %v2811
      %v2813 = vpop.f32.mrf.mxu0
      %2814 = vmatprep.mubr.bf16.mxu0 %v2496
      %2815 = vmatmul.mubr.bf16.gmra.mxu0 %v2487
      %v2816 = vpop.f32.mrf.mxu0
      %v2817 = vadd.f32 0.0, %v2816
      %v2818 = vpop.f32.mrf.mxu0
      %v2819 = vpop.f32.mrf.mxu0
      %v2820 = vadd.f32 0.0, %v2819
      %v2821 = vpop.f32.mrf.mxu0
      %2822 = vdwg.mxu0
      %2823 = vmatprep.subr.bf16.mxu0 0
      %2824 = vmatpush1.bf16.msra.mxu0 %v2685
      %2825 = vmatprep.subr.bf16.mxu0 0
      %2826 = vmatpush1.bf16.msra.mxu0 %v2684
      %2827 = vmatprep.subr.bf16.mxu0 0
      %2828 = vmatpush1.bf16.msra.mxu0 %v2683
      %2829 = vmatprep.subr.bf16.mxu0 0
      %2830 = vmatpush1.bf16.msra.mxu0 %v2682
      %2831 = vmatprep.subr.bf16.mxu0 0
      %2832 = vmatpush1.bf16.msra.mxu0 %v2681
      %2833 = vmatprep.subr.bf16.mxu0 0
      %2834 = vmatpush1.bf16.msra.mxu0 %v2680
      %2835 = vmatprep.subr.bf16.mxu0 0
      %2836 = vmatpush1.bf16.msra.mxu0 %v2679
      %2837 = vmatprep.subr.bf16.mxu0 0
      %2838 = vmatpush1.bf16.msra.mxu0 %v2678
      %2839 = vmatprep.subr.bf16.mxu0 0
      %2840 = vmatpush2.bf16.msra.mxu0 0
      %2841 = vmatprep.subr.bf16.mxu0 0
      %2842 = vmatpush2.bf16.msra.mxu0 0
      %2843 = vmatprep.subr.bf16.mxu0 0
      %2844 = vmatpush2.bf16.msra.mxu0 0
      %2845 = vmatprep.subr.bf16.mxu0 0
      %2846 = vmatpush2.bf16.msra.mxu0 0
      %2847 = vmatprep.subr.bf16.mxu0 0
      %2848 = vmatpush2.bf16.msra.mxu0 0
      %2849 = vmatprep.subr.bf16.mxu0 0
      %2850 = vmatpush2.bf16.msra.mxu0 0
      %2851 = vmatprep.subr.bf16.mxu0 0
      %2852 = vmatpush2.bf16.msra.mxu0 0
      %2853 = vmatprep.subr.bf16.mxu0 0
      %2854 = vmatpush2.bf16.msra.mxu0 0
      %2855 = vmatprep.mubr.bf16.mxu0 0
      %2856 = vmatmul.mubr.bf16.gmra.mxu0 %v1256
      %v2857 = vpop.f32.mrf.mxu0
      %v2858 = vadd.f32 %v2745, %v2857
      %v2859 = vpop.f32.mrf.mxu0
      %v2860 = vpop.f32.mrf.mxu0
      %v2861 = vadd.f32 %v2748, %v2860
      %v2862 = vpop.f32.mrf.mxu0
      %2863 = vmatprep.mubr.bf16.mxu0 0
      %2864 = vmatmul.mubr.bf16.gmra.mxu0 %v1299
      %v2865 = vpop.f32.mrf.mxu0
      %v2866 = vadd.f32 %v2753, %v2865
      %v2867 = vpop.f32.mrf.mxu0
      %v2868 = vpop.f32.mrf.mxu0
      %v2869 = vadd.f32 %v2756, %v2868
      %v2870 = vpop.f32.mrf.mxu0
      %2871 = vmatprep.mubr.bf16.mxu0 0
      %2872 = vmatmul.mubr.bf16.gmra.mxu0 %v1342
      %v2873 = vpop.f32.mrf.mxu0
      %v2874 = vadd.f32 %v2761, %v2873
      %v2875 = vpop.f32.mrf.mxu0
      %v2876 = vpop.f32.mrf.mxu0
      %v2877 = vadd.f32 %v2764, %v2876
      %v2878 = vpop.f32.mrf.mxu0
      %2879 = vmatprep.mubr.bf16.mxu0 0
      %2880 = vmatmul.mubr.bf16.gmra.mxu0 %v1385
      %v2881 = vpop.f32.mrf.mxu0
      %v2882 = vadd.f32 %v2769, %v2881
      %v2883 = vpop.f32.mrf.mxu0
      %v2884 = vpop.f32.mrf.mxu0
      %v2885 = vadd.f32 %v2772, %v2884
      %v2886 = vpop.f32.mrf.mxu0
      %2887 = vmatprep.mubr.bf16.mxu0 0
      %2888 = vmatmul.mubr.bf16.gmra.mxu0 %v1428
      %v2889 = vpop.f32.mrf.mxu0
      %v2890 = vadd.f32 %v2777, %v2889
      %v2891 = vpop.f32.mrf.mxu0
      %v2892 = vpop.f32.mrf.mxu0
      %v2893 = vadd.f32 %v2780, %v2892
      %v2894 = vpop.f32.mrf.mxu0
      %2895 = vmatprep.mubr.bf16.mxu0 0
      %2896 = vmatmul.mubr.bf16.gmra.mxu0 %v1471
      %v2897 = vpop.f32.mrf.mxu0
      %v2898 = vadd.f32 %v2785, %v2897
      %v2899 = vpop.f32.mrf.mxu0
      %v2900 = vpop.f32.mrf.mxu0
      %v2901 = vadd.f32 %v2788, %v2900
      %v2902 = vpop.f32.mrf.mxu0
      %2903 = vmatprep.mubr.bf16.mxu0 0
      %2904 = vmatmul.mubr.bf16.gmra.mxu0 %v1514
      %v2905 = vpop.f32.mrf.mxu0
      %v2906 = vadd.f32 %v2793, %v2905
      %v2907 = vpop.f32.mrf.mxu0
      %v2908 = vpop.f32.mrf.mxu0
      %v2909 = vadd.f32 %v2796, %v2908
      %v2910 = vpop.f32.mrf.mxu0
      %2911 = vmatprep.mubr.bf16.mxu0 0
      %2912 = vmatmul.mubr.bf16.gmra.mxu0 %v1557
      %v2913 = vpop.f32.mrf.mxu0
      %v2914 = vadd.f32 %v2801, %v2913
      %v2915 = vpop.f32.mrf.mxu0
      %v2916 = vpop.f32.mrf.mxu0
      %v2917 = vadd.f32 %v2804, %v2916
      %v2918 = vpop.f32.mrf.mxu0
      %2919 = vmatprep.mubr.bf16.mxu0 0
      %2920 = vmatmul.mubr.bf16.gmra.mxu0 %v1678
      %v2921 = vpop.f32.mrf.mxu0
      %v2922 = vadd.f32 %v2809, %v2921
      %v2923 = vpop.f32.mrf.mxu0
      %v2924 = vpop.f32.mrf.mxu0
      %v2925 = vadd.f32 %v2812, %v2924
      %v2926 = vpop.f32.mrf.mxu0
      %2927 = vmatprep.mubr.bf16.mxu0 0
      %2928 = vmatmul.mubr.bf16.gmra.mxu0 %v2513
      %v2929 = vpop.f32.mrf.mxu0
      %v2930 = vadd.f32 %v2817, %v2929
      %v2931 = vpop.f32.mrf.mxu0
      %v2932 = vpop.f32.mrf.mxu0
      %v2933 = vadd.f32 %v2820, %v2932
      %v2934 = vpop.f32.mrf.mxu0
      %2935 = vdwg.mxu0
      %v2936 = vadd.f32 %v2393, %v2858
      %v2937 = vadd.f32 %v2396, %v2861
      %v2938 = vadd.f32 %v2401, %v2866
      %v2939 = vadd.f32 %v2404, %v2869
      %v2940 = vadd.f32 %v2409, %v2874
      %v2941 = vadd.f32 %v2412, %v2877
      %v2942 = vadd.f32 %v2417, %v2882
      %v2943 = vadd.f32 %v2420, %v2885
      %v2944 = vadd.f32 %v2425, %v2890
      %v2945 = vadd.f32 %v2428, %v2893
      %v2946 = vadd.f32 %v2433, %v2898
      %v2947 = vadd.f32 %v2436, %v2901
      %v2948 = vadd.f32 %v2441, %v2906
      %v2949 = vadd.f32 %v2444, %v2909
      %v2950 = vadd.f32 %v2449, %v2914
      %v2951 = vadd.f32 %v2452, %v2917
      %v2952 = vadd.f32 %v2457, %v2922
      %v2953 = vadd.f32 %v2460, %v2925
      %v2954 = vadd.f32 %v2465, %v2930
      %v2955 = vadd.f32 %v2468, %v2933
      %v2956 = vld [vmem:[%s4] sm:$0x1]
      %v2958 = vlaneseq
      %v2959 = vshrl.u32 %v2958, 7
      %v2960 = vsub.s32 0, %v2959
      %v2961 = vrot.slane %v2956, %v2960
      %v2963 = vmul.f32 %v2936, %v2961
      %v2964 = vmul.f32 %v2937, %v2961
      %v2965 = vmul.f32 %v2938, %v2961
      %v2966 = vmul.f32 %v2939, %v2961
      %v2967 = vmul.f32 %v2940, %v2961
      %v2968 = vmul.f32 %v2941, %v2961
      %v2969 = vmul.f32 %v2942, %v2961
      %v2970 = vmul.f32 %v2943, %v2961
      %v2971 = vmul.f32 %v2944, %v2961
      %v2972 = vmul.f32 %v2945, %v2961
      %v2973 = vmul.f32 %v2946, %v2961
      %v2974 = vmul.f32 %v2947, %v2961
      %v2975 = vmul.f32 %v2948, %v2961
      %v2976 = vmul.f32 %v2949, %v2961
      %v2977 = vmul.f32 %v2950, %v2961
      %v2978 = vmul.f32 %v2951, %v2961
      %v2979 = vmul.f32 %v2952, %v2961
      %v2980 = vmul.f32 %v2953, %v2961
      %v2981 = vmul.f32 %v2954, %v2961
      %v2982 = vmul.f32 %v2955, %v2961
      %v2983 = vld [vmem:[%s5] sm:$0x1]
      %v2985 = vlaneseq
      %v2986 = vshrl.u32 %v2985, 7
      %v2987 = vsub.s32 0, %v2986
      %v2988 = vrot.slane %v2983, %v2987
      %v2990 = vadd.f32 %v2963, %v2988
      %v2991 = vadd.f32 %v2964, %v2988
      %v2992 = vadd.f32 %v2965, %v2988
      %v2993 = vadd.f32 %v2966, %v2988
      %v2994 = vadd.f32 %v2967, %v2988
      %v2995 = vadd.f32 %v2968, %v2988
      %v2996 = vadd.f32 %v2969, %v2988
      %v2997 = vadd.f32 %v2970, %v2988
      %v2998 = vadd.f32 %v2971, %v2988
      %v2999 = vadd.f32 %v2972, %v2988
      %v3000 = vadd.f32 %v2973, %v2988
      %v3001 = vadd.f32 %v2974, %v2988
      %v3002 = vadd.f32 %v2975, %v2988
      %v3003 = vadd.f32 %v2976, %v2988
      %v3004 = vadd.f32 %v2977, %v2988
      %v3005 = vadd.f32 %v2978, %v2988
      %v3006 = vadd.f32 %v2979, %v2988
      %v3007 = vadd.f32 %v2980, %v2988
      %v3008 = vadd.f32 %v2981, %v2988
      %v3009 = vadd.f32 %v2982, %v2988
      %v3010 = vmax.f32 %v2990, 0.0
      %v3011 = vmax.f32 %v2991, 0.0
      %v3012 = vmax.f32 %v2992, 0.0
      %v3013 = vmax.f32 %v2993, 0.0
      %v3014 = vmax.f32 %v2994, 0.0
      %v3015 = vmax.f32 %v2995, 0.0
      %v3016 = vmax.f32 %v2996, 0.0
      %v3017 = vmax.f32 %v2997, 0.0
      %v3018 = vmax.f32 %v2998, 0.0
      %v3019 = vmax.f32 %v2999, 0.0
      %v3020 = vmax.f32 %v3000, 0.0
      %v3021 = vmax.f32 %v3001, 0.0
      %v3022 = vmax.f32 %v3002, 0.0
      %v3023 = vmax.f32 %v3003, 0.0
      %v3024 = vmax.f32 %v3004, 0.0
      %v3025 = vmax.f32 %v3005, 0.0
      %v3026 = vmax.f32 %v3006, 0.0
      %v3027 = vmax.f32 %v3007, 0.0
      %v3028 = vmax.f32 %v3008, 0.0
      %v3029 = vmax.f32 %v3009, 0.0
      %v3030 = vpack.c.bf16 %v3011, %v3010
      %v3031 = vpack.c.bf16 %v3013, %v3012
      %v3032 = vpack.c.bf16 %v3015, %v3014
      %v3033 = vpack.c.bf16 %v3017, %v3016
      %v3034 = vpack.c.bf16 %v3019, %v3018
      %v3035 = vpack.c.bf16 %v3021, %v3020
      %v3036 = vpack.c.bf16 %v3023, %v3022
      %v3037 = vpack.c.bf16 %v3025, %v3024
      %v3038 = vpack.c.bf16 %v3027, %v3026
      %v3039 = vpack.c.bf16 %v3029, %v3028
      %v3050 = vunpack.c.l.b16 %v3030
      %v3051 = vunpack.c.h.b16 %v3030
      %v3052 = vunpack.c.l.b16 %v3031
      %v3053 = vunpack.c.h.b16 %v3031
      %v3054 = vunpack.c.l.b16 %v3032
      %v3055 = vunpack.c.h.b16 %v3032
      %v3056 = vunpack.c.l.b16 %v3033
      %v3057 = vunpack.c.h.b16 %v3033
      %v3058 = vunpack.c.l.b16 %v3034
      %v3059 = vunpack.c.h.b16 %v3034
      %v3060 = vunpack.c.l.b16 %v3035
      %v3061 = vunpack.c.h.b16 %v3035
      %v3062 = vunpack.c.l.b16 %v3036
      %v3063 = vunpack.c.h.b16 %v3036
      %v3064 = vunpack.c.l.b16 %v3037
      %v3065 = vunpack.c.h.b16 %v3037
      %v3066 = vunpack.c.l.b16 %v3038
      %v3067 = vunpack.c.h.b16 %v3038
      %v3068 = vunpack.c.l.b16 %v3039
      %v3069 = vunpack.c.h.b16 %v3039
      %v3070 = vpack.c.b16 %v3050, %v3050
      %v3071 = vpack.c.b16 %v3051, %v3051
      %v3072 = vpack.c.b16 %v3052, %v3052
      %v3073 = vpack.c.b16 %v3053, %v3053
      %v3074 = vpack.c.b16 %v3054, %v3054
      %v3075 = vpack.c.b16 %v3055, %v3055
      %v3076 = vpack.c.b16 %v3056, %v3056
      %v3077 = vpack.c.b16 %v3057, %v3057
      %v3078 = vpack.c.b16 %v3058, %v3058
      %v3079 = vpack.c.b16 %v3059, %v3059
      %v3080 = vpack.c.b16 %v3060, %v3060
      %v3081 = vpack.c.b16 %v3061, %v3061
      %v3082 = vpack.c.b16 %v3062, %v3062
      %v3083 = vpack.c.b16 %v3063, %v3063
      %v3084 = vpack.c.b16 %v3064, %v3064
      %v3085 = vpack.c.b16 %v3065, %v3065
      %v3086 = vpack.c.b16 %v3066, %v3066
      %v3087 = vpack.c.b16 %v3067, %v3067
      %v3088 = vpack.c.b16 %v3068, %v3068
      %v3089 = vpack.c.b16 %v3069, %v3069
      %3110 = vst [vmem:[#allocation3 + $0x4] sm:$0xf] %v3070
      %3111 = vst [vmem:[#allocation3 + $0x8] sm:$0xf] %v3071
      %3112 = vst [vmem:[#allocation3 + $0x14] sm:$0xf] %v3072
      %3113 = vst [vmem:[#allocation3 + $0x18] sm:$0xf] %v3073
      %3114 = vst [vmem:[#allocation3 + $0x24] sm:$0xf] %v3074
      %3115 = vst [vmem:[#allocation3 + $0x28] sm:$0xf] %v3075
      %3116 = vst [vmem:[#allocation3 + $0x34] sm:$0xf] %v3076
      %3117 = vst [vmem:[#allocation3 + $0x38] sm:$0xf] %v3077
      %3118 = vst [vmem:[#allocation3 + $0x44] sm:$0xf] %v3078
      %3119 = vst [vmem:[#allocation3 + $0x48] sm:$0xf] %v3079
      %3120 = vst [vmem:[#allocation3 + $0x54] sm:$0xf] %v3080
      %3121 = vst [vmem:[#allocation3 + $0x58] sm:$0xf] %v3081
      %3122 = vst [vmem:[#allocation3 + $0x64] sm:$0xf] %v3082
      %3123 = vst [vmem:[#allocation3 + $0x68] sm:$0xf] %v3083
      %3124 = vst [vmem:[#allocation3 + $0x74] sm:$0xf] %v3084
      %3125 = vst [vmem:[#allocation3 + $0x78] sm:$0xf] %v3085
      %3126 = vst [vmem:[#allocation3 + $0x84] sm:$0xf] %v3086
      %3127 = vst [vmem:[#allocation3 + $0x88] sm:$0xf] %v3087
      %3128 = vst [vmem:[#allocation3 + $0x94] sm:$0xf] %v3088
      %3129 = vst [vmem:[#allocation3 + $0x98] sm:$0xf] %v3089
      %p3130 = scmp.eq.s32.totalorder %s25, 0
      // Predicated region
      $region57: #{basic_block_forward.1} parent=55 // pred_check
        %p3131 = pneg %p3130
      $region58: #{basic_block_forward.1} parent=55 // pred_check_branch
        %3133 = sbr.rel (%p3131) target = $region60
      $region59: #{basic_block_forward.1} parent=55 // pred_region
        %3134 = vst [vmem:[#allocation3] sm:$0xf] 0
        %3135 = vst [vmem:[#allocation3 + $0x4] sm:$0xf] 0
        %3136 = vst [vmem:[#allocation3 + $0x8] sm:$0xf] 0
        %3137 = vst [vmem:[#allocation3 + $0xc] sm:$0xf] 0
      $region60: #{basic_block_forward.1} parent=55 // pred_fallthru
        _
      %p3138 = scmp.eq.s32.totalorder %s25, 1
      // Predicated region
      $region61: #{basic_block_forward.1} parent=55 // pred_check
        %p3139 = pneg %p3138
      $region62: #{basic_block_forward.1} parent=55 // pred_check_branch
        %3141 = sbr.rel (%p3139) target = $region64
      $region63: #{basic_block_forward.1} parent=55 // pred_region
        %s3142 = scalar_lea.vmem [#allocation3], 144
        %3143 = vst [vmem:[%s3142] sm:$0xf] 0
        %3144 = vst [vmem:[%s3142 + $0x4] sm:$0xf] 0
        %3145 = vst [vmem:[%s3142 + $0x8] sm:$0xf] 0
        %3146 = vst [vmem:[%s3142 + $0xc] sm:$0xf] 0
      $region64: #{basic_block_forward.1} parent=55 // pred_fallthru
        _
      %v3147 = vld [vmem:[#allocation3] sm:$0x8]
      %v3148 = vld [vmem:[#allocation3 + $0x4] sm:$0xf]
      %v3149 = vld [vmem:[#allocation3 + $0x8] sm:$0xf]
      %v3150 = vld [vmem:[#allocation3 + $0x10] sm:$0x8]
      %v3151 = vld [vmem:[#allocation3 + $0x14] sm:$0xf]
      %v3152 = vld [vmem:[#allocation3 + $0x18] sm:$0xf]
      %v3153 = vld [vmem:[#allocation3 + $0x20] sm:$0x8]
      %v3154 = vld [vmem:[#allocation3 + $0x24] sm:$0xf]
      %v3155 = vld [vmem:[#allocation3 + $0x28] sm:$0xf]
      %v3156 = vld [vmem:[#allocation3 + $0x30] sm:$0x8]
      %v3157 = vld [vmem:[#allocation3 + $0x34] sm:$0xf]
      %v3158 = vld [vmem:[#allocation3 + $0x38] sm:$0xf]
      %v3159 = vld [vmem:[#allocation3 + $0x40] sm:$0x8]
      %v3160 = vld [vmem:[#allocation3 + $0x44] sm:$0xf]
      %v3161 = vld [vmem:[#allocation3 + $0x48] sm:$0xf]
      %v3162 = vld [vmem:[#allocation3 + $0x50] sm:$0x8]
      %v3163 = vld [vmem:[#allocation3 + $0x54] sm:$0xf]
      %v3164 = vld [vmem:[#allocation3 + $0x58] sm:$0xf]
      %v3165 = vld [vmem:[#allocation3 + $0x60] sm:$0x8]
      %v3166 = vld [vmem:[#allocation3 + $0x64] sm:$0xf]
      %v3167 = vld [vmem:[#allocation3 + $0x68] sm:$0xf]
      %v3168 = vld [vmem:[#allocation3 + $0x70] sm:$0x8]
      %v3169 = vld [vmem:[#allocation3 + $0x74] sm:$0xf]
      %v3170 = vld [vmem:[#allocation3 + $0x78] sm:$0xf]
      %v3171 = vld [vmem:[#allocation3 + $0x80] sm:$0x8]
      %v3172 = vld [vmem:[#allocation3 + $0x84] sm:$0xf]
      %v3173 = vld [vmem:[#allocation3 + $0x88] sm:$0xf]
      %v3174 = vld [vmem:[#allocation3 + $0x90] sm:$0x8]
      %v3175 = vld [vmem:[#allocation3 + $0x94] sm:$0xf]
      %v3176 = vld [vmem:[#allocation3 + $0x98] sm:$0xf]
      %v3177 = vld [vmem:[#allocation3 + $0x4] sm:$0xf]
      %v3178 = vld [vmem:[#allocation3 + $0x8] sm:$0xf]
      %v3179 = vld [vmem:[#allocation3 + $0xc] sm:$0x1]
      %v3180 = vld [vmem:[#allocation3 + $0x14] sm:$0xf]
      %v3181 = vld [vmem:[#allocation3 + $0x18] sm:$0xf]
      %v3182 = vld [vmem:[#allocation3 + $0x1c] sm:$0x1]
      %v3183 = vld [vmem:[#allocation3 + $0x24] sm:$0xf]
      %v3184 = vld [vmem:[#allocation3 + $0x28] sm:$0xf]
      %v3185 = vld [vmem:[#allocation3 + $0x2c] sm:$0x1]
      %v3186 = vld [vmem:[#allocation3 + $0x34] sm:$0xf]
      %v3187 = vld [vmem:[#allocation3 + $0x38] sm:$0xf]
      %v3188 = vld [vmem:[#allocation3 + $0x3c] sm:$0x1]
      %v3189 = vld [vmem:[#allocation3 + $0x44] sm:$0xf]
      %v3190 = vld [vmem:[#allocation3 + $0x48] sm:$0xf]
      %v3191 = vld [vmem:[#allocation3 + $0x4c] sm:$0x1]
      %v3192 = vld [vmem:[#allocation3 + $0x54] sm:$0xf]
      %v3193 = vld [vmem:[#allocation3 + $0x58] sm:$0xf]
      %v3194 = vld [vmem:[#allocation3 + $0x5c] sm:$0x1]
      %v3195 = vld [vmem:[#allocation3 + $0x64] sm:$0xf]
      %v3196 = vld [vmem:[#allocation3 + $0x68] sm:$0xf]
      %v3197 = vld [vmem:[#allocation3 + $0x6c] sm:$0x1]
      %v3198 = vld [vmem:[#allocation3 + $0x74] sm:$0xf]
      %v3199 = vld [vmem:[#allocation3 + $0x78] sm:$0xf]
      %v3200 = vld [vmem:[#allocation3 + $0x7c] sm:$0x1]
      %v3201 = vld [vmem:[#allocation3 + $0x84] sm:$0xf]
      %v3202 = vld [vmem:[#allocation3 + $0x88] sm:$0xf]
      %v3203 = vld [vmem:[#allocation3 + $0x8c] sm:$0x1]
      %v3204 = vld [vmem:[#allocation3 + $0x94] sm:$0xf]
      %v3205 = vld [vmem:[#allocation3 + $0x98] sm:$0xf]
      %v3206 = vld [vmem:[#allocation3 + $0x9c] sm:$0x1]
      %v3237 = vunpack.c.l.b16 %v3147
      %v3238 = vunpack.c.l.b16 %v3148
      %v3239 = vunpack.c.l.b16 %v3149
      %v3240 = vunpack.c.l.b16 %v3150
      %v3241 = vunpack.c.l.b16 %v3151
      %v3242 = vunpack.c.l.b16 %v3152
      %v3243 = vunpack.c.l.b16 %v3153
      %v3244 = vunpack.c.l.b16 %v3154
      %v3245 = vunpack.c.l.b16 %v3155
      %v3246 = vunpack.c.l.b16 %v3156
      %v3247 = vunpack.c.l.b16 %v3157
      %v3248 = vunpack.c.l.b16 %v3158
      %v3249 = vunpack.c.l.b16 %v3159
      %v3250 = vunpack.c.l.b16 %v3160
      %v3251 = vunpack.c.l.b16 %v3161
      %v3252 = vunpack.c.l.b16 %v3162
      %v3253 = vunpack.c.l.b16 %v3163
      %v3254 = vunpack.c.l.b16 %v3164
      %v3255 = vunpack.c.l.b16 %v3165
      %v3256 = vunpack.c.l.b16 %v3166
      %v3257 = vunpack.c.l.b16 %v3167
      %v3258 = vunpack.c.l.b16 %v3168
      %v3259 = vunpack.c.l.b16 %v3169
      %v3260 = vunpack.c.l.b16 %v3170
      %v3261 = vunpack.c.l.b16 %v3171
      %v3262 = vunpack.c.l.b16 %v3172
      %v3263 = vunpack.c.l.b16 %v3173
      %v3264 = vunpack.c.l.b16 %v3174
      %v3265 = vunpack.c.l.b16 %v3175
      %v3266 = vunpack.c.l.b16 %v3176
      %v3267 = vpack.c.b16 %v3238, %v3237
      %v3268 = vpack.c.b16 %v3239, %v3239
      %v3269 = vpack.c.b16 %v3241, %v3240
      %v3270 = vpack.c.b16 %v3242, %v3242
      %v3271 = vpack.c.b16 %v3244, %v3243
      %v3272 = vpack.c.b16 %v3245, %v3245
      %v3273 = vpack.c.b16 %v3247, %v3246
      %v3274 = vpack.c.b16 %v3248, %v3248
      %v3275 = vpack.c.b16 %v3250, %v3249
      %v3276 = vpack.c.b16 %v3251, %v3251
      %v3277 = vpack.c.b16 %v3253, %v3252
      %v3278 = vpack.c.b16 %v3254, %v3254
      %v3279 = vpack.c.b16 %v3256, %v3255
      %v3280 = vpack.c.b16 %v3257, %v3257
      %v3281 = vpack.c.b16 %v3259, %v3258
      %v3282 = vpack.c.b16 %v3260, %v3260
      %v3283 = vpack.c.b16 %v3262, %v3261
      %v3284 = vpack.c.b16 %v3263, %v3263
      %v3285 = vpack.c.b16 %v3265, %v3264
      %v3286 = vpack.c.b16 %v3266, %v3266
      %v3287 = vpack.c.b16 %v3239, %v3238
      %v3288 = vpack.c.b16 %v3242, %v3241
      %v3289 = vpack.c.b16 %v3245, %v3244
      %v3290 = vpack.c.b16 %v3248, %v3247
      %v3291 = vpack.c.b16 %v3251, %v3250
      %v3292 = vpack.c.b16 %v3254, %v3253
      %v3293 = vpack.c.b16 %v3257, %v3256
      %v3294 = vpack.c.b16 %v3260, %v3259
      %v3295 = vpack.c.b16 %v3263, %v3262
      %v3296 = vpack.c.b16 %v3266, %v3265
      %v3298 = vshrl.u32 %v3287, 16
      %v3300 = vrot.slane %v3298, 4
      %v3301 = vshll.u32 %v3287, 16
      %v3303 = vrot.slane %v3301, 5
      %v3304 = vor.u32 %v3300, %v3303
      %v3306 = vshrl.u32 %v3288, 16
      %v3308 = vrot.slane %v3306, 4
      %v3309 = vshll.u32 %v3288, 16
      %v3311 = vrot.slane %v3309, 5
      %v3312 = vor.u32 %v3308, %v3311
      %v3314 = vshrl.u32 %v3289, 16
      %v3316 = vrot.slane %v3314, 4
      %v3317 = vshll.u32 %v3289, 16
      %v3319 = vrot.slane %v3317, 5
      %v3320 = vor.u32 %v3316, %v3319
      %v3322 = vshrl.u32 %v3290, 16
      %v3324 = vrot.slane %v3322, 4
      %v3325 = vshll.u32 %v3290, 16
      %v3327 = vrot.slane %v3325, 5
      %v3328 = vor.u32 %v3324, %v3327
      %v3330 = vshrl.u32 %v3291, 16
      %v3332 = vrot.slane %v3330, 4
      %v3333 = vshll.u32 %v3291, 16
      %v3335 = vrot.slane %v3333, 5
      %v3336 = vor.u32 %v3332, %v3335
      %v3338 = vshrl.u32 %v3292, 16
      %v3340 = vrot.slane %v3338, 4
      %v3341 = vshll.u32 %v3292, 16
      %v3343 = vrot.slane %v3341, 5
      %v3344 = vor.u32 %v3340, %v3343
      %v3346 = vshrl.u32 %v3293, 16
      %v3348 = vrot.slane %v3346, 4
      %v3349 = vshll.u32 %v3293, 16
      %v3351 = vrot.slane %v3349, 5
      %v3352 = vor.u32 %v3348, %v3351
      %v3354 = vshrl.u32 %v3294, 16
      %v3356 = vrot.slane %v3354, 4
      %v3357 = vshll.u32 %v3294, 16
      %v3359 = vrot.slane %v3357, 5
      %v3360 = vor.u32 %v3356, %v3359
      %v3362 = vshrl.u32 %v3295, 16
      %v3364 = vrot.slane %v3362, 4
      %v3365 = vshll.u32 %v3295, 16
      %v3367 = vrot.slane %v3365, 5
      %v3368 = vor.u32 %v3364, %v3367
      %v3370 = vshrl.u32 %v3296, 16
      %v3372 = vrot.slane %v3370, 4
      %v3373 = vshll.u32 %v3296, 16
      %v3375 = vrot.slane %v3373, 5
      %v3376 = vor.u32 %v3372, %v3375
      %v3407 = vunpack.c.l.b16 %v3177
      %v3408 = vunpack.c.l.b16 %v3178
      %v3409 = vunpack.c.l.b16 %v3179
      %v3410 = vunpack.c.l.b16 %v3180
      %v3411 = vunpack.c.l.b16 %v3181
      %v3412 = vunpack.c.l.b16 %v3182
      %v3413 = vunpack.c.l.b16 %v3183
      %v3414 = vunpack.c.l.b16 %v3184
      %v3415 = vunpack.c.l.b16 %v3185
      %v3416 = vunpack.c.l.b16 %v3186
      %v3417 = vunpack.c.l.b16 %v3187
      %v3418 = vunpack.c.l.b16 %v3188
      %v3419 = vunpack.c.l.b16 %v3189
      %v3420 = vunpack.c.l.b16 %v3190
      %v3421 = vunpack.c.l.b16 %v3191
      %v3422 = vunpack.c.l.b16 %v3192
      %v3423 = vunpack.c.l.b16 %v3193
      %v3424 = vunpack.c.l.b16 %v3194
      %v3425 = vunpack.c.l.b16 %v3195
      %v3426 = vunpack.c.l.b16 %v3196
      %v3427 = vunpack.c.l.b16 %v3197
      %v3428 = vunpack.c.l.b16 %v3198
      %v3429 = vunpack.c.l.b16 %v3199
      %v3430 = vunpack.c.l.b16 %v3200
      %v3431 = vunpack.c.l.b16 %v3201
      %v3432 = vunpack.c.l.b16 %v3202
      %v3433 = vunpack.c.l.b16 %v3203
      %v3434 = vunpack.c.l.b16 %v3204
      %v3435 = vunpack.c.l.b16 %v3205
      %v3436 = vunpack.c.l.b16 %v3206
      %v3437 = vpack.c.b16 %v3408, %v3407
      %v3438 = vpack.c.b16 %v3409, %v3409
      %v3439 = vpack.c.b16 %v3411, %v3410
      %v3440 = vpack.c.b16 %v3412, %v3412
      %v3441 = vpack.c.b16 %v3414, %v3413
      %v3442 = vpack.c.b16 %v3415, %v3415
      %v3443 = vpack.c.b16 %v3417, %v3416
      %v3444 = vpack.c.b16 %v3418, %v3418
      %v3445 = vpack.c.b16 %v3420, %v3419
      %v3446 = vpack.c.b16 %v3421, %v3421
      %v3447 = vpack.c.b16 %v3423, %v3422
      %v3448 = vpack.c.b16 %v3424, %v3424
      %v3449 = vpack.c.b16 %v3426, %v3425
      %v3450 = vpack.c.b16 %v3427, %v3427
      %v3451 = vpack.c.b16 %v3429, %v3428
      %v3452 = vpack.c.b16 %v3430, %v3430
      %v3453 = vpack.c.b16 %v3432, %v3431
      %v3454 = vpack.c.b16 %v3433, %v3433
      %v3455 = vpack.c.b16 %v3435, %v3434
      %v3456 = vpack.c.b16 %v3436, %v3436
      %v3457 = vrot.slane %v3437, 5
      %v3458 = vrot.slane %v3438, 5
      %v3459 = vsel %vm1090, %v3457, %v3458
      %v3460 = vrot.slane %v3439, 5
      %v3461 = vrot.slane %v3440, 5
      %v3462 = vsel %vm1090, %v3460, %v3461
      %v3463 = vrot.slane %v3441, 5
      %v3464 = vrot.slane %v3442, 5
      %v3465 = vsel %vm1090, %v3463, %v3464
      %v3466 = vrot.slane %v3443, 5
      %v3467 = vrot.slane %v3444, 5
      %v3468 = vsel %vm1090, %v3466, %v3467
      %v3469 = vrot.slane %v3445, 5
      %v3470 = vrot.slane %v3446, 5
      %v3471 = vsel %vm1090, %v3469, %v3470
      %v3472 = vrot.slane %v3447, 5
      %v3473 = vrot.slane %v3448, 5
      %v3474 = vsel %vm1090, %v3472, %v3473
      %v3475 = vrot.slane %v3449, 5
      %v3476 = vrot.slane %v3450, 5
      %v3477 = vsel %vm1090, %v3475, %v3476
      %v3478 = vrot.slane %v3451, 5
      %v3479 = vrot.slane %v3452, 5
      %v3480 = vsel %vm1090, %v3478, %v3479
      %v3481 = vrot.slane %v3453, 5
      %v3482 = vrot.slane %v3454, 5
      %v3483 = vsel %vm1090, %v3481, %v3482
      %v3484 = vrot.slane %v3455, 5
      %v3485 = vrot.slane %v3456, 5
      %v3486 = vsel %vm1090, %v3484, %v3485
      %v3488 = vshrl.u32 %v3267, 16
      %v3490 = vrot.slane %v3488, 3
      %v3491 = vshll.u32 %v3267, 16
      %v3493 = vrot.slane %v3491, 4
      %v3494 = vor.u32 %v3490, %v3493
      %v3496 = vshrl.u32 %v3268, 16
      %v3498 = vrot.slane %v3496, 3
      %v3499 = vshll.u32 %v3268, 16
      %v3501 = vrot.slane %v3499, 4
      %v3502 = vor.u32 %v3498, %v3501
      %v3503 = vsel %vm1127, %v3494, %v3502
      %v3505 = vshrl.u32 %v3304, 16
      %v3507 = vrot.slane %v3505, 3
      %v3508 = vshll.u32 %v3304, 16
      %v3510 = vrot.slane %v3508, 4
      %v3511 = vor.u32 %v3507, %v3510
      %v3512 = vsel %vm1127, %v3511, %v3511
      %v3514 = vshrl.u32 %v3457, 16
      %v3516 = vrot.slane %v3514, 3
      %v3517 = vshll.u32 %v3457, 16
      %v3519 = vrot.slane %v3517, 4
      %v3520 = vor.u32 %v3516, %v3519
      %v3522 = vshrl.u32 %v3459, 16
      %v3524 = vrot.slane %v3522, 3
      %v3525 = vshll.u32 %v3459, 16
      %v3527 = vrot.slane %v3525, 4
      %v3528 = vor.u32 %v3524, %v3527
      %v3529 = vsel %vm1127, %v3520, %v3528
      %v3531 = vshrl.u32 %v3269, 16
      %v3533 = vrot.slane %v3531, 3
      %v3534 = vshll.u32 %v3269, 16
      %v3536 = vrot.slane %v3534, 4
      %v3537 = vor.u32 %v3533, %v3536
      %v3539 = vshrl.u32 %v3270, 16
      %v3541 = vrot.slane %v3539, 3
      %v3542 = vshll.u32 %v3270, 16
      %v3544 = vrot.slane %v3542, 4
      %v3545 = vor.u32 %v3541, %v3544
      %v3546 = vsel %vm1127, %v3537, %v3545
      %v3548 = vshrl.u32 %v3312, 16
      %v3550 = vrot.slane %v3548, 3
      %v3551 = vshll.u32 %v3312, 16
      %v3553 = vrot.slane %v3551, 4
      %v3554 = vor.u32 %v3550, %v3553
      %v3555 = vsel %vm1127, %v3554, %v3554
      %v3557 = vshrl.u32 %v3460, 16
      %v3559 = vrot.slane %v3557, 3
      %v3560 = vshll.u32 %v3460, 16
      %v3562 = vrot.slane %v3560, 4
      %v3563 = vor.u32 %v3559, %v3562
      %v3565 = vshrl.u32 %v3462, 16
      %v3567 = vrot.slane %v3565, 3
      %v3568 = vshll.u32 %v3462, 16
      %v3570 = vrot.slane %v3568, 4
      %v3571 = vor.u32 %v3567, %v3570
      %v3572 = vsel %vm1127, %v3563, %v3571
      %v3574 = vshrl.u32 %v3271, 16
      %v3576 = vrot.slane %v3574, 3
      %v3577 = vshll.u32 %v3271, 16
      %v3579 = vrot.slane %v3577, 4
      %v3580 = vor.u32 %v3576, %v3579
      %v3582 = vshrl.u32 %v3272, 16
      %v3584 = vrot.slane %v3582, 3
      %v3585 = vshll.u32 %v3272, 16
      %v3587 = vrot.slane %v3585, 4
      %v3588 = vor.u32 %v3584, %v3587
      %v3589 = vsel %vm1127, %v3580, %v3588
      %v3591 = vshrl.u32 %v3320, 16
      %v3593 = vrot.slane %v3591, 3
      %v3594 = vshll.u32 %v3320, 16
      %v3596 = vrot.slane %v3594, 4
      %v3597 = vor.u32 %v3593, %v3596
      %v3598 = vsel %vm1127, %v3597, %v3597
      %v3600 = vshrl.u32 %v3463, 16
      %v3602 = vrot.slane %v3600, 3
      %v3603 = vshll.u32 %v3463, 16
      %v3605 = vrot.slane %v3603, 4
      %v3606 = vor.u32 %v3602, %v3605
      %v3608 = vshrl.u32 %v3465, 16
      %v3610 = vrot.slane %v3608, 3
      %v3611 = vshll.u32 %v3465, 16
      %v3613 = vrot.slane %v3611, 4
      %v3614 = vor.u32 %v3610, %v3613
      %v3615 = vsel %vm1127, %v3606, %v3614
      %v3617 = vshrl.u32 %v3273, 16
      %v3619 = vrot.slane %v3617, 3
      %v3620 = vshll.u32 %v3273, 16
      %v3622 = vrot.slane %v3620, 4
      %v3623 = vor.u32 %v3619, %v3622
      %v3625 = vshrl.u32 %v3274, 16
      %v3627 = vrot.slane %v3625, 3
      %v3628 = vshll.u32 %v3274, 16
      %v3630 = vrot.slane %v3628, 4
      %v3631 = vor.u32 %v3627, %v3630
      %v3632 = vsel %vm1127, %v3623, %v3631
      %v3634 = vshrl.u32 %v3328, 16
      %v3636 = vrot.slane %v3634, 3
      %v3637 = vshll.u32 %v3328, 16
      %v3639 = vrot.slane %v3637, 4
      %v3640 = vor.u32 %v3636, %v3639
      %v3641 = vsel %vm1127, %v3640, %v3640
      %v3643 = vshrl.u32 %v3466, 16
      %v3645 = vrot.slane %v3643, 3
      %v3646 = vshll.u32 %v3466, 16
      %v3648 = vrot.slane %v3646, 4
      %v3649 = vor.u32 %v3645, %v3648
      %v3651 = vshrl.u32 %v3468, 16
      %v3653 = vrot.slane %v3651, 3
      %v3654 = vshll.u32 %v3468, 16
      %v3656 = vrot.slane %v3654, 4
      %v3657 = vor.u32 %v3653, %v3656
      %v3658 = vsel %vm1127, %v3649, %v3657
      %v3660 = vshrl.u32 %v3275, 16
      %v3662 = vrot.slane %v3660, 3
      %v3663 = vshll.u32 %v3275, 16
      %v3665 = vrot.slane %v3663, 4
      %v3666 = vor.u32 %v3662, %v3665
      %v3668 = vshrl.u32 %v3276, 16
      %v3670 = vrot.slane %v3668, 3
      %v3671 = vshll.u32 %v3276, 16
      %v3673 = vrot.slane %v3671, 4
      %v3674 = vor.u32 %v3670, %v3673
      %v3675 = vsel %vm1127, %v3666, %v3674
      %v3677 = vshrl.u32 %v3336, 16
      %v3679 = vrot.slane %v3677, 3
      %v3680 = vshll.u32 %v3336, 16
      %v3682 = vrot.slane %v3680, 4
      %v3683 = vor.u32 %v3679, %v3682
      %v3684 = vsel %vm1127, %v3683, %v3683
      %v3686 = vshrl.u32 %v3469, 16
      %v3688 = vrot.slane %v3686, 3
      %v3689 = vshll.u32 %v3469, 16
      %v3691 = vrot.slane %v3689, 4
      %v3692 = vor.u32 %v3688, %v3691
      %v3694 = vshrl.u32 %v3471, 16
      %v3696 = vrot.slane %v3694, 3
      %v3697 = vshll.u32 %v3471, 16
      %v3699 = vrot.slane %v3697, 4
      %v3700 = vor.u32 %v3696, %v3699
      %v3701 = vsel %vm1127, %v3692, %v3700
      %v3703 = vshrl.u32 %v3277, 16
      %v3705 = vrot.slane %v3703, 3
      %v3706 = vshll.u32 %v3277, 16
      %v3708 = vrot.slane %v3706, 4
      %v3709 = vor.u32 %v3705, %v3708
      %v3711 = vshrl.u32 %v3278, 16
      %v3713 = vrot.slane %v3711, 3
      %v3714 = vshll.u32 %v3278, 16
      %v3716 = vrot.slane %v3714, 4
      %v3717 = vor.u32 %v3713, %v3716
      %v3718 = vsel %vm1127, %v3709, %v3717
      %v3720 = vshrl.u32 %v3344, 16
      %v3722 = vrot.slane %v3720, 3
      %v3723 = vshll.u32 %v3344, 16
      %v3725 = vrot.slane %v3723, 4
      %v3726 = vor.u32 %v3722, %v3725
      %v3727 = vsel %vm1127, %v3726, %v3726
      %v3729 = vshrl.u32 %v3472, 16
      %v3731 = vrot.slane %v3729, 3
      %v3732 = vshll.u32 %v3472, 16
      %v3734 = vrot.slane %v3732, 4
      %v3735 = vor.u32 %v3731, %v3734
      %v3737 = vshrl.u32 %v3474, 16
      %v3739 = vrot.slane %v3737, 3
      %v3740 = vshll.u32 %v3474, 16
      %v3742 = vrot.slane %v3740, 4
      %v3743 = vor.u32 %v3739, %v3742
      %v3744 = vsel %vm1127, %v3735, %v3743
      %v3746 = vshrl.u32 %v3279, 16
      %v3748 = vrot.slane %v3746, 3
      %v3749 = vshll.u32 %v3279, 16
      %v3751 = vrot.slane %v3749, 4
      %v3752 = vor.u32 %v3748, %v3751
      %v3754 = vshrl.u32 %v3280, 16
      %v3756 = vrot.slane %v3754, 3
      %v3757 = vshll.u32 %v3280, 16
      %v3759 = vrot.slane %v3757, 4
      %v3760 = vor.u32 %v3756, %v3759
      %v3761 = vsel %vm1127, %v3752, %v3760
      %v3763 = vshrl.u32 %v3352, 16
      %v3765 = vrot.slane %v3763, 3
      %v3766 = vshll.u32 %v3352, 16
      %v3768 = vrot.slane %v3766, 4
      %v3769 = vor.u32 %v3765, %v3768
      %v3770 = vsel %vm1127, %v3769, %v3769
      %v3772 = vshrl.u32 %v3475, 16
      %v3774 = vrot.slane %v3772, 3
      %v3775 = vshll.u32 %v3475, 16
      %v3777 = vrot.slane %v3775, 4
      %v3778 = vor.u32 %v3774, %v3777
      %v3780 = vshrl.u32 %v3477, 16
      %v3782 = vrot.slane %v3780, 3
      %v3783 = vshll.u32 %v3477, 16
      %v3785 = vrot.slane %v3783, 4
      %v3786 = vor.u32 %v3782, %v3785
      %v3787 = vsel %vm1127, %v3778, %v3786
      %v3789 = vshrl.u32 %v3281, 16
      %v3791 = vrot.slane %v3789, 3
      %v3792 = vshll.u32 %v3281, 16
      %v3794 = vrot.slane %v3792, 4
      %v3795 = vor.u32 %v3791, %v3794
      %v3797 = vshrl.u32 %v3282, 16
      %v3799 = vrot.slane %v3797, 3
      %v3800 = vshll.u32 %v3282, 16
      %v3802 = vrot.slane %v3800, 4
      %v3803 = vor.u32 %v3799, %v3802
      %v3804 = vsel %vm1127, %v3795, %v3803
      %v3806 = vshrl.u32 %v3360, 16
      %v3808 = vrot.slane %v3806, 3
      %v3809 = vshll.u32 %v3360, 16
      %v3811 = vrot.slane %v3809, 4
      %v3812 = vor.u32 %v3808, %v3811
      %v3813 = vsel %vm1127, %v3812, %v3812
      %v3815 = vshrl.u32 %v3478, 16
      %v3817 = vrot.slane %v3815, 3
      %v3818 = vshll.u32 %v3478, 16
      %v3820 = vrot.slane %v3818, 4
      %v3821 = vor.u32 %v3817, %v3820
      %v3823 = vshrl.u32 %v3480, 16
      %v3825 = vrot.slane %v3823, 3
      %v3826 = vshll.u32 %v3480, 16
      %v3828 = vrot.slane %v3826, 4
      %v3829 = vor.u32 %v3825, %v3828
      %v3830 = vsel %vm1127, %v3821, %v3829
      %v3855 = vld [vmem:[%s6] sm:$0xf]
      %v3856 = vld [vmem:[%s6 + $0x4] sm:$0xf]
      %v3857 = vld [vmem:[%s6 + $0x8] sm:$0xf]
      %v3858 = vld [vmem:[%s6 + $0xc] sm:$0xf]
      %v3859 = vld [vmem:[%s6 + $0x10] sm:$0xf]
      %v3860 = vld [vmem:[%s6 + $0x14] sm:$0xf]
      %v3861 = vld [vmem:[%s6 + $0x18] sm:$0xf]
      %v3862 = vld [vmem:[%s6 + $0x1c] sm:$0xf]
      %v3863 = vld [vmem:[%s6 + $0x20] sm:$0xf]
      %v3864 = vld [vmem:[%s6 + $0x24] sm:$0xf]
      %v3865 = vld [vmem:[%s6 + $0x28] sm:$0xf]
      %v3866 = vld [vmem:[%s6 + $0x2c] sm:$0xf]
      %v3867 = vld [vmem:[%s6 + $0x30] sm:$0xf]
      %v3868 = vld [vmem:[%s6 + $0x34] sm:$0xf]
      %v3869 = vld [vmem:[%s6 + $0x38] sm:$0xf]
      %v3870 = vld [vmem:[%s6 + $0x3c] sm:$0xf]
      %v3871 = vld [vmem:[%s6 + $0x40] sm:$0xf]
      %v3872 = vld [vmem:[%s6 + $0x44] sm:$0xf]
      %v3873 = vld [vmem:[%s6 + $0x48] sm:$0xf]
      %v3874 = vld [vmem:[%s6 + $0x4c] sm:$0xf]
      %v3875 = vld [vmem:[%s6 + $0x50] sm:$0xf]
      %v3876 = vld [vmem:[%s6 + $0x54] sm:$0xf]
      %v3877 = vld [vmem:[%s6 + $0x58] sm:$0xf]
      %v3878 = vld [vmem:[%s6 + $0x5c] sm:$0xf]
      %v3879 = vld [vmem:[%s6 + $0x60] sm:$0xf]
      %v3880 = vld [vmem:[%s6 + $0x64] sm:$0xf]
      %v3881 = vld [vmem:[%s6 + $0x68] sm:$0xf]
      %v3882 = vld [vmem:[%s6 + $0x6c] sm:$0xf]
      %v3883 = vld [vmem:[%s6 + $0x70] sm:$0xf]
      %v3884 = vld [vmem:[%s6 + $0x74] sm:$0xf]
      %v3885 = vld [vmem:[%s6 + $0x78] sm:$0xf]
      %v3886 = vld [vmem:[%s6 + $0x7c] sm:$0xf]
      %v3887 = vld [vmem:[%s6 + $0x80] sm:$0xf]
      %v3888 = vld [vmem:[%s6 + $0x84] sm:$0xf]
      %v3889 = vld [vmem:[%s6 + $0x88] sm:$0xf]
      %v3890 = vld [vmem:[%s6 + $0x8c] sm:$0xf]
      %v3891 = vld [vmem:[%s6 + $0x90] sm:$0xf]
      %v3892 = vld [vmem:[%s6 + $0x94] sm:$0xf]
      %v3893 = vld [vmem:[%s6 + $0x98] sm:$0xf]
      %v3894 = vld [vmem:[%s6 + $0x9c] sm:$0xf]
      %v3895 = vld [vmem:[%s6 + $0xa0] sm:$0xf]
      %v3896 = vld [vmem:[%s6 + $0xa4] sm:$0xf]
      %v3897 = vld [vmem:[%s6 + $0xa8] sm:$0xf]
      %v3898 = vld [vmem:[%s6 + $0xac] sm:$0xf]
      %v3899 = vld [vmem:[%s6 + $0xb0] sm:$0xf]
      %v3900 = vld [vmem:[%s6 + $0xb4] sm:$0xf]
      %v3901 = vld [vmem:[%s6 + $0xb8] sm:$0xf]
      %v3902 = vld [vmem:[%s6 + $0xbc] sm:$0xf]
      %v3904 = vshrl.u32 %v3283, 16
      %v3906 = vrot.slane %v3904, 3
      %v3907 = vshll.u32 %v3283, 16
      %v3909 = vrot.slane %v3907, 4
      %v3910 = vor.u32 %v3906, %v3909
      %v3912 = vshrl.u32 %v3284, 16
      %v3914 = vrot.slane %v3912, 3
      %v3915 = vshll.u32 %v3284, 16
      %v3917 = vrot.slane %v3915, 4
      %v3918 = vor.u32 %v3914, %v3917
      %v3919 = vsel %vm1127, %v3910, %v3918
      %v3921 = vshrl.u32 %v3368, 16
      %v3923 = vrot.slane %v3921, 3
      %v3924 = vshll.u32 %v3368, 16
      %v3926 = vrot.slane %v3924, 4
      %v3927 = vor.u32 %v3923, %v3926
      %v3928 = vsel %vm1127, %v3927, %v3927
      %v3930 = vshrl.u32 %v3481, 16
      %v3932 = vrot.slane %v3930, 3
      %v3933 = vshll.u32 %v3481, 16
      %v3935 = vrot.slane %v3933, 4
      %v3936 = vor.u32 %v3932, %v3935
      %v3938 = vshrl.u32 %v3483, 16
      %v3940 = vrot.slane %v3938, 3
      %v3941 = vshll.u32 %v3483, 16
      %v3943 = vrot.slane %v3941, 4
      %v3944 = vor.u32 %v3940, %v3943
      %v3945 = vsel %vm1127, %v3936, %v3944
      %s3949 = scalar_lea.vmem %s6, 192
      %v3950 = vld [vmem:[%s3949] sm:$0xf]
      %v3951 = vld [vmem:[%s3949 + $0x4] sm:$0xf]
      %v3952 = vld [vmem:[%s3949 + $0x8] sm:$0xf]
      %v3953 = vld [vmem:[%s3949 + $0xc] sm:$0xf]
      %v3954 = vld [vmem:[%s3949 + $0x10] sm:$0xf]
      %v3955 = vld [vmem:[%s3949 + $0x14] sm:$0xf]
      %v3956 = vld [vmem:[%s3949 + $0x18] sm:$0xf]
      %v3957 = vld [vmem:[%s3949 + $0x1c] sm:$0xf]
      %v3958 = vld [vmem:[%s3949 + $0x20] sm:$0xf]
      %v3959 = vld [vmem:[%s3949 + $0x24] sm:$0xf]
      %v3960 = vld [vmem:[%s3949 + $0x28] sm:$0xf]
      %v3961 = vld [vmem:[%s3949 + $0x2c] sm:$0xf]
      %v3962 = vld [vmem:[%s3949 + $0x30] sm:$0xf]
      %v3963 = vld [vmem:[%s3949 + $0x34] sm:$0xf]
      %v3964 = vld [vmem:[%s3949 + $0x38] sm:$0xf]
      %v3965 = vld [vmem:[%s3949 + $0x3c] sm:$0xf]
      %v3966 = vld [vmem:[%s3949 + $0x40] sm:$0xf]
      %v3967 = vld [vmem:[%s3949 + $0x44] sm:$0xf]
      %v3968 = vld [vmem:[%s3949 + $0x48] sm:$0xf]
      %v3969 = vld [vmem:[%s3949 + $0x4c] sm:$0xf]
      %v3970 = vld [vmem:[%s3949 + $0x50] sm:$0xf]
      %v3971 = vld [vmem:[%s3949 + $0x54] sm:$0xf]
      %v3972 = vld [vmem:[%s3949 + $0x58] sm:$0xf]
      %v3973 = vld [vmem:[%s3949 + $0x5c] sm:$0xf]
      %v3974 = vld [vmem:[%s3949 + $0x60] sm:$0xf]
      %v3975 = vld [vmem:[%s3949 + $0x64] sm:$0xf]
      %v3976 = vld [vmem:[%s3949 + $0x68] sm:$0xf]
      %v3977 = vld [vmem:[%s3949 + $0x6c] sm:$0xf]
      %v3978 = vld [vmem:[%s3949 + $0x70] sm:$0xf]
      %v3979 = vld [vmem:[%s3949 + $0x74] sm:$0xf]
      %v3980 = vld [vmem:[%s3949 + $0x78] sm:$0xf]
      %v3981 = vld [vmem:[%s3949 + $0x7c] sm:$0xf]
      %v3982 = vld [vmem:[%s3949 + $0x80] sm:$0xf]
      %v3983 = vld [vmem:[%s3949 + $0x84] sm:$0xf]
      %v3984 = vld [vmem:[%s3949 + $0x88] sm:$0xf]
      %v3985 = vld [vmem:[%s3949 + $0x8c] sm:$0xf]
      %v3986 = vld [vmem:[%s3949 + $0x90] sm:$0xf]
      %v3987 = vld [vmem:[%s3949 + $0x94] sm:$0xf]
      %v3988 = vld [vmem:[%s3949 + $0x98] sm:$0xf]
      %v3989 = vld [vmem:[%s3949 + $0x9c] sm:$0xf]
      %v3990 = vld [vmem:[%s3949 + $0xa0] sm:$0xf]
      %v3991 = vld [vmem:[%s3949 + $0xa4] sm:$0xf]
      %v3992 = vld [vmem:[%s3949 + $0xa8] sm:$0xf]
      %v3993 = vld [vmem:[%s3949 + $0xac] sm:$0xf]
      %v3994 = vld [vmem:[%s3949 + $0xb0] sm:$0xf]
      %v3995 = vld [vmem:[%s3949 + $0xb4] sm:$0xf]
      %v3996 = vld [vmem:[%s3949 + $0xb8] sm:$0xf]
      %v3997 = vld [vmem:[%s3949 + $0xbc] sm:$0xf]
      %v4046 = vunpack.c.l.b16 %v3950
      %v4047 = vunpack.c.l.b16 %v3951
      %v4048 = vunpack.c.l.b16 %v3952
      %v4049 = vunpack.c.l.b16 %v3953
      %v4050 = vunpack.c.l.b16 %v3954
      %v4051 = vunpack.c.l.b16 %v3955
      %v4052 = vunpack.c.l.b16 %v3956
      %v4053 = vunpack.c.l.b16 %v3957
      %v4054 = vunpack.c.l.b16 %v3958
      %v4055 = vunpack.c.l.b16 %v3959
      %v4056 = vunpack.c.l.b16 %v3960
      %v4057 = vunpack.c.l.b16 %v3961
      %v4058 = vunpack.c.l.b16 %v3962
      %v4059 = vunpack.c.l.b16 %v3963
      %v4060 = vunpack.c.l.b16 %v3964
      %v4061 = vunpack.c.l.b16 %v3965
      %v4062 = vunpack.c.l.b16 %v3966
      %v4063 = vunpack.c.l.b16 %v3967
      %v4064 = vunpack.c.l.b16 %v3968
      %v4065 = vunpack.c.l.b16 %v3969
      %v4066 = vunpack.c.l.b16 %v3970
      %v4067 = vunpack.c.l.b16 %v3971
      %v4068 = vunpack.c.l.b16 %v3972
      %v4069 = vunpack.c.l.b16 %v3973
      %v4070 = vunpack.c.l.b16 %v3974
      %v4071 = vunpack.c.l.b16 %v3975
      %v4072 = vunpack.c.l.b16 %v3976
      %v4073 = vunpack.c.l.b16 %v3977
      %v4074 = vunpack.c.l.b16 %v3978
      %v4075 = vunpack.c.l.b16 %v3979
      %v4076 = vunpack.c.l.b16 %v3980
      %v4077 = vunpack.c.l.b16 %v3981
      %v4078 = vunpack.c.l.b16 %v3982
      %v4079 = vunpack.c.l.b16 %v3983
      %v4080 = vunpack.c.l.b16 %v3984
      %v4081 = vunpack.c.l.b16 %v3985
      %v4082 = vunpack.c.l.b16 %v3986
      %v4083 = vunpack.c.l.b16 %v3987
      %v4084 = vunpack.c.l.b16 %v3988
      %v4085 = vunpack.c.l.b16 %v3989
      %v4086 = vunpack.c.l.b16 %v3990
      %v4087 = vunpack.c.l.b16 %v3991
      %v4088 = vunpack.c.l.b16 %v3992
      %v4089 = vunpack.c.l.b16 %v3993
      %v4090 = vunpack.c.l.b16 %v3994
      %v4091 = vunpack.c.l.b16 %v3995
      %v4092 = vunpack.c.l.b16 %v3996
      %v4093 = vunpack.c.l.b16 %v3997
      %v4094 = vpack.c.b16 %v4047, %v4046
      %v4095 = vpack.c.b16 %v4049, %v4048
      %v4096 = vpack.c.b16 %v4051, %v4050
      %v4097 = vpack.c.b16 %v4053, %v4052
      %v4098 = vpack.c.b16 %v4055, %v4054
      %v4099 = vpack.c.b16 %v4057, %v4056
      %v4100 = vpack.c.b16 %v4059, %v4058
      %v4101 = vpack.c.b16 %v4061, %v4060
      %v4102 = vpack.c.b16 %v4063, %v4062
      %v4103 = vpack.c.b16 %v4065, %v4064
      %v4104 = vpack.c.b16 %v4067, %v4066
      %v4105 = vpack.c.b16 %v4069, %v4068
      %v4106 = vpack.c.b16 %v4071, %v4070
      %v4107 = vpack.c.b16 %v4073, %v4072
      %v4108 = vpack.c.b16 %v4075, %v4074
      %v4109 = vpack.c.b16 %v4077, %v4076
      %v4110 = vpack.c.b16 %v4079, %v4078
      %v4111 = vpack.c.b16 %v4081, %v4080
      %v4112 = vpack.c.b16 %v4083, %v4082
      %v4113 = vpack.c.b16 %v4085, %v4084
      %v4114 = vpack.c.b16 %v4087, %v4086
      %v4115 = vpack.c.b16 %v4089, %v4088
      %v4116 = vpack.c.b16 %v4091, %v4090
      %v4117 = vpack.c.b16 %v4093, %v4092
      %4142 = vmatprep.subr.bf16.mxu0 0
      %4143 = vmatpush1.bf16.msra.mxu0 %v4101
      %4144 = vmatprep.subr.bf16.mxu0 0
      %4145 = vmatpush1.bf16.msra.mxu0 %v4100
      %4146 = vmatprep.subr.bf16.mxu0 0
      %4147 = vmatpush1.bf16.msra.mxu0 %v4099
      %4148 = vmatprep.subr.bf16.mxu0 0
      %4149 = vmatpush1.bf16.msra.mxu0 %v4098
      %4150 = vmatprep.subr.bf16.mxu0 0
      %4151 = vmatpush1.bf16.msra.mxu0 %v4097
      %4152 = vmatprep.subr.bf16.mxu0 0
      %4153 = vmatpush1.bf16.msra.mxu0 %v4096
      %4154 = vmatprep.subr.bf16.mxu0 0
      %4155 = vmatpush1.bf16.msra.mxu0 %v4095
      %4156 = vmatprep.subr.bf16.mxu0 0
      %4157 = vmatpush1.bf16.msra.mxu0 %v4094
      %4158 = vmatprep.subr.bf16.mxu0 0
      %4159 = vmatpush2.bf16.msra.mxu0 %v4109
      %4160 = vmatprep.subr.bf16.mxu0 0
      %4161 = vmatpush2.bf16.msra.mxu0 %v4108
      %4162 = vmatprep.subr.bf16.mxu0 0
      %4163 = vmatpush2.bf16.msra.mxu0 %v4107
      %4164 = vmatprep.subr.bf16.mxu0 0
      %4165 = vmatpush2.bf16.msra.mxu0 %v4106
      %4166 = vmatprep.subr.bf16.mxu0 0
      %4167 = vmatpush2.bf16.msra.mxu0 %v4105
      %4168 = vmatprep.subr.bf16.mxu0 0
      %4169 = vmatpush2.bf16.msra.mxu0 %v4104
      %4170 = vmatprep.subr.bf16.mxu0 0
      %4171 = vmatpush2.bf16.msra.mxu0 %v4103
      %4172 = vmatprep.subr.bf16.mxu0 0
      %4173 = vmatpush2.bf16.msra.mxu0 %v4102
      %4174 = vmatprep.mubr.bf16.mxu0 %v3555
      %4175 = vmatmul.mubr.bf16.gmra.mxu0 %v3546
      %v4176 = vpop.f32.mrf.mxu0
      %v4177 = vadd.f32 0.0, %v4176
      %v4178 = vpop.f32.mrf.mxu0
      %v4179 = vpop.f32.mrf.mxu0
      %v4180 = vadd.f32 0.0, %v4179
      %v4181 = vpop.f32.mrf.mxu0
      %4182 = vmatprep.mubr.bf16.mxu0 %v3598
      %4183 = vmatmul.mubr.bf16.gmra.mxu0 %v3589
      %v4184 = vpop.f32.mrf.mxu0
      %v4185 = vadd.f32 0.0, %v4184
      %v4186 = vpop.f32.mrf.mxu0
      %v4187 = vpop.f32.mrf.mxu0
      %v4188 = vadd.f32 0.0, %v4187
      %v4189 = vpop.f32.mrf.mxu0
      %4190 = vmatprep.mubr.bf16.mxu0 %v3641
      %4191 = vmatmul.mubr.bf16.gmra.mxu0 %v3632
      %v4192 = vpop.f32.mrf.mxu0
      %v4193 = vadd.f32 0.0, %v4192
      %v4194 = vpop.f32.mrf.mxu0
      %v4195 = vpop.f32.mrf.mxu0
      %v4196 = vadd.f32 0.0, %v4195
      %v4197 = vpop.f32.mrf.mxu0
      %4198 = vmatprep.mubr.bf16.mxu0 %v3684
      %4199 = vmatmul.mubr.bf16.gmra.mxu0 %v3675
      %v4200 = vpop.f32.mrf.mxu0
      %v4201 = vadd.f32 0.0, %v4200
      %v4202 = vpop.f32.mrf.mxu0
      %v4203 = vpop.f32.mrf.mxu0
      %v4204 = vadd.f32 0.0, %v4203
      %v4205 = vpop.f32.mrf.mxu0
      %4206 = vmatprep.mubr.bf16.mxu0 %v3727
      %4207 = vmatmul.mubr.bf16.gmra.mxu0 %v3718
      %v4208 = vpop.f32.mrf.mxu0
      %v4209 = vadd.f32 0.0, %v4208
      %v4210 = vpop.f32.mrf.mxu0
      %v4211 = vpop.f32.mrf.mxu0
      %v4212 = vadd.f32 0.0, %v4211
      %v4213 = vpop.f32.mrf.mxu0
      %4214 = vmatprep.mubr.bf16.mxu0 %v3770
      %4215 = vmatmul.mubr.bf16.gmra.mxu0 %v3761
      %v4216 = vpop.f32.mrf.mxu0
      %v4217 = vadd.f32 0.0, %v4216
      %v4218 = vpop.f32.mrf.mxu0
      %v4219 = vpop.f32.mrf.mxu0
      %v4220 = vadd.f32 0.0, %v4219
      %v4221 = vpop.f32.mrf.mxu0
      %4222 = vmatprep.mubr.bf16.mxu0 %v3813
      %4223 = vmatmul.mubr.bf16.gmra.mxu0 %v3804
      %v4224 = vpop.f32.mrf.mxu0
      %v4225 = vadd.f32 0.0, %v4224
      %v4226 = vpop.f32.mrf.mxu0
      %v4227 = vpop.f32.mrf.mxu0
      %v4228 = vadd.f32 0.0, %v4227
      %v4229 = vpop.f32.mrf.mxu0
      %4230 = vmatprep.mubr.bf16.mxu0 %v3928
      %4231 = vmatmul.mubr.bf16.gmra.mxu0 %v3919
      %v4232 = vpop.f32.mrf.mxu0
      %v4233 = vadd.f32 0.0, %v4232
      %v4234 = vpop.f32.mrf.mxu0
      %v4235 = vpop.f32.mrf.mxu0
      %v4236 = vadd.f32 0.0, %v4235
      %v4237 = vpop.f32.mrf.mxu0
      %4238 = vdwg.mxu0
      %4239 = vmatprep.subr.bf16.mxu0 0
      %4240 = vmatpush1.bf16.msra.mxu0 %v4117
      %4241 = vmatprep.subr.bf16.mxu0 0
      %4242 = vmatpush1.bf16.msra.mxu0 %v4116
      %4243 = vmatprep.subr.bf16.mxu0 0
      %4244 = vmatpush1.bf16.msra.mxu0 %v4115
      %4245 = vmatprep.subr.bf16.mxu0 0
      %4246 = vmatpush1.bf16.msra.mxu0 %v4114
      %4247 = vmatprep.subr.bf16.mxu0 0
      %4248 = vmatpush1.bf16.msra.mxu0 %v4113
      %4249 = vmatprep.subr.bf16.mxu0 0
      %4250 = vmatpush1.bf16.msra.mxu0 %v4112
      %4251 = vmatprep.subr.bf16.mxu0 0
      %4252 = vmatpush1.bf16.msra.mxu0 %v4111
      %4253 = vmatprep.subr.bf16.mxu0 0
      %4254 = vmatpush1.bf16.msra.mxu0 %v4110
      %4255 = vmatprep.subr.bf16.mxu0 0
      %4256 = vmatpush2.bf16.msra.mxu0 0
      %4257 = vmatprep.subr.bf16.mxu0 0
      %4258 = vmatpush2.bf16.msra.mxu0 0
      %4259 = vmatprep.subr.bf16.mxu0 0
      %4260 = vmatpush2.bf16.msra.mxu0 0
      %4261 = vmatprep.subr.bf16.mxu0 0
      %4262 = vmatpush2.bf16.msra.mxu0 0
      %4263 = vmatprep.subr.bf16.mxu0 0
      %4264 = vmatpush2.bf16.msra.mxu0 0
      %4265 = vmatprep.subr.bf16.mxu0 0
      %4266 = vmatpush2.bf16.msra.mxu0 0
      %4267 = vmatprep.subr.bf16.mxu0 0
      %4268 = vmatpush2.bf16.msra.mxu0 0
      %4269 = vmatprep.subr.bf16.mxu0 0
      %4270 = vmatpush2.bf16.msra.mxu0 0
      %4271 = vmatprep.mubr.bf16.mxu0 0
      %4272 = vmatmul.mubr.bf16.gmra.mxu0 %v3572
      %v4273 = vpop.f32.mrf.mxu0
      %v4274 = vadd.f32 %v4177, %v4273
      %v4275 = vpop.f32.mrf.mxu0
      %v4276 = vpop.f32.mrf.mxu0
      %v4277 = vadd.f32 %v4180, %v4276
      %v4278 = vpop.f32.mrf.mxu0
      %4279 = vmatprep.mubr.bf16.mxu0 0
      %4280 = vmatmul.mubr.bf16.gmra.mxu0 %v3615
      %v4281 = vpop.f32.mrf.mxu0
      %v4282 = vadd.f32 %v4185, %v4281
      %v4283 = vpop.f32.mrf.mxu0
      %v4284 = vpop.f32.mrf.mxu0
      %v4285 = vadd.f32 %v4188, %v4284
      %v4286 = vpop.f32.mrf.mxu0
      %4287 = vmatprep.mubr.bf16.mxu0 0
      %4288 = vmatmul.mubr.bf16.gmra.mxu0 %v3658
      %v4289 = vpop.f32.mrf.mxu0
      %v4290 = vadd.f32 %v4193, %v4289
      %v4291 = vpop.f32.mrf.mxu0
      %v4292 = vpop.f32.mrf.mxu0
      %v4293 = vadd.f32 %v4196, %v4292
      %v4294 = vpop.f32.mrf.mxu0
      %4295 = vmatprep.mubr.bf16.mxu0 0
      %4296 = vmatmul.mubr.bf16.gmra.mxu0 %v3701
      %v4297 = vpop.f32.mrf.mxu0
      %v4298 = vadd.f32 %v4201, %v4297
      %v4299 = vpop.f32.mrf.mxu0
      %v4300 = vpop.f32.mrf.mxu0
      %v4301 = vadd.f32 %v4204, %v4300
      %v4302 = vpop.f32.mrf.mxu0
      %4303 = vmatprep.mubr.bf16.mxu0 0
      %4304 = vmatmul.mubr.bf16.gmra.mxu0 %v3744
      %v4305 = vpop.f32.mrf.mxu0
      %v4306 = vadd.f32 %v4209, %v4305
      %v4307 = vpop.f32.mrf.mxu0
      %v4308 = vpop.f32.mrf.mxu0
      %v4309 = vadd.f32 %v4212, %v4308
      %v4310 = vpop.f32.mrf.mxu0
      %4311 = vmatprep.mubr.bf16.mxu0 0
      %4312 = vmatmul.mubr.bf16.gmra.mxu0 %v3787
      %v4313 = vpop.f32.mrf.mxu0
      %v4314 = vadd.f32 %v4217, %v4313
      %v4315 = vpop.f32.mrf.mxu0
      %v4316 = vpop.f32.mrf.mxu0
      %v4317 = vadd.f32 %v4220, %v4316
      %v4318 = vpop.f32.mrf.mxu0
      %4319 = vmatprep.mubr.bf16.mxu0 0
      %4320 = vmatmul.mubr.bf16.gmra.mxu0 %v3830
      %v4321 = vpop.f32.mrf.mxu0
      %v4322 = vadd.f32 %v4225, %v4321
      %v4323 = vpop.f32.mrf.mxu0
      %v4324 = vpop.f32.mrf.mxu0
      %v4325 = vadd.f32 %v4228, %v4324
      %v4326 = vpop.f32.mrf.mxu0
      %4327 = vmatprep.mubr.bf16.mxu0 0
      %4328 = vmatmul.mubr.bf16.gmra.mxu0 %v3945
      %v4329 = vpop.f32.mrf.mxu0
      %v4330 = vadd.f32 %v4233, %v4329
      %v4331 = vpop.f32.mrf.mxu0
      %v4332 = vpop.f32.mrf.mxu0
      %v4333 = vadd.f32 %v4236, %v4332
      %v4334 = vpop.f32.mrf.mxu0
      %4335 = vdwg.mxu0
      %v4384 = vunpack.c.l.b16 %v3855
      %v4385 = vunpack.c.l.b16 %v3856
      %v4386 = vunpack.c.l.b16 %v3857
      %v4387 = vunpack.c.l.b16 %v3858
      %v4388 = vunpack.c.l.b16 %v3859
      %v4389 = vunpack.c.l.b16 %v3860
      %v4390 = vunpack.c.l.b16 %v3861
      %v4391 = vunpack.c.l.b16 %v3862
      %v4392 = vunpack.c.l.b16 %v3863
      %v4393 = vunpack.c.l.b16 %v3864
      %v4394 = vunpack.c.l.b16 %v3865
      %v4395 = vunpack.c.l.b16 %v3866
      %v4396 = vunpack.c.l.b16 %v3867
      %v4397 = vunpack.c.l.b16 %v3868
      %v4398 = vunpack.c.l.b16 %v3869
      %v4399 = vunpack.c.l.b16 %v3870
      %v4400 = vunpack.c.l.b16 %v3871
      %v4401 = vunpack.c.l.b16 %v3872
      %v4402 = vunpack.c.l.b16 %v3873
      %v4403 = vunpack.c.l.b16 %v3874
      %v4404 = vunpack.c.l.b16 %v3875
      %v4405 = vunpack.c.l.b16 %v3876
      %v4406 = vunpack.c.l.b16 %v3877
      %v4407 = vunpack.c.l.b16 %v3878
      %v4408 = vunpack.c.l.b16 %v3879
      %v4409 = vunpack.c.l.b16 %v3880
      %v4410 = vunpack.c.l.b16 %v3881
      %v4411 = vunpack.c.l.b16 %v3882
      %v4412 = vunpack.c.l.b16 %v3883
      %v4413 = vunpack.c.l.b16 %v3884
      %v4414 = vunpack.c.l.b16 %v3885
      %v4415 = vunpack.c.l.b16 %v3886
      %v4416 = vunpack.c.l.b16 %v3887
      %v4417 = vunpack.c.l.b16 %v3888
      %v4418 = vunpack.c.l.b16 %v3889
      %v4419 = vunpack.c.l.b16 %v3890
      %v4420 = vunpack.c.l.b16 %v3891
      %v4421 = vunpack.c.l.b16 %v3892
      %v4422 = vunpack.c.l.b16 %v3893
      %v4423 = vunpack.c.l.b16 %v3894
      %v4424 = vunpack.c.l.b16 %v3895
      %v4425 = vunpack.c.l.b16 %v3896
      %v4426 = vunpack.c.l.b16 %v3897
      %v4427 = vunpack.c.l.b16 %v3898
      %v4428 = vunpack.c.l.b16 %v3899
      %v4429 = vunpack.c.l.b16 %v3900
      %v4430 = vunpack.c.l.b16 %v3901
      %v4431 = vunpack.c.l.b16 %v3902
      %v4432 = vpack.c.b16 %v4385, %v4384
      %v4433 = vpack.c.b16 %v4387, %v4386
      %v4434 = vpack.c.b16 %v4389, %v4388
      %v4435 = vpack.c.b16 %v4391, %v4390
      %v4436 = vpack.c.b16 %v4393, %v4392
      %v4437 = vpack.c.b16 %v4395, %v4394
      %v4438 = vpack.c.b16 %v4397, %v4396
      %v4439 = vpack.c.b16 %v4399, %v4398
      %v4440 = vpack.c.b16 %v4401, %v4400
      %v4441 = vpack.c.b16 %v4403, %v4402
      %v4442 = vpack.c.b16 %v4405, %v4404
      %v4443 = vpack.c.b16 %v4407, %v4406
      %v4444 = vpack.c.b16 %v4409, %v4408
      %v4445 = vpack.c.b16 %v4411, %v4410
      %v4446 = vpack.c.b16 %v4413, %v4412
      %v4447 = vpack.c.b16 %v4415, %v4414
      %v4448 = vpack.c.b16 %v4417, %v4416
      %v4449 = vpack.c.b16 %v4419, %v4418
      %v4450 = vpack.c.b16 %v4421, %v4420
      %v4451 = vpack.c.b16 %v4423, %v4422
      %v4452 = vpack.c.b16 %v4425, %v4424
      %v4453 = vpack.c.b16 %v4427, %v4426
      %v4454 = vpack.c.b16 %v4429, %v4428
      %v4455 = vpack.c.b16 %v4431, %v4430
      %4480 = vmatprep.subr.bf16.mxu0 0
      %4481 = vmatpush1.bf16.msra.mxu0 %v4439
      %4482 = vmatprep.subr.bf16.mxu0 0
      %4483 = vmatpush1.bf16.msra.mxu0 %v4438
      %4484 = vmatprep.subr.bf16.mxu0 0
      %4485 = vmatpush1.bf16.msra.mxu0 %v4437
      %4486 = vmatprep.subr.bf16.mxu0 0
      %4487 = vmatpush1.bf16.msra.mxu0 %v4436
      %4488 = vmatprep.subr.bf16.mxu0 0
      %4489 = vmatpush1.bf16.msra.mxu0 %v4435
      %4490 = vmatprep.subr.bf16.mxu0 0
      %4491 = vmatpush1.bf16.msra.mxu0 %v4434
      %4492 = vmatprep.subr.bf16.mxu0 0
      %4493 = vmatpush1.bf16.msra.mxu0 %v4433
      %4494 = vmatprep.subr.bf16.mxu0 0
      %4495 = vmatpush1.bf16.msra.mxu0 %v4432
      %4496 = vmatprep.subr.bf16.mxu0 0
      %4497 = vmatpush2.bf16.msra.mxu0 %v4447
      %4498 = vmatprep.subr.bf16.mxu0 0
      %4499 = vmatpush2.bf16.msra.mxu0 %v4446
      %4500 = vmatprep.subr.bf16.mxu0 0
      %4501 = vmatpush2.bf16.msra.mxu0 %v4445
      %4502 = vmatprep.subr.bf16.mxu0 0
      %4503 = vmatpush2.bf16.msra.mxu0 %v4444
      %4504 = vmatprep.subr.bf16.mxu0 0
      %4505 = vmatpush2.bf16.msra.mxu0 %v4443
      %4506 = vmatprep.subr.bf16.mxu0 0
      %4507 = vmatpush2.bf16.msra.mxu0 %v4442
      %4508 = vmatprep.subr.bf16.mxu0 0
      %4509 = vmatpush2.bf16.msra.mxu0 %v4441
      %4510 = vmatprep.subr.bf16.mxu0 0
      %4511 = vmatpush2.bf16.msra.mxu0 %v4440
      %4512 = vmatprep.mubr.bf16.mxu0 %v3512
      %4513 = vmatmul.mubr.bf16.gmra.mxu0 %v3503
      %v4514 = vpop.f32.mrf.mxu0
      %v4515 = vadd.f32 %v4274, %v4514
      %v4516 = vpop.f32.mrf.mxu0
      %v4517 = vpop.f32.mrf.mxu0
      %v4518 = vadd.f32 %v4277, %v4517
      %v4519 = vpop.f32.mrf.mxu0
      %4520 = vmatprep.mubr.bf16.mxu0 %v3555
      %4521 = vmatmul.mubr.bf16.gmra.mxu0 %v3546
      %v4522 = vpop.f32.mrf.mxu0
      %v4523 = vadd.f32 %v4282, %v4522
      %v4524 = vpop.f32.mrf.mxu0
      %v4525 = vpop.f32.mrf.mxu0
      %v4526 = vadd.f32 %v4285, %v4525
      %v4527 = vpop.f32.mrf.mxu0
      %4528 = vmatprep.mubr.bf16.mxu0 %v3598
      %4529 = vmatmul.mubr.bf16.gmra.mxu0 %v3589
      %v4530 = vpop.f32.mrf.mxu0
      %v4531 = vadd.f32 %v4290, %v4530
      %v4532 = vpop.f32.mrf.mxu0
      %v4533 = vpop.f32.mrf.mxu0
      %v4534 = vadd.f32 %v4293, %v4533
      %v4535 = vpop.f32.mrf.mxu0
      %4536 = vmatprep.mubr.bf16.mxu0 %v3641
      %4537 = vmatmul.mubr.bf16.gmra.mxu0 %v3632
      %v4538 = vpop.f32.mrf.mxu0
      %v4539 = vadd.f32 %v4298, %v4538
      %v4540 = vpop.f32.mrf.mxu0
      %v4541 = vpop.f32.mrf.mxu0
      %v4542 = vadd.f32 %v4301, %v4541
      %v4543 = vpop.f32.mrf.mxu0
      %4544 = vmatprep.mubr.bf16.mxu0 %v3684
      %4545 = vmatmul.mubr.bf16.gmra.mxu0 %v3675
      %v4546 = vpop.f32.mrf.mxu0
      %v4547 = vadd.f32 %v4306, %v4546
      %v4548 = vpop.f32.mrf.mxu0
      %v4549 = vpop.f32.mrf.mxu0
      %v4550 = vadd.f32 %v4309, %v4549
      %v4551 = vpop.f32.mrf.mxu0
      %4552 = vmatprep.mubr.bf16.mxu0 %v3727
      %4553 = vmatmul.mubr.bf16.gmra.mxu0 %v3718
      %v4554 = vpop.f32.mrf.mxu0
      %v4555 = vadd.f32 %v4314, %v4554
      %v4556 = vpop.f32.mrf.mxu0
      %v4557 = vpop.f32.mrf.mxu0
      %v4558 = vadd.f32 %v4317, %v4557
      %v4559 = vpop.f32.mrf.mxu0
      %4560 = vmatprep.mubr.bf16.mxu0 %v3770
      %4561 = vmatmul.mubr.bf16.gmra.mxu0 %v3761
      %v4562 = vpop.f32.mrf.mxu0
      %v4563 = vadd.f32 %v4322, %v4562
      %v4564 = vpop.f32.mrf.mxu0
      %v4565 = vpop.f32.mrf.mxu0
      %v4566 = vadd.f32 %v4325, %v4565
      %v4567 = vpop.f32.mrf.mxu0
      %4568 = vmatprep.mubr.bf16.mxu0 %v3813
      %4569 = vmatmul.mubr.bf16.gmra.mxu0 %v3804
      %v4570 = vpop.f32.mrf.mxu0
      %v4571 = vadd.f32 %v4330, %v4570
      %v4572 = vpop.f32.mrf.mxu0
      %v4573 = vpop.f32.mrf.mxu0
      %v4574 = vadd.f32 %v4333, %v4573
      %v4575 = vpop.f32.mrf.mxu0
      %4576 = vdwg.mxu0
      %4577 = vmatprep.subr.bf16.mxu0 0
      %4578 = vmatpush1.bf16.msra.mxu0 %v4455
      %4579 = vmatprep.subr.bf16.mxu0 0
      %4580 = vmatpush1.bf16.msra.mxu0 %v4454
      %4581 = vmatprep.subr.bf16.mxu0 0
      %4582 = vmatpush1.bf16.msra.mxu0 %v4453
      %4583 = vmatprep.subr.bf16.mxu0 0
      %4584 = vmatpush1.bf16.msra.mxu0 %v4452
      %4585 = vmatprep.subr.bf16.mxu0 0
      %4586 = vmatpush1.bf16.msra.mxu0 %v4451
      %4587 = vmatprep.subr.bf16.mxu0 0
      %4588 = vmatpush1.bf16.msra.mxu0 %v4450
      %4589 = vmatprep.subr.bf16.mxu0 0
      %4590 = vmatpush1.bf16.msra.mxu0 %v4449
      %4591 = vmatprep.subr.bf16.mxu0 0
      %4592 = vmatpush1.bf16.msra.mxu0 %v4448
      %4593 = vmatprep.subr.bf16.mxu0 0
      %4594 = vmatpush2.bf16.msra.mxu0 0
      %4595 = vmatprep.subr.bf16.mxu0 0
      %4596 = vmatpush2.bf16.msra.mxu0 0
      %4597 = vmatprep.subr.bf16.mxu0 0
      %4598 = vmatpush2.bf16.msra.mxu0 0
      %4599 = vmatprep.subr.bf16.mxu0 0
      %4600 = vmatpush2.bf16.msra.mxu0 0
      %4601 = vmatprep.subr.bf16.mxu0 0
      %4602 = vmatpush2.bf16.msra.mxu0 0
      %4603 = vmatprep.subr.bf16.mxu0 0
      %4604 = vmatpush2.bf16.msra.mxu0 0
      %4605 = vmatprep.subr.bf16.mxu0 0
      %4606 = vmatpush2.bf16.msra.mxu0 0
      %4607 = vmatprep.subr.bf16.mxu0 0
      %4608 = vmatpush2.bf16.msra.mxu0 0
      %4609 = vmatprep.mubr.bf16.mxu0 0
      %4610 = vmatmul.mubr.bf16.gmra.mxu0 %v3529
      %v4611 = vpop.f32.mrf.mxu0
      %v4612 = vadd.f32 %v4515, %v4611
      %v4613 = vpop.f32.mrf.mxu0
      %v4614 = vpop.f32.mrf.mxu0
      %v4615 = vadd.f32 %v4518, %v4614
      %v4616 = vpop.f32.mrf.mxu0
      %4617 = vmatprep.mubr.bf16.mxu0 0
      %4618 = vmatmul.mubr.bf16.gmra.mxu0 %v3572
      %v4619 = vpop.f32.mrf.mxu0
      %v4620 = vadd.f32 %v4523, %v4619
      %v4621 = vpop.f32.mrf.mxu0
      %v4622 = vpop.f32.mrf.mxu0
      %v4623 = vadd.f32 %v4526, %v4622
      %v4624 = vpop.f32.mrf.mxu0
      %4625 = vmatprep.mubr.bf16.mxu0 0
      %4626 = vmatmul.mubr.bf16.gmra.mxu0 %v3615
      %v4627 = vpop.f32.mrf.mxu0
      %v4628 = vadd.f32 %v4531, %v4627
      %v4629 = vpop.f32.mrf.mxu0
      %v4630 = vpop.f32.mrf.mxu0
      %v4631 = vadd.f32 %v4534, %v4630
      %v4632 = vpop.f32.mrf.mxu0
      %4633 = vmatprep.mubr.bf16.mxu0 0
      %4634 = vmatmul.mubr.bf16.gmra.mxu0 %v3658
      %v4635 = vpop.f32.mrf.mxu0
      %v4636 = vadd.f32 %v4539, %v4635
      %v4637 = vpop.f32.mrf.mxu0
      %v4638 = vpop.f32.mrf.mxu0
      %v4639 = vadd.f32 %v4542, %v4638
      %v4640 = vpop.f32.mrf.mxu0
      %4641 = vmatprep.mubr.bf16.mxu0 0
      %4642 = vmatmul.mubr.bf16.gmra.mxu0 %v3701
      %v4643 = vpop.f32.mrf.mxu0
      %v4644 = vadd.f32 %v4547, %v4643
      %v4645 = vpop.f32.mrf.mxu0
      %v4646 = vpop.f32.mrf.mxu0
      %v4647 = vadd.f32 %v4550, %v4646
      %v4648 = vpop.f32.mrf.mxu0
      %4649 = vmatprep.mubr.bf16.mxu0 0
      %4650 = vmatmul.mubr.bf16.gmra.mxu0 %v3744
      %v4651 = vpop.f32.mrf.mxu0
      %v4652 = vadd.f32 %v4555, %v4651
      %v4653 = vpop.f32.mrf.mxu0
      %v4654 = vpop.f32.mrf.mxu0
      %v4655 = vadd.f32 %v4558, %v4654
      %v4656 = vpop.f32.mrf.mxu0
      %4657 = vmatprep.mubr.bf16.mxu0 0
      %4658 = vmatmul.mubr.bf16.gmra.mxu0 %v3787
      %v4659 = vpop.f32.mrf.mxu0
      %v4660 = vadd.f32 %v4563, %v4659
      %v4661 = vpop.f32.mrf.mxu0
      %v4662 = vpop.f32.mrf.mxu0
      %v4663 = vadd.f32 %v4566, %v4662
      %v4664 = vpop.f32.mrf.mxu0
      %4665 = vmatprep.mubr.bf16.mxu0 0
      %4666 = vmatmul.mubr.bf16.gmra.mxu0 %v3830
      %v4667 = vpop.f32.mrf.mxu0
      %v4668 = vadd.f32 %v4571, %v4667
      %v4669 = vpop.f32.mrf.mxu0
      %v4670 = vpop.f32.mrf.mxu0
      %v4671 = vadd.f32 %v4574, %v4670
      %v4672 = vpop.f32.mrf.mxu0
      %4673 = vdwg.mxu0
      %v4675 = vshrl.u32 %v3285, 16
      %v4677 = vrot.slane %v4675, 3
      %v4678 = vshll.u32 %v3285, 16
      %v4680 = vrot.slane %v4678, 4
      %v4681 = vor.u32 %v4677, %v4680
      %v4683 = vshrl.u32 %v3286, 16
      %v4685 = vrot.slane %v4683, 3
      %v4686 = vshll.u32 %v3286, 16
      %v4688 = vrot.slane %v4686, 4
      %v4689 = vor.u32 %v4685, %v4688
      %v4690 = vsel %vm1127, %v4681, %v4689
      %v4692 = vshrl.u32 %v3376, 16
      %v4694 = vrot.slane %v4692, 3
      %v4695 = vshll.u32 %v3376, 16
      %v4697 = vrot.slane %v4695, 4
      %v4698 = vor.u32 %v4694, %v4697
      %v4699 = vsel %vm1127, %v4698, %v4698
      %v4701 = vshrl.u32 %v3484, 16
      %v4703 = vrot.slane %v4701, 3
      %v4704 = vshll.u32 %v3484, 16
      %v4706 = vrot.slane %v4704, 4
      %v4707 = vor.u32 %v4703, %v4706
      %v4709 = vshrl.u32 %v3486, 16
      %v4711 = vrot.slane %v4709, 3
      %v4712 = vshll.u32 %v3486, 16
      %v4714 = vrot.slane %v4712, 4
      %v4715 = vor.u32 %v4711, %v4714
      %v4716 = vsel %vm1127, %v4707, %v4715
      %s4720 = scalar_lea.vmem %s6, 384
      %v4721 = vld [vmem:[%s4720] sm:$0xf]
      %v4722 = vld [vmem:[%s4720 + $0x4] sm:$0xf]
      %v4723 = vld [vmem:[%s4720 + $0x8] sm:$0xf]
      %v4724 = vld [vmem:[%s4720 + $0xc] sm:$0xf]
      %v4725 = vld [vmem:[%s4720 + $0x10] sm:$0xf]
      %v4726 = vld [vmem:[%s4720 + $0x14] sm:$0xf]
      %v4727 = vld [vmem:[%s4720 + $0x18] sm:$0xf]
      %v4728 = vld [vmem:[%s4720 + $0x1c] sm:$0xf]
      %v4729 = vld [vmem:[%s4720 + $0x20] sm:$0xf]
      %v4730 = vld [vmem:[%s4720 + $0x24] sm:$0xf]
      %v4731 = vld [vmem:[%s4720 + $0x28] sm:$0xf]
      %v4732 = vld [vmem:[%s4720 + $0x2c] sm:$0xf]
      %v4733 = vld [vmem:[%s4720 + $0x30] sm:$0xf]
      %v4734 = vld [vmem:[%s4720 + $0x34] sm:$0xf]
      %v4735 = vld [vmem:[%s4720 + $0x38] sm:$0xf]
      %v4736 = vld [vmem:[%s4720 + $0x3c] sm:$0xf]
      %v4737 = vld [vmem:[%s4720 + $0x40] sm:$0xf]
      %v4738 = vld [vmem:[%s4720 + $0x44] sm:$0xf]
      %v4739 = vld [vmem:[%s4720 + $0x48] sm:$0xf]
      %v4740 = vld [vmem:[%s4720 + $0x4c] sm:$0xf]
      %v4741 = vld [vmem:[%s4720 + $0x50] sm:$0xf]
      %v4742 = vld [vmem:[%s4720 + $0x54] sm:$0xf]
      %v4743 = vld [vmem:[%s4720 + $0x58] sm:$0xf]
      %v4744 = vld [vmem:[%s4720 + $0x5c] sm:$0xf]
      %v4745 = vld [vmem:[%s4720 + $0x60] sm:$0xf]
      %v4746 = vld [vmem:[%s4720 + $0x64] sm:$0xf]
      %v4747 = vld [vmem:[%s4720 + $0x68] sm:$0xf]
      %v4748 = vld [vmem:[%s4720 + $0x6c] sm:$0xf]
      %v4749 = vld [vmem:[%s4720 + $0x70] sm:$0xf]
      %v4750 = vld [vmem:[%s4720 + $0x74] sm:$0xf]
      %v4751 = vld [vmem:[%s4720 + $0x78] sm:$0xf]
      %v4752 = vld [vmem:[%s4720 + $0x7c] sm:$0xf]
      %v4753 = vld [vmem:[%s4720 + $0x80] sm:$0xf]
      %v4754 = vld [vmem:[%s4720 + $0x84] sm:$0xf]
      %v4755 = vld [vmem:[%s4720 + $0x88] sm:$0xf]
      %v4756 = vld [vmem:[%s4720 + $0x8c] sm:$0xf]
      %v4757 = vld [vmem:[%s4720 + $0x90] sm:$0xf]
      %v4758 = vld [vmem:[%s4720 + $0x94] sm:$0xf]
      %v4759 = vld [vmem:[%s4720 + $0x98] sm:$0xf]
      %v4760 = vld [vmem:[%s4720 + $0x9c] sm:$0xf]
      %v4761 = vld [vmem:[%s4720 + $0xa0] sm:$0xf]
      %v4762 = vld [vmem:[%s4720 + $0xa4] sm:$0xf]
      %v4763 = vld [vmem:[%s4720 + $0xa8] sm:$0xf]
      %v4764 = vld [vmem:[%s4720 + $0xac] sm:$0xf]
      %v4765 = vld [vmem:[%s4720 + $0xb0] sm:$0xf]
      %v4766 = vld [vmem:[%s4720 + $0xb4] sm:$0xf]
      %v4767 = vld [vmem:[%s4720 + $0xb8] sm:$0xf]
      %v4768 = vld [vmem:[%s4720 + $0xbc] sm:$0xf]
      %v4817 = vunpack.c.l.b16 %v4721
      %v4818 = vunpack.c.l.b16 %v4722
      %v4819 = vunpack.c.l.b16 %v4723
      %v4820 = vunpack.c.l.b16 %v4724
      %v4821 = vunpack.c.l.b16 %v4725
      %v4822 = vunpack.c.l.b16 %v4726
      %v4823 = vunpack.c.l.b16 %v4727
      %v4824 = vunpack.c.l.b16 %v4728
      %v4825 = vunpack.c.l.b16 %v4729
      %v4826 = vunpack.c.l.b16 %v4730
      %v4827 = vunpack.c.l.b16 %v4731
      %v4828 = vunpack.c.l.b16 %v4732
      %v4829 = vunpack.c.l.b16 %v4733
      %v4830 = vunpack.c.l.b16 %v4734
      %v4831 = vunpack.c.l.b16 %v4735
      %v4832 = vunpack.c.l.b16 %v4736
      %v4833 = vunpack.c.l.b16 %v4737
      %v4834 = vunpack.c.l.b16 %v4738
      %v4835 = vunpack.c.l.b16 %v4739
      %v4836 = vunpack.c.l.b16 %v4740
      %v4837 = vunpack.c.l.b16 %v4741
      %v4838 = vunpack.c.l.b16 %v4742
      %v4839 = vunpack.c.l.b16 %v4743
      %v4840 = vunpack.c.l.b16 %v4744
      %v4841 = vunpack.c.l.b16 %v4745
      %v4842 = vunpack.c.l.b16 %v4746
      %v4843 = vunpack.c.l.b16 %v4747
      %v4844 = vunpack.c.l.b16 %v4748
      %v4845 = vunpack.c.l.b16 %v4749
      %v4846 = vunpack.c.l.b16 %v4750
      %v4847 = vunpack.c.l.b16 %v4751
      %v4848 = vunpack.c.l.b16 %v4752
      %v4849 = vunpack.c.l.b16 %v4753
      %v4850 = vunpack.c.l.b16 %v4754
      %v4851 = vunpack.c.l.b16 %v4755
      %v4852 = vunpack.c.l.b16 %v4756
      %v4853 = vunpack.c.l.b16 %v4757
      %v4854 = vunpack.c.l.b16 %v4758
      %v4855 = vunpack.c.l.b16 %v4759
      %v4856 = vunpack.c.l.b16 %v4760
      %v4857 = vunpack.c.l.b16 %v4761
      %v4858 = vunpack.c.l.b16 %v4762
      %v4859 = vunpack.c.l.b16 %v4763
      %v4860 = vunpack.c.l.b16 %v4764
      %v4861 = vunpack.c.l.b16 %v4765
      %v4862 = vunpack.c.l.b16 %v4766
      %v4863 = vunpack.c.l.b16 %v4767
      %v4864 = vunpack.c.l.b16 %v4768
      %v4865 = vpack.c.b16 %v4818, %v4817
      %v4866 = vpack.c.b16 %v4820, %v4819
      %v4867 = vpack.c.b16 %v4822, %v4821
      %v4868 = vpack.c.b16 %v4824, %v4823
      %v4869 = vpack.c.b16 %v4826, %v4825
      %v4870 = vpack.c.b16 %v4828, %v4827
      %v4871 = vpack.c.b16 %v4830, %v4829
      %v4872 = vpack.c.b16 %v4832, %v4831
      %v4873 = vpack.c.b16 %v4834, %v4833
      %v4874 = vpack.c.b16 %v4836, %v4835
      %v4875 = vpack.c.b16 %v4838, %v4837
      %v4876 = vpack.c.b16 %v4840, %v4839
      %v4877 = vpack.c.b16 %v4842, %v4841
      %v4878 = vpack.c.b16 %v4844, %v4843
      %v4879 = vpack.c.b16 %v4846, %v4845
      %v4880 = vpack.c.b16 %v4848, %v4847
      %v4881 = vpack.c.b16 %v4850, %v4849
      %v4882 = vpack.c.b16 %v4852, %v4851
      %v4883 = vpack.c.b16 %v4854, %v4853
      %v4884 = vpack.c.b16 %v4856, %v4855
      %v4885 = vpack.c.b16 %v4858, %v4857
      %v4886 = vpack.c.b16 %v4860, %v4859
      %v4887 = vpack.c.b16 %v4862, %v4861
      %v4888 = vpack.c.b16 %v4864, %v4863
      %4913 = vmatprep.subr.bf16.mxu0 0
      %4914 = vmatpush1.bf16.msra.mxu0 %v4872
      %4915 = vmatprep.subr.bf16.mxu0 0
      %4916 = vmatpush1.bf16.msra.mxu0 %v4871
      %4917 = vmatprep.subr.bf16.mxu0 0
      %4918 = vmatpush1.bf16.msra.mxu0 %v4870
      %4919 = vmatprep.subr.bf16.mxu0 0
      %4920 = vmatpush1.bf16.msra.mxu0 %v4869
      %4921 = vmatprep.subr.bf16.mxu0 0
      %4922 = vmatpush1.bf16.msra.mxu0 %v4868
      %4923 = vmatprep.subr.bf16.mxu0 0
      %4924 = vmatpush1.bf16.msra.mxu0 %v4867
      %4925 = vmatprep.subr.bf16.mxu0 0
      %4926 = vmatpush1.bf16.msra.mxu0 %v4866
      %4927 = vmatprep.subr.bf16.mxu0 0
      %4928 = vmatpush1.bf16.msra.mxu0 %v4865
      %4929 = vmatprep.subr.bf16.mxu0 0
      %4930 = vmatpush2.bf16.msra.mxu0 %v4880
      %4931 = vmatprep.subr.bf16.mxu0 0
      %4932 = vmatpush2.bf16.msra.mxu0 %v4879
      %4933 = vmatprep.subr.bf16.mxu0 0
      %4934 = vmatpush2.bf16.msra.mxu0 %v4878
      %4935 = vmatprep.subr.bf16.mxu0 0
      %4936 = vmatpush2.bf16.msra.mxu0 %v4877
      %4937 = vmatprep.subr.bf16.mxu0 0
      %4938 = vmatpush2.bf16.msra.mxu0 %v4876
      %4939 = vmatprep.subr.bf16.mxu0 0
      %4940 = vmatpush2.bf16.msra.mxu0 %v4875
      %4941 = vmatprep.subr.bf16.mxu0 0
      %4942 = vmatpush2.bf16.msra.mxu0 %v4874
      %4943 = vmatprep.subr.bf16.mxu0 0
      %4944 = vmatpush2.bf16.msra.mxu0 %v4873
      %4945 = vmatprep.mubr.bf16.mxu0 %v3598
      %4946 = vmatmul.mubr.bf16.gmra.mxu0 %v3589
      %v4947 = vpop.f32.mrf.mxu0
      %v4948 = vadd.f32 0.0, %v4947
      %v4949 = vpop.f32.mrf.mxu0
      %v4950 = vpop.f32.mrf.mxu0
      %v4951 = vadd.f32 0.0, %v4950
      %v4952 = vpop.f32.mrf.mxu0
      %4953 = vmatprep.mubr.bf16.mxu0 %v3641
      %4954 = vmatmul.mubr.bf16.gmra.mxu0 %v3632
      %v4955 = vpop.f32.mrf.mxu0
      %v4956 = vadd.f32 0.0, %v4955
      %v4957 = vpop.f32.mrf.mxu0
      %v4958 = vpop.f32.mrf.mxu0
      %v4959 = vadd.f32 0.0, %v4958
      %v4960 = vpop.f32.mrf.mxu0
      %4961 = vmatprep.mubr.bf16.mxu0 %v3684
      %4962 = vmatmul.mubr.bf16.gmra.mxu0 %v3675
      %v4963 = vpop.f32.mrf.mxu0
      %v4964 = vadd.f32 0.0, %v4963
      %v4965 = vpop.f32.mrf.mxu0
      %v4966 = vpop.f32.mrf.mxu0
      %v4967 = vadd.f32 0.0, %v4966
      %v4968 = vpop.f32.mrf.mxu0
      %4969 = vmatprep.mubr.bf16.mxu0 %v3727
      %4970 = vmatmul.mubr.bf16.gmra.mxu0 %v3718
      %v4971 = vpop.f32.mrf.mxu0
      %v4972 = vadd.f32 0.0, %v4971
      %v4973 = vpop.f32.mrf.mxu0
      %v4974 = vpop.f32.mrf.mxu0
      %v4975 = vadd.f32 0.0, %v4974
      %v4976 = vpop.f32.mrf.mxu0
      %4977 = vmatprep.mubr.bf16.mxu0 %v3770
      %4978 = vmatmul.mubr.bf16.gmra.mxu0 %v3761
      %v4979 = vpop.f32.mrf.mxu0
      %v4980 = vadd.f32 0.0, %v4979
      %v4981 = vpop.f32.mrf.mxu0
      %v4982 = vpop.f32.mrf.mxu0
      %v4983 = vadd.f32 0.0, %v4982
      %v4984 = vpop.f32.mrf.mxu0
      %4985 = vmatprep.mubr.bf16.mxu0 %v3813
      %4986 = vmatmul.mubr.bf16.gmra.mxu0 %v3804
      %v4987 = vpop.f32.mrf.mxu0
      %v4988 = vadd.f32 0.0, %v4987
      %v4989 = vpop.f32.mrf.mxu0
      %v4990 = vpop.f32.mrf.mxu0
      %v4991 = vadd.f32 0.0, %v4990
      %v4992 = vpop.f32.mrf.mxu0
      %4993 = vmatprep.mubr.bf16.mxu0 %v3928
      %4994 = vmatmul.mubr.bf16.gmra.mxu0 %v3919
      %v4995 = vpop.f32.mrf.mxu0
      %v4996 = vadd.f32 0.0, %v4995
      %v4997 = vpop.f32.mrf.mxu0
      %v4998 = vpop.f32.mrf.mxu0
      %v4999 = vadd.f32 0.0, %v4998
      %v5000 = vpop.f32.mrf.mxu0
      %5001 = vmatprep.mubr.bf16.mxu0 %v4699
      %5002 = vmatmul.mubr.bf16.gmra.mxu0 %v4690
      %v5003 = vpop.f32.mrf.mxu0
      %v5004 = vadd.f32 0.0, %v5003
      %v5005 = vpop.f32.mrf.mxu0
      %v5006 = vpop.f32.mrf.mxu0
      %v5007 = vadd.f32 0.0, %v5006
      %v5008 = vpop.f32.mrf.mxu0
      %5009 = vdwg.mxu0
      %5010 = vmatprep.subr.bf16.mxu0 0
      %5011 = vmatpush1.bf16.msra.mxu0 %v4888
      %5012 = vmatprep.subr.bf16.mxu0 0
      %5013 = vmatpush1.bf16.msra.mxu0 %v4887
      %5014 = vmatprep.subr.bf16.mxu0 0
      %5015 = vmatpush1.bf16.msra.mxu0 %v4886
      %5016 = vmatprep.subr.bf16.mxu0 0
      %5017 = vmatpush1.bf16.msra.mxu0 %v4885
      %5018 = vmatprep.subr.bf16.mxu0 0
      %5019 = vmatpush1.bf16.msra.mxu0 %v4884
      %5020 = vmatprep.subr.bf16.mxu0 0
      %5021 = vmatpush1.bf16.msra.mxu0 %v4883
      %5022 = vmatprep.subr.bf16.mxu0 0
      %5023 = vmatpush1.bf16.msra.mxu0 %v4882
      %5024 = vmatprep.subr.bf16.mxu0 0
      %5025 = vmatpush1.bf16.msra.mxu0 %v4881
      %5026 = vmatprep.subr.bf16.mxu0 0
      %5027 = vmatpush2.bf16.msra.mxu0 0
      %5028 = vmatprep.subr.bf16.mxu0 0
      %5029 = vmatpush2.bf16.msra.mxu0 0
      %5030 = vmatprep.subr.bf16.mxu0 0
      %5031 = vmatpush2.bf16.msra.mxu0 0
      %5032 = vmatprep.subr.bf16.mxu0 0
      %5033 = vmatpush2.bf16.msra.mxu0 0
      %5034 = vmatprep.subr.bf16.mxu0 0
      %5035 = vmatpush2.bf16.msra.mxu0 0
      %5036 = vmatprep.subr.bf16.mxu0 0
      %5037 = vmatpush2.bf16.msra.mxu0 0
      %5038 = vmatprep.subr.bf16.mxu0 0
      %5039 = vmatpush2.bf16.msra.mxu0 0
      %5040 = vmatprep.subr.bf16.mxu0 0
      %5041 = vmatpush2.bf16.msra.mxu0 0
      %5042 = vmatprep.mubr.bf16.mxu0 0
      %5043 = vmatmul.mubr.bf16.gmra.mxu0 %v3615
      %v5044 = vpop.f32.mrf.mxu0
      %v5045 = vadd.f32 %v4948, %v5044
      %v5046 = vpop.f32.mrf.mxu0
      %v5047 = vpop.f32.mrf.mxu0
      %v5048 = vadd.f32 %v4951, %v5047
      %v5049 = vpop.f32.mrf.mxu0
      %5050 = vmatprep.mubr.bf16.mxu0 0
      %5051 = vmatmul.mubr.bf16.gmra.mxu0 %v3658
      %v5052 = vpop.f32.mrf.mxu0
      %v5053 = vadd.f32 %v4956, %v5052
      %v5054 = vpop.f32.mrf.mxu0
      %v5055 = vpop.f32.mrf.mxu0
      %v5056 = vadd.f32 %v4959, %v5055
      %v5057 = vpop.f32.mrf.mxu0
      %5058 = vmatprep.mubr.bf16.mxu0 0
      %5059 = vmatmul.mubr.bf16.gmra.mxu0 %v3701
      %v5060 = vpop.f32.mrf.mxu0
      %v5061 = vadd.f32 %v4964, %v5060
      %v5062 = vpop.f32.mrf.mxu0
      %v5063 = vpop.f32.mrf.mxu0
      %v5064 = vadd.f32 %v4967, %v5063
      %v5065 = vpop.f32.mrf.mxu0
      %5066 = vmatprep.mubr.bf16.mxu0 0
      %5067 = vmatmul.mubr.bf16.gmra.mxu0 %v3744
      %v5068 = vpop.f32.mrf.mxu0
      %v5069 = vadd.f32 %v4972, %v5068
      %v5070 = vpop.f32.mrf.mxu0
      %v5071 = vpop.f32.mrf.mxu0
      %v5072 = vadd.f32 %v4975, %v5071
      %v5073 = vpop.f32.mrf.mxu0
      %5074 = vmatprep.mubr.bf16.mxu0 0
      %5075 = vmatmul.mubr.bf16.gmra.mxu0 %v3787
      %v5076 = vpop.f32.mrf.mxu0
      %v5077 = vadd.f32 %v4980, %v5076
      %v5078 = vpop.f32.mrf.mxu0
      %v5079 = vpop.f32.mrf.mxu0
      %v5080 = vadd.f32 %v4983, %v5079
      %v5081 = vpop.f32.mrf.mxu0
      %5082 = vmatprep.mubr.bf16.mxu0 0
      %5083 = vmatmul.mubr.bf16.gmra.mxu0 %v3830
      %v5084 = vpop.f32.mrf.mxu0
      %v5085 = vadd.f32 %v4988, %v5084
      %v5086 = vpop.f32.mrf.mxu0
      %v5087 = vpop.f32.mrf.mxu0
      %v5088 = vadd.f32 %v4991, %v5087
      %v5089 = vpop.f32.mrf.mxu0
      %5090 = vmatprep.mubr.bf16.mxu0 0
      %5091 = vmatmul.mubr.bf16.gmra.mxu0 %v3945
      %v5092 = vpop.f32.mrf.mxu0
      %v5093 = vadd.f32 %v4996, %v5092
      %v5094 = vpop.f32.mrf.mxu0
      %v5095 = vpop.f32.mrf.mxu0
      %v5096 = vadd.f32 %v4999, %v5095
      %v5097 = vpop.f32.mrf.mxu0
      %5098 = vmatprep.mubr.bf16.mxu0 0
      %5099 = vmatmul.mubr.bf16.gmra.mxu0 %v4716
      %v5100 = vpop.f32.mrf.mxu0
      %v5101 = vadd.f32 %v5004, %v5100
      %v5102 = vpop.f32.mrf.mxu0
      %v5103 = vpop.f32.mrf.mxu0
      %v5104 = vadd.f32 %v5007, %v5103
      %v5105 = vpop.f32.mrf.mxu0
      %5106 = vdwg.mxu0
      %v5107 = vadd.f32 %v4612, %v5045
      %v5108 = vadd.f32 %v4615, %v5048
      %v5109 = vadd.f32 %v4620, %v5053
      %v5110 = vadd.f32 %v4623, %v5056
      %v5111 = vadd.f32 %v4628, %v5061
      %v5112 = vadd.f32 %v4631, %v5064
      %v5113 = vadd.f32 %v4636, %v5069
      %v5114 = vadd.f32 %v4639, %v5072
      %v5115 = vadd.f32 %v4644, %v5077
      %v5116 = vadd.f32 %v4647, %v5080
      %v5117 = vadd.f32 %v4652, %v5085
      %v5118 = vadd.f32 %v4655, %v5088
      %v5119 = vadd.f32 %v4660, %v5093
      %v5120 = vadd.f32 %v4663, %v5096
      %v5121 = vadd.f32 %v4668, %v5101
      %v5122 = vadd.f32 %v4671, %v5104
      %v5123 = vld [vmem:[%s7] sm:$0x1]
      %v5125 = vlaneseq
      %v5126 = vshrl.u32 %v5125, 7
      %v5127 = vsub.s32 0, %v5126
      %v5128 = vrot.slane %v5123, %v5127
      %v5130 = vmul.f32 %v5107, %v5128
      %v5131 = vmul.f32 %v5108, %v5128
      %v5132 = vmul.f32 %v5109, %v5128
      %v5133 = vmul.f32 %v5110, %v5128
      %v5134 = vmul.f32 %v5111, %v5128
      %v5135 = vmul.f32 %v5112, %v5128
      %v5136 = vmul.f32 %v5113, %v5128
      %v5137 = vmul.f32 %v5114, %v5128
      %v5138 = vmul.f32 %v5115, %v5128
      %v5139 = vmul.f32 %v5116, %v5128
      %v5140 = vmul.f32 %v5117, %v5128
      %v5141 = vmul.f32 %v5118, %v5128
      %v5142 = vmul.f32 %v5119, %v5128
      %v5143 = vmul.f32 %v5120, %v5128
      %v5144 = vmul.f32 %v5121, %v5128
      %v5145 = vmul.f32 %v5122, %v5128
      %v5146 = vld [vmem:[%s8] sm:$0x1]
      %v5148 = vlaneseq
      %v5149 = vshrl.u32 %v5148, 7
      %v5150 = vsub.s32 0, %v5149
      %v5151 = vrot.slane %v5146, %v5150
      %v5153 = vadd.f32 %v5130, %v5151
      %v5154 = vadd.f32 %v5131, %v5151
      %v5155 = vadd.f32 %v5132, %v5151
      %v5156 = vadd.f32 %v5133, %v5151
      %v5157 = vadd.f32 %v5134, %v5151
      %v5158 = vadd.f32 %v5135, %v5151
      %v5159 = vadd.f32 %v5136, %v5151
      %v5160 = vadd.f32 %v5137, %v5151
      %v5161 = vadd.f32 %v5138, %v5151
      %v5162 = vadd.f32 %v5139, %v5151
      %v5163 = vadd.f32 %v5140, %v5151
      %v5164 = vadd.f32 %v5141, %v5151
      %v5165 = vadd.f32 %v5142, %v5151
      %v5166 = vadd.f32 %v5143, %v5151
      %v5167 = vadd.f32 %v5144, %v5151
      %v5168 = vadd.f32 %v5145, %v5151
      %v5169 = vadd.f32 %v5153, %v556
      %v5170 = vadd.f32 %v5154, %v557
      %v5171 = vadd.f32 %v5155, %v558
      %v5172 = vadd.f32 %v5156, %v559
      %v5173 = vadd.f32 %v5157, %v560
      %v5174 = vadd.f32 %v5158, %v561
      %v5175 = vadd.f32 %v5159, %v562
      %v5176 = vadd.f32 %v5160, %v563
      %v5177 = vadd.f32 %v5161, %v564
      %v5178 = vadd.f32 %v5162, %v565
      %v5179 = vadd.f32 %v5163, %v566
      %v5180 = vadd.f32 %v5164, %v567
      %v5181 = vadd.f32 %v5165, %v568
      %v5182 = vadd.f32 %v5166, %v569
      %v5183 = vadd.f32 %v5167, %v570
      %v5184 = vadd.f32 %v5168, %v571
      %v5185 = vmax.f32 %v5169, 0.0
      %v5186 = vmax.f32 %v5170, 0.0
      %v5187 = vmax.f32 %v5171, 0.0
      %v5188 = vmax.f32 %v5172, 0.0
      %v5189 = vmax.f32 %v5173, 0.0
      %v5190 = vmax.f32 %v5174, 0.0
      %v5191 = vmax.f32 %v5175, 0.0
      %v5192 = vmax.f32 %v5176, 0.0
      %v5193 = vmax.f32 %v5177, 0.0
      %v5194 = vmax.f32 %v5178, 0.0
      %v5195 = vmax.f32 %v5179, 0.0
      %v5196 = vmax.f32 %v5180, 0.0
      %v5197 = vmax.f32 %v5181, 0.0
      %v5198 = vmax.f32 %v5182, 0.0
      %v5199 = vmax.f32 %v5183, 0.0
      %v5200 = vmax.f32 %v5184, 0.0
      %5201 = vst [vmem:[%s509] sm:$0xff] %v5185
      %5202 = vst [vmem:[%s509 + $0x8] sm:$0xff] %v5186
      %5203 = vst [vmem:[%s509 + $0x10] sm:$0xff] %v5187
      %5204 = vst [vmem:[%s509 + $0x18] sm:$0xff] %v5188
      %5205 = vst [vmem:[%s509 + $0x20] sm:$0xff] %v5189
      %5206 = vst [vmem:[%s509 + $0x28] sm:$0xff] %v5190
      %5207 = vst [vmem:[%s509 + $0x30] sm:$0xff] %v5191
      %5208 = vst [vmem:[%s509 + $0x38] sm:$0xff] %v5192
      %5209 = vst [vmem:[%s509 + $0x40] sm:$0xff] %v5193
      %5210 = vst [vmem:[%s509 + $0x48] sm:$0xff] %v5194
      %5211 = vst [vmem:[%s509 + $0x50] sm:$0xff] %v5195
      %5212 = vst [vmem:[%s509 + $0x58] sm:$0xff] %v5196
      %5213 = vst [vmem:[%s509 + $0x60] sm:$0xff] %v5197
      %5214 = vst [vmem:[%s509 + $0x68] sm:$0xff] %v5198
      %5215 = vst [vmem:[%s509 + $0x70] sm:$0xff] %v5199
      %5216 = vst [vmem:[%s509 + $0x78] sm:$0xff] %v5200
      %s5217 = smul.u32 8, %s25
      %p5218 = scmp.lt.s32.totalorder %s24, 1
      %s5219 = scalar_select %p5218, %s24, 1
      %p5220 = scmp.lt.s32.totalorder %s5217, 15
      %s5221 = scalar_select %p5220, %s5217, 15
      %s5222 = smul.addr %s5221, 2
      %s5223 = smul.addr %s5219, 32
      %s5224 = sadd.s32 %s5222, %s5223
      %s5225 = smul.addr %s5224, 8
      %s5226 = scalar_lea.vmem %s9, %s5225
      // Predicated region
      $region65: #{basic_block_forward.1} parent=55 // pred_check
        %p5227 = pneg %p278
      $region66: #{basic_block_forward.1} parent=55 // pred_check_branch
        %5229 = sbr.rel (%p5227) target = $region68
      $region67: #{basic_block_forward.1} parent=55 // pred_region
        %s5230 = smul.u32 8, %s25
      $region68: #{basic_block_forward.1} parent=55 // pred_fallthru
        _
    $region56: #{basic_block_forward.1} parent=5 // pred_fallthru
      _
    %p5231 = scmp.le.s32.totalorder 2, %s15
    // Predicated region
    $region69: #{basic_block_forward.1} parent=5 // pred_check
      %p5232 = pneg %p5231
    $region70: #{basic_block_forward.1} parent=5 // pred_check_branch
      %5234 = sbr.rel (%p5232) target = $region72
    $region71: #{basic_block_forward.1} parent=5 // pred_region
      %s5235 = ssub.s32 %s15, 2
      // Predicated region
      $region73: #{basic_block_forward.1} parent=71 // pred_check
        %p5236 = pneg %p284
      $region74: #{basic_block_forward.1} parent=71 // pred_check_branch
        %5238 = sbr.rel (%p5236) target = $region76
      $region75: #{basic_block_forward.1} parent=71 // pred_region
        %s5239 = smul.u32 8, %s27
        %p5240 = scmp.lt.s32.totalorder %s26, 1
        %s5241 = scalar_select %p5240, %s26, 1
        %p5242 = scmp.lt.s32.totalorder %s5239, 15
        %s5243 = scalar_select %p5242, %s5239, 15
        %s5244 = smul.addr %s5243, 2
        %s5245 = smul.addr %s5241, 32
        %s5246 = sadd.s32 %s5244, %s5245
        %s5247 = smul.addr %s5246, 8
        %s5248 = scalar_lea.vmem %s9, %s5247
      $region76: #{basic_block_forward.1} parent=71 // pred_fallthru
        _
    $region72: #{basic_block_forward.1} parent=5 // pred_fallthru
      _
  $region6: #{basic_block_forward.1} parent=0 // loop_footer
    %s19 = sadd.s32 1, %s15
  $region7: #{basic_block_forward.1} parent=0 // loop_footer_branch
    %14 = sbr.rel target = $region3
  $region8: #{basic_block_forward.1} parent=0 // loop_exit
    _

</llo_original>
